<compile_context>
chip_gen: v7x
topology: tpu7x:2x2x1
jax: 0.10.0
libtpu: 0.0.40
codegen_flags: <defaults>
</compile_context>

<pallas_src>
import math

import jax
import jax.numpy as jnp
from jax.experimental import pallas as pl
from jax.experimental.pallas import tpu as pltpu

# --- module constants (from Models.py) ---
D_K = 32
D_V = 32
N_HEADS = 8
LN_EPS = 1e-5
NEG_INF = -1e9


def _mha_kernel(xq_ref, xk_ref, xv_ref, mask_ref,
                wq_ref, wk_ref, wv_ref, wfc_ref, gamma_ref, beta_ref,
                out_ref, attn_ref):
    """Fused MHA forward, whole batch in a single grid step.

    Ref shapes:
      xq/xk/xv   : (B*S, D)                float32
      mask       : (H*B, S, S)            int32  (nonzero -> masked)
      wq/wk/wv   : (H, D, dk)             float32 (head-major, host-pre-split)
      wfc        : (H, dv, D)             float32
      gamma/beta : (1, D)                 float32
      out        : (B*S, D)               float32
      attn       : (H*B, S, S)            float32
    """
    BS, D = xq_ref.shape
    G, S, _ = mask_ref.shape            # G = H * B
    H, _, DK = wq_ref.shape
    DV = wv_ref.shape[2]

    x_q = xq_ref[...]                   # (BS, D)
    x_k = xk_ref[...]
    x_v = xv_ref[...]

    # --- head-batched projections: (H, BS, D) x (H, D, dh) -> (H, BS, dh) ---
    def proj(x, w):
        xb = jnp.broadcast_to(x[None], (H, BS, D))        # leading-dim bcast
        return jax.lax.dot_general(
            xb, w,
            dimension_numbers=(((2,), (1,)), ((0,), (0,))),
            preferred_element_type=jnp.float32)

    # (H, B*S, dh) -> (H*B, S, dh): pure leading/second-minor split, no relayout
    q = proj(x_q, wq_ref[...]).reshape(G, S, DK)
    k = proj(x_k, wk_ref[...]).reshape(G, S, DK)
    v = proj(x_v, wv_ref[...]).reshape(G, S, DV)

    # --- scaled dot-product scores, contracting directly on dk (no k.T) ---
    scores = jax.lax.dot_general(
        q, k,
        dimension_numbers=(((2,), (2,)), ((0,), (0,))),
        preferred_element_type=jnp.float32) * (1.0 / math.sqrt(DK))  # (G,S,S)

    # mask applied once over all heads
    scores = jnp.where(mask_ref[...] != 0, jnp.float32(NEG_INF), scores)

    # --- softmax over keys ---
    m = jnp.max(scores, axis=-1, keepdims=True)
    e = jnp.exp(scores - m)
    denom = jnp.sum(e, axis=-1, keepdims=True)
    attn = e * pl.reciprocal(denom, approx=False)          # (G, S, S)

    # single bulk store of the attention probabilities
    attn_ref[...] = attn.astype(attn_ref.dtype)

    # --- context: (G,S,S) x (G,S,dv) -> (G,S,dv) ---
    ctx = jax.lax.dot_general(
        attn, v,
        dimension_numbers=(((2,), (1,)), ((0,), (0,))),
        preferred_element_type=jnp.float32)

    # --- output projection: per-head batched matmul, summed over heads ---
    ctx_h = ctx.reshape(H, BS, DV)                          # (H, BS, dv)
    out_h = jax.lax.dot_general(
        ctx_h, wfc_ref[...],
        dimension_numbers=(((2,), (1,)), ((0,), (0,))),
        preferred_element_type=jnp.float32)                 # (H, BS, D)
    out = jnp.sum(out_h, axis=0)                            # (BS, D)

    # --- residual + LayerNorm (kept in f32) ---
    out = out + x_q
    mean = jnp.mean(out, axis=-1, keepdims=True)
    var = jnp.mean(jnp.square(out - mean), axis=-1, keepdims=True)
    normed = (out - mean) * jax.lax.rsqrt(var + LN_EPS)
    normed = normed * gamma_ref[...] + beta_ref[...]
    out_ref[...] = normed.astype(out_ref.dtype)


@jax.jit
def multi_head_attention(input_Q, input_K, input_V, attn_mask,
                         w_q, w_k, w_v, w_fc, gamma, beta):
    """
    input_Q/K/V : (B, S, D) float32
    attn_mask   : (B, S, S) bool   (True = masked position)
    w_q/w_k/w_v : (D, H*d_k) float32   (transposed vs. torch Linear weight)
    w_fc        : (H*d_v, D) float32
    gamma/beta  : (D,) float32
    returns (output (B,S,D), attn (B,H,S,S))
    """
    B, S, D = input_Q.shape
    BS = B * S
    G = N_HEADS * B

    # host-side (XLA) layout prep -- all tiny / one-off
    xq2 = input_Q.reshape(BS, D)
    xk2 = input_K.reshape(BS, D)
    xv2 = input_V.reshape(BS, D)
    mask_g = jnp.broadcast_to(attn_mask.astype(jnp.int32)[None],
                              (N_HEADS, B, S, S)).reshape(G, S, S)
    wq_h = w_q.reshape(D, N_HEADS, D_K).transpose(1, 0, 2)   # (H, D, dk)
    wk_h = w_k.reshape(D, N_HEADS, D_K).transpose(1, 0, 2)
    wv_h = w_v.reshape(D, N_HEADS, D_V).transpose(1, 0, 2)
    wfc_h = w_fc.reshape(N_HEADS, D_V, D)                    # (H, dv, D)
    gamma2 = gamma.reshape(1, D)
    beta2 = beta.reshape(1, D)

    out2, attn_g = pl.pallas_call(
        _mha_kernel,
        out_shape=(
            jax.ShapeDtypeStruct((BS, D), jnp.float32),
            jax.ShapeDtypeStruct((G, S, S), jnp.float32),
        ),
        grid=(1,),
        in_specs=[
            pl.BlockSpec((BS, D), lambda i: (0, 0)),               # xq
            pl.BlockSpec((BS, D), lambda i: (0, 0)),               # xk
            pl.BlockSpec((BS, D), lambda i: (0, 0)),               # xv
            pl.BlockSpec((G, S, S), lambda i: (0, 0, 0)),          # mask
            pl.BlockSpec((N_HEADS, D, D_K), lambda i: (0, 0, 0)),  # W_Q
            pl.BlockSpec((N_HEADS, D, D_K), lambda i: (0, 0, 0)),  # W_K
            pl.BlockSpec((N_HEADS, D, D_V), lambda i: (0, 0, 0)),  # W_V
            pl.BlockSpec((N_HEADS, D_V, D), lambda i: (0, 0, 0)),  # W_fc
            pl.BlockSpec((1, D), lambda i: (0, 0)),                # gamma
            pl.BlockSpec((1, D), lambda i: (0, 0)),                # beta
        ],
        out_specs=(
            pl.BlockSpec((BS, D), lambda i: (0, 0)),
            pl.BlockSpec((G, S, S), lambda i: (0, 0, 0)),
        ),
        compiler_params=pltpu.CompilerParams(
            dimension_semantics=("arbitrary",)),
    )(xq2, xk2, xv2, mask_g, wq_h, wk_h, wv_h, wfc_h, gamma2, beta2)

    out = out2.reshape(B, S, D)
    attn = attn_g.reshape(N_HEADS, B, S, S).transpose(1, 0, 2, 3)  # (B,H,S,S)
    return out, attn


def _reference(input_Q, input_K, input_V, attn_mask,
               w_q, w_k, w_v, w_fc, gamma, beta):
    """Pure-JAX reference mirroring the PyTorch forward."""
    B, S, D = input_Q.shape
    Q = (input_Q @ w_q).reshape(B, S, N_HEADS, D_K).transpose(0, 2, 1, 3)
    K = (input_K @ w_k).reshape(B, S, N_HEADS, D_K).transpose(0, 2, 1, 3)
    V = (input_V @ w_v).reshape(B, S, N_HEADS, D_V).transpose(0, 2, 1, 3)
    scores = jnp.einsum('bhqd,bhkd->bhqk', Q, K) / math.sqrt(D_K)
    mask = attn_mask[:, None, :, :]
    scores = jnp.where(mask, -1e9, scores)
    attn = jax.nn.softmax(scores, axis=-1)
    ctx = jnp.einsum('bhqk,bhkd->bhqd', attn, V)
    ctx = ctx.transpose(0, 2, 1, 3).reshape(B, S, N_HEADS * D_V)
    out = ctx @ w_fc + input_Q
    mean = out.mean(-1, keepdims=True)
    var = ((out - mean) ** 2).mean(-1, keepdims=True)
    out = (out - mean) / jnp.sqrt(var + LN_EPS) * gamma + beta
    return out, attn


if __name__ == "__main__":
    B, S, D = 2, 8, 32  # d_model = 32

    key = jax.random.PRNGKey(0)
    ks = jax.random.split(key, 8)

    input_Q = jax.random.normal(ks[0], (B, S, D), jnp.float32)
    input_K = jax.random.normal(ks[1], (B, S, D), jnp.float32)
    input_V = jax.random.normal(ks[2], (B, S, D), jnp.float32)

    # simple causal-style boolean mask (True = masked)
    row = jnp.arange(S)
    attn_mask = jnp.broadcast_to(row[None, :] > row[:, None], (B, S, S))

    # deterministic "Linear" weights (stored transposed: (in, out))
    scale = 1.0 / math.sqrt(D)
    w_q = scale * jax.random.normal(ks[3], (D, N_HEADS * D_K), jnp.float32)
    w_k = scale * jax.random.normal(ks[4], (D, N_HEADS * D_K), jnp.float32)
    w_v = scale * jax.random.normal(ks[5], (D, N_HEADS * D_V), jnp.float32)
    w_fc = (1.0 / math.sqrt(N_HEADS * D_V)) * jax.random.normal(
        ks[6], (N_HEADS * D_V, D), jnp.float32)
    gamma = jnp.ones((D,), jnp.float32)
    beta = jnp.zeros((D,), jnp.float32)

    out, attn = multi_head_attention(input_Q, input_K, input_V, attn_mask,
                                     w_q, w_k, w_v, w_fc, gamma, beta)
    jax.block_until_ready((out, attn))

    ref_out, ref_attn = _reference(input_Q, input_K, input_V, attn_mask,
                                   w_q, w_k, w_v, w_fc, gamma, beta)
    assert jnp.allclose(out, ref_out, atol=1e-4, rtol=1e-4), "output mismatch"
    assert jnp.allclose(attn, ref_attn, atol=1e-4, rtol=1e-4), "attn mismatch"

    print("KERNEL_OK")
</pallas_src>

<mosaic_0001>
module attributes {stable_mosaic.version = 11 : i64} {
  func.func @_mha_kernel(%arg0: i32, %arg1: memref<16x32xf32, #tpu.memory_space<vmem>>, %arg2: memref<16x32xf32, #tpu.memory_space<vmem>>, %arg3: memref<16x32xf32, #tpu.memory_space<vmem>>, %arg4: memref<16x8x8xi32, #tpu.memory_space<vmem>>, %arg5: memref<8x32x32xf32, #tpu.memory_space<vmem>>, %arg6: memref<8x32x32xf32, #tpu.memory_space<vmem>>, %arg7: memref<8x32x32xf32, #tpu.memory_space<vmem>>, %arg8: memref<8x32x32xf32, #tpu.memory_space<vmem>>, %arg9: memref<1x32xf32, #tpu.memory_space<vmem>>, %arg10: memref<1x32xf32, #tpu.memory_space<vmem>>, %arg11: memref<16x32xf32, #tpu.memory_space<vmem>>, %arg12: memref<16x8x8xf32, #tpu.memory_space<vmem>>) attributes {dimension_semantics = [#tpu.dimension_semantics<arbitrary>], iteration_bounds = array<i64: 1>, scalar_prefetch = 0 : i64, scratch_operands = 0 : i64, tpu.core_type = #tpu.core_type<tc>, window_params = [{pipeline_mode = #tpu.pipeline_mode<synchronous>, transform_indices = @transform_0, window_bounds = array<i64: 16, 32>}, {pipeline_mode = #tpu.pipeline_mode<synchronous>, transform_indices = @transform_1, window_bounds = array<i64: 16, 32>}, {pipeline_mode = #tpu.pipeline_mode<synchronous>, transform_indices = @transform_2, window_bounds = array<i64: 16, 32>}, {pipeline_mode = #tpu.pipeline_mode<synchronous>, transform_indices = @transform_3, window_bounds = array<i64: 16, 8, 8>}, {pipeline_mode = #tpu.pipeline_mode<synchronous>, transform_indices = @transform_4, window_bounds = array<i64: 8, 32, 32>}, {pipeline_mode = #tpu.pipeline_mode<synchronous>, transform_indices = @transform_5, window_bounds = array<i64: 8, 32, 32>}, {pipeline_mode = #tpu.pipeline_mode<synchronous>, transform_indices = @transform_6, window_bounds = array<i64: 8, 32, 32>}, {pipeline_mode = #tpu.pipeline_mode<synchronous>, transform_indices = @transform_7, window_bounds = array<i64: 8, 32, 32>}, {pipeline_mode = #tpu.pipeline_mode<synchronous>, transform_indices = @transform_8, window_bounds = array<i64: 1, 32>}, {pipeline_mode = #tpu.pipeline_mode<synchronous>, transform_indices = @transform_9, window_bounds = array<i64: 1, 32>}, {pipeline_mode = #tpu.pipeline_mode<synchronous>, transform_indices = @transform_10, window_bounds = array<i64: 16, 32>}, {pipeline_mode = #tpu.pipeline_mode<synchronous>, transform_indices = @transform_11, window_bounds = array<i64: 16, 8, 8>}]} {
    %c0 = arith.constant 0 : index
    %c0_0 = arith.constant 0 : index
    %0 = vector.load %arg1[%c0, %c0_0] : memref<16x32xf32, #tpu.memory_space<vmem>>, vector<16x32xf32>
    %c0_1 = arith.constant 0 : index
    %c0_2 = arith.constant 0 : index
    %1 = vector.load %arg2[%c0_1, %c0_2] : memref<16x32xf32, #tpu.memory_space<vmem>>, vector<16x32xf32>
    %c0_3 = arith.constant 0 : index
    %c0_4 = arith.constant 0 : index
    %2 = vector.load %arg3[%c0_3, %c0_4] : memref<16x32xf32, #tpu.memory_space<vmem>>, vector<16x32xf32>
    %c0_5 = arith.constant 0 : index
    %c0_6 = arith.constant 0 : index
    %c0_7 = arith.constant 0 : index
    %3 = vector.load %arg5[%c0_5, %c0_6, %c0_7] : memref<8x32x32xf32, #tpu.memory_space<vmem>>, vector<8x32x32xf32>
    %4 = vector.shape_cast %0 : vector<16x32xf32> to vector<1x16x32xf32>
    %5 = vector.shape_cast %4 : vector<1x16x32xf32> to vector<1x16x32xf32>
    %6 = vector.broadcast %5 : vector<1x16x32xf32> to vector<8x16x32xf32>
    %cst = arith.constant dense<0.000000e+00> : vector<8x16x32xf32>
    %7 = tpu.matmul %6, %3, %cst {dimension_numbers = #tpu.dot_dimension_numbers<[2], [1], [1], [2], [0, 0, 0, 1, 1, 2], [0], [0]>} : vector<8x16x32xf32>, vector<8x32x32xf32>, vector<8x16x32xf32> -> vector<8x16x32xf32>
    %8 = vector.shape_cast %7 : vector<8x16x32xf32> to vector<16x8x32xf32>
    %c0_8 = arith.constant 0 : index
    %c0_9 = arith.constant 0 : index
    %c0_10 = arith.constant 0 : index
    %9 = vector.load %arg6[%c0_8, %c0_9, %c0_10] : memref<8x32x32xf32, #tpu.memory_space<vmem>>, vector<8x32x32xf32>
    %10 = vector.shape_cast %1 : vector<16x32xf32> to vector<1x16x32xf32>
    %11 = vector.shape_cast %10 : vector<1x16x32xf32> to vector<1x16x32xf32>
    %12 = vector.broadcast %11 : vector<1x16x32xf32> to vector<8x16x32xf32>
    %cst_11 = arith.constant dense<0.000000e+00> : vector<8x16x32xf32>
    %13 = tpu.matmul %12, %9, %cst_11 {dimension_numbers = #tpu.dot_dimension_numbers<[2], [1], [1], [2], [0, 0, 0, 1, 1, 2], [0], [0]>} : vector<8x16x32xf32>, vector<8x32x32xf32>, vector<8x16x32xf32> -> vector<8x16x32xf32>
    %14 = vector.shape_cast %13 : vector<8x16x32xf32> to vector<16x8x32xf32>
    %c0_12 = arith.constant 0 : index
    %c0_13 = arith.constant 0 : index
    %c0_14 = arith.constant 0 : index
    %15 = vector.load %arg7[%c0_12, %c0_13, %c0_14] : memref<8x32x32xf32, #tpu.memory_space<vmem>>, vector<8x32x32xf32>
    %16 = vector.shape_cast %2 : vector<16x32xf32> to vector<1x16x32xf32>
    %17 = vector.shape_cast %16 : vector<1x16x32xf32> to vector<1x16x32xf32>
    %18 = vector.broadcast %17 : vector<1x16x32xf32> to vector<8x16x32xf32>
    %cst_15 = arith.constant dense<0.000000e+00> : vector<8x16x32xf32>
    %19 = tpu.matmul %18, %15, %cst_15 {dimension_numbers = #tpu.dot_dimension_numbers<[2], [1], [1], [2], [0, 0, 0, 1, 1, 2], [0], [0]>} : vector<8x16x32xf32>, vector<8x32x32xf32>, vector<8x16x32xf32> -> vector<8x16x32xf32>
    %20 = vector.shape_cast %19 : vector<8x16x32xf32> to vector<16x8x32xf32>
    %cst_16 = arith.constant dense<0.000000e+00> : vector<16x8x8xf32>
    %21 = tpu.matmul %8, %14, %cst_16 {dimension_numbers = #tpu.dot_dimension_numbers<[2], [2], [1], [1], [0, 0, 0, 1, 1, 1], [0], [0]>} : vector<16x8x32xf32>, vector<16x8x32xf32>, vector<16x8x8xf32> -> vector<16x8x8xf32>
    %cst_17 = arith.constant 0.176776692 : f32
    %22 = vector.broadcast %cst_17 : f32 to vector<16x8x8xf32>
    %23 = arith.mulf %21, %22 : vector<16x8x8xf32>
    %c0_18 = arith.constant 0 : index
    %c0_19 = arith.constant 0 : index
    %c0_20 = arith.constant 0 : index
    %24 = vector.load %arg4[%c0_18, %c0_19, %c0_20] : memref<16x8x8xi32, #tpu.memory_space<vmem>>, vector<16x8x8xi32>
    %c0_i32 = arith.constant 0 : i32
    %25 = vector.broadcast %c0_i32 : i32 to vector<16x8x8xi32>
    %26 = arith.cmpi ne, %24, %25 : vector<16x8x8xi32>
    %cst_21 = arith.constant -1.000000e+09 : f32
    %27 = vector.broadcast %cst_21 : f32 to vector<16x8x8xf32>
    %28 = arith.select %26, %27, %23 : vector<16x8x8xi1>, vector<16x8x8xf32>
    %cst_22 = arith.constant dense<0xFF800000> : vector<16x8xf32>
    %29 = vector.multi_reduction <maximumf>, %28, %cst_22 [2] : vector<16x8x8xf32> to vector<16x8xf32>
    %30 = vector.shape_cast %29 : vector<16x8xf32> to vector<16x8x1xf32>
    %31 = vector.broadcast %30 : vector<16x8x1xf32> to vector<16x8x8xf32>
    %32 = arith.subf %28, %31 : vector<16x8x8xf32>
    %33 = math.exp %32 : vector<16x8x8xf32>
    %cst_23 = arith.constant dense<0.000000e+00> : vector<16x8xf32>
    %34 = vector.multi_reduction <add>, %33, %cst_23 [2] : vector<16x8x8xf32> to vector<16x8xf32>
    %35 = vector.shape_cast %34 : vector<16x8xf32> to vector<16x8x1xf32>
    %36 = tpu.reciprocal %35 : vector<16x8x1xf32> -> vector<16x8x1xf32>
    %37 = vector.broadcast %36 : vector<16x8x1xf32> to vector<16x8x8xf32>
    %38 = arith.mulf %33, %37 : vector<16x8x8xf32>
    %c0_24 = arith.constant 0 : index
    %c0_25 = arith.constant 0 : index
    %c0_26 = arith.constant 0 : index
    %39 = vector.load %arg12[%c0_24, %c0_25, %c0_26] : memref<16x8x8xf32, #tpu.memory_space<vmem>>, vector<16x8x8xf32>
    tpu.vector_store %arg12[%c0_24, %c0_25, %c0_26], %38 {strides = array<i32>} : memref<16x8x8xf32, #tpu.memory_space<vmem>>, vector<16x8x8xf32>,
    %cst_27 = arith.constant dense<0.000000e+00> : vector<16x8x32xf32>
    %40 = tpu.matmul %38, %20, %cst_27 {dimension_numbers = #tpu.dot_dimension_numbers<[2], [1], [1], [2], [0, 0, 0, 1, 1, 2], [0], [0]>} : vector<16x8x8xf32>, vector<16x8x32xf32>, vector<16x8x32xf32> -> vector<16x8x32xf32>
    %41 = vector.shape_cast %40 : vector<16x8x32xf32> to vector<8x16x32xf32>
    %c0_28 = arith.constant 0 : index
    %c0_29 = arith.constant 0 : index
    %c0_30 = arith.constant 0 : index
    %42 = vector.load %arg8[%c0_28, %c0_29, %c0_30] : memref<8x32x32xf32, #tpu.memory_space<vmem>>, vector<8x32x32xf32>
    %cst_31 = arith.constant dense<0.000000e+00> : vector<8x16x32xf32>
    %43 = tpu.matmul %41, %42, %cst_31 {dimension_numbers = #tpu.dot_dimension_numbers<[2], [1], [1], [2], [0, 0, 0, 1, 1, 2], [0], [0]>} : vector<8x16x32xf32>, vector<8x32x32xf32>, vector<8x16x32xf32> -> vector<8x16x32xf32>
    %cst_32 = arith.constant dense<0.000000e+00> : vector<16x32xf32>
    %44 = vector.multi_reduction <add>, %43, %cst_32 [0] : vector<8x16x32xf32> to vector<16x32xf32>
    %45 = arith.addf %44, %0 : vector<16x32xf32>
    %cst_33 = arith.constant dense<0.000000e+00> : vector<16xf32>
    %46 = vector.multi_reduction <add>, %45, %cst_33 [1] : vector<16x32xf32> to vector<16xf32>
    %47 = vector.shape_cast %46 : vector<16xf32> to vector<16x1xf32>
    %cst_34 = arith.constant 3.200000e+01 : f32
    %48 = vector.broadcast %cst_34 : f32 to vector<16x1xf32>
    %49 = arith.divf %47, %48 : vector<16x1xf32>
    %50 = vector.broadcast %49 : vector<16x1xf32> to vector<16x32xf32>
    %51 = arith.subf %45, %50 : vector<16x32xf32>
    %52 = arith.mulf %51, %51 : vector<16x32xf32>
    %cst_35 = arith.constant dense<0.000000e+00> : vector<16xf32>
    %53 = vector.multi_reduction <add>, %52, %cst_35 [1] : vector<16x32xf32> to vector<16xf32>
    %54 = vector.shape_cast %53 : vector<16xf32> to vector<16x1xf32>
    %cst_36 = arith.constant 3.200000e+01 : f32
    %55 = vector.broadcast %cst_36 : f32 to vector<16x1xf32>
    %56 = arith.divf %54, %55 : vector<16x1xf32>
    %57 = vector.broadcast %49 : vector<16x1xf32> to vector<16x32xf32>
    %58 = arith.subf %45, %57 : vector<16x32xf32>
    %cst_37 = arith.constant 9.99999974E-6 : f32
    %59 = vector.broadcast %cst_37 : f32 to vector<16x1xf32>
    %60 = arith.addf %56, %59 : vector<16x1xf32>
    %61 = math.rsqrt %60 : vector<16x1xf32>
    %62 = vector.broadcast %61 : vector<16x1xf32> to vector<16x32xf32>
    %63 = arith.mulf %58, %62 : vector<16x32xf32>
    %c0_38 = arith.constant 0 : index
    %c0_39 = arith.constant 0 : index
    %64 = vector.load %arg9[%c0_38, %c0_39] : memref<1x32xf32, #tpu.memory_space<vmem>>, vector<1x32xf32>
    %65 = vector.broadcast %64 : vector<1x32xf32> to vector<16x32xf32>
    %66 = arith.mulf %63, %65 : vector<16x32xf32>
    %c0_40 = arith.constant 0 : index
    %c0_41 = arith.constant 0 : index
    %67 = vector.load %arg10[%c0_40, %c0_41] : memref<1x32xf32, #tpu.memory_space<vmem>>, vector<1x32xf32>
    %68 = vector.broadcast %67 : vector<1x32xf32> to vector<16x32xf32>
    %69 = arith.addf %66, %68 : vector<16x32xf32>
    %c0_42 = arith.constant 0 : index
    %c0_43 = arith.constant 0 : index
    %70 = vector.load %arg11[%c0_42, %c0_43] : memref<16x32xf32, #tpu.memory_space<vmem>>, vector<16x32xf32>
    tpu.vector_store %arg11[%c0_42, %c0_43], %69 {strides = array<i32>} : memref<16x32xf32, #tpu.memory_space<vmem>>, vector<16x32xf32>,
    return
  }
  func.func @transform_0(%arg0: i32) -> (i32, i32) {
    %c0_i32 = arith.constant 0 : i32
    %c0_i32_0 = arith.constant 0 : i32
    %c0_i32_1 = arith.constant 0 : i32
    return %c0_i32, %c0_i32_0 : i32, i32
  }
  func.func @transform_1(%arg0: i32) -> (i32, i32) {
    %c0_i32 = arith.constant 0 : i32
    %c0_i32_0 = arith.constant 0 : i32
    %c0_i32_1 = arith.constant 0 : i32
    return %c0_i32, %c0_i32_0 : i32, i32
  }
  func.func @transform_2(%arg0: i32) -> (i32, i32) {
    %c0_i32 = arith.constant 0 : i32
    %c0_i32_0 = arith.constant 0 : i32
    %c0_i32_1 = arith.constant 0 : i32
    return %c0_i32, %c0_i32_0 : i32, i32
  }
  func.func @transform_3(%arg0: i32) -> (i32, i32, i32) {
    %c0_i32 = arith.constant 0 : i32
    %c0_i32_0 = arith.constant 0 : i32
    %c0_i32_1 = arith.constant 0 : i32
    %c0_i32_2 = arith.constant 0 : i32
    return %c0_i32, %c0_i32_0, %c0_i32_1 : i32, i32, i32
  }
  func.func @transform_4(%arg0: i32) -> (i32, i32, i32) {
    %c0_i32 = arith.constant 0 : i32
    %c0_i32_0 = arith.constant 0 : i32
    %c0_i32_1 = arith.constant 0 : i32
    %c0_i32_2 = arith.constant 0 : i32
    return %c0_i32, %c0_i32_0, %c0_i32_1 : i32, i32, i32
  }
  func.func @transform_5(%arg0: i32) -> (i32, i32, i32) {
    %c0_i32 = arith.constant 0 : i32
    %c0_i32_0 = arith.constant 0 : i32
    %c0_i32_1 = arith.constant 0 : i32
    %c0_i32_2 = arith.constant 0 : i32
    return %c0_i32, %c0_i32_0, %c0_i32_1 : i32, i32, i32
  }
  func.func @transform_6(%arg0: i32) -> (i32, i32, i32) {
    %c0_i32 = arith.constant 0 : i32
    %c0_i32_0 = arith.constant 0 : i32
    %c0_i32_1 = arith.constant 0 : i32
    %c0_i32_2 = arith.constant 0 : i32
    return %c0_i32, %c0_i32_0, %c0_i32_1 : i32, i32, i32
  }
  func.func @transform_7(%arg0: i32) -> (i32, i32, i32) {
    %c0_i32 = arith.constant 0 : i32
    %c0_i32_0 = arith.constant 0 : i32
    %c0_i32_1 = arith.constant 0 : i32
    %c0_i32_2 = arith.constant 0 : i32
    return %c0_i32, %c0_i32_0, %c0_i32_1 : i32, i32, i32
  }
  func.func @transform_8(%arg0: i32) -> (i32, i32) {
    %c0_i32 = arith.constant 0 : i32
    %c0_i32_0 = arith.constant 0 : i32
    %c0_i32_1 = arith.constant 0 : i32
    return %c0_i32, %c0_i32_0 : i32, i32
  }
  func.func @transform_9(%arg0: i32) -> (i32, i32) {
    %c0_i32 = arith.constant 0 : i32
    %c0_i32_0 = arith.constant 0 : i32
    %c0_i32_1 = arith.constant 0 : i32
    return %c0_i32, %c0_i32_0 : i32, i32
  }
  func.func @transform_10(%arg0: i32) -> (i32, i32) {
    %c0_i32 = arith.constant 0 : i32
    %c0_i32_0 = arith.constant 0 : i32
    %c0_i32_1 = arith.constant 0 : i32
    return %c0_i32, %c0_i32_0 : i32, i32
  }
  func.func @transform_11(%arg0: i32) -> (i32, i32, i32) {
    %c0_i32 = arith.constant 0 : i32
    %c0_i32_0 = arith.constant 0 : i32
    %c0_i32_1 = arith.constant 0 : i32
    %c0_i32_2 = arith.constant 0 : i32
    return %c0_i32, %c0_i32_0, %c0_i32_1 : i32, i32, i32
  }
}

</mosaic_0001>

<llo_original>
// kernel: multi_head_attention.1
$region0: #{multi_head_attention.1}
  #allocation0 [shape = 'u32[]', space=smem, size = 0x4, offset = 0x4, fixed_abs, tag = 'smem constant byte address 0x4 - core index']
  #allocation1 [shape = 'u32[144,128]{1,0:T(1,128)}', space=vmem, size = 0x12000, scoped, tag = 'internal scratch']
  %s0 = inlined_call_operand.vmem [shape: f32[16,32], index: 0, kind: input, shape index: {}]
  %s1 = inlined_call_operand.vmem [shape: f32[16,32], index: 1, kind: input, shape index: {}]
  %s2 = inlined_call_operand.vmem [shape: f32[16,32], index: 2, kind: input, shape index: {}]
  %s3 = inlined_call_operand.vmem [shape: s32[16,8,8], index: 3, kind: input, shape index: {}]
  %s4 = inlined_call_operand.vmem [shape: f32[8,32,32], index: 4, kind: input, shape index: {}]
  %s5 = inlined_call_operand.vmem [shape: f32[8,32,32], index: 5, kind: input, shape index: {}]
  %s6 = inlined_call_operand.vmem [shape: f32[8,32,32], index: 6, kind: input, shape index: {}]
  %s7 = inlined_call_operand.vmem [shape: f32[8,32,32], index: 7, kind: input, shape index: {}]
  %s8 = inlined_call_operand.vmem [shape: f32[1,32], index: 8, kind: input, shape index: {}]
  %s9 = inlined_call_operand.vmem [shape: f32[1,32], index: 9, kind: input, shape index: {}]
  %s10 = inlined_call_operand.hbm [shape: f32[16,32], index: 10, kind: output, shape index: {0}]
  %s11 = inlined_call_operand.vmem [shape: f32[16,8,8], index: 11, kind: output, shape index: {1}]
  %12 = xla_tuple %s10, %s11
  %s13 = sld [smem:[#allocation0]]
  $region58: #{multi_head_attention.1} parent=0
    _
  %s15 = ssub.s32 1, %s13
  %s16 = scalar_select 0, %s15, %s13
  $region1: #{multi_head_attention.1} parent=0
    #allocation2 [shape = 'u8[8192]{0}', space=vmem, size = 0x2000, scoped, tag = 'output window, operand 0, single buffered']
    #allocation3 [shape = 's32[1]{0}', space=sflag, size = 0x4, scoped, tag = 'scoped memory for multi_head_attention.1']
    %17 = vsyncpa [#allocation3], 0
    // Predicated region
    $region2: #{multi_head_attention.1} parent=1 // pred_check
      _
    $region3: #{multi_head_attention.1} parent=1 // pred_check_branch
      %19 = sbr.rel (0) target = $region5
    $region4: #{multi_head_attention.1} parent=1 // pred_region
      _
    $region5: #{multi_head_attention.1} parent=1 // pred_fallthru
      _
    // Predicated region
    $region6: #{multi_head_attention.1} parent=1 // pred_check
      _
    $region7: #{multi_head_attention.1} parent=1 // pred_check_branch
      %21 = sbr.rel (0) target = $region9
    $region8: #{multi_head_attention.1} parent=1 // pred_region
      _
    $region9: #{multi_head_attention.1} parent=1 // pred_fallthru
      _
    // Predicated region
    $region10: #{multi_head_attention.1} parent=1 // pred_check
      _
    $region11: #{multi_head_attention.1} parent=1 // pred_check_branch
      %23 = sbr.rel (0) target = $region13
    $region12: #{multi_head_attention.1} parent=1 // pred_region
      _
    $region13: #{multi_head_attention.1} parent=1 // pred_fallthru
      _
    // Predicated region
    $region14: #{multi_head_attention.1} parent=1 // pred_check
      _
    $region15: #{multi_head_attention.1} parent=1 // pred_check_branch
      %25 = sbr.rel (0) target = $region17
    $region16: #{multi_head_attention.1} parent=1 // pred_region
      _
    $region17: #{multi_head_attention.1} parent=1 // pred_fallthru
      _
    // Predicated region
    $region18: #{multi_head_attention.1} parent=1 // pred_check
      _
    $region19: #{multi_head_attention.1} parent=1 // pred_check_branch
      %27 = sbr.rel (0) target = $region21
    $region20: #{multi_head_attention.1} parent=1 // pred_region
      _
    $region21: #{multi_head_attention.1} parent=1 // pred_fallthru
      _
    // Predicated region
    $region22: #{multi_head_attention.1} parent=1 // pred_check
      _
    $region23: #{multi_head_attention.1} parent=1 // pred_check_branch
      %29 = sbr.rel (0) target = $region25
    $region24: #{multi_head_attention.1} parent=1 // pred_region
      _
    $region25: #{multi_head_attention.1} parent=1 // pred_fallthru
      _
    // Predicated region
    $region26: #{multi_head_attention.1} parent=1 // pred_check
      _
    $region27: #{multi_head_attention.1} parent=1 // pred_check_branch
      %31 = sbr.rel (0) target = $region29
    $region28: #{multi_head_attention.1} parent=1 // pred_region
      _
    $region29: #{multi_head_attention.1} parent=1 // pred_fallthru
      _
    // Predicated region
    $region30: #{multi_head_attention.1} parent=1 // pred_check
      _
    $region31: #{multi_head_attention.1} parent=1 // pred_check_branch
      %33 = sbr.rel (0) target = $region33
    $region32: #{multi_head_attention.1} parent=1 // pred_region
      _
    $region33: #{multi_head_attention.1} parent=1 // pred_fallthru
      _
    // Predicated region
    $region34: #{multi_head_attention.1} parent=1 // pred_check
      _
    $region35: #{multi_head_attention.1} parent=1 // pred_check_branch
      %35 = sbr.rel (0) target = $region37
    $region36: #{multi_head_attention.1} parent=1 // pred_region
      _
    $region37: #{multi_head_attention.1} parent=1 // pred_fallthru
      _
    // Predicated region
    $region38: #{multi_head_attention.1} parent=1 // pred_check
      _
    $region39: #{multi_head_attention.1} parent=1 // pred_check_branch
      %37 = sbr.rel (0) target = $region41
    $region40: #{multi_head_attention.1} parent=1 // pred_region
      _
    $region41: #{multi_head_attention.1} parent=1 // pred_fallthru
      _
    %v38 = vld [vmem:[%s0] sm:$0xff]
    %v39 = vld [vmem:[%s0 + $0x8] sm:$0xff]
    %v40 = vld [vmem:[%s1] sm:$0xff]
    %v41 = vld [vmem:[%s1 + $0x8] sm:$0xff]
    %v42 = vld [vmem:[%s2] sm:$0xff]
    %v43 = vld [vmem:[%s2 + $0x8] sm:$0xff]
    %v44 = vld [vmem:[%s4] sm:$0xff]
    %v45 = vld [vmem:[%s4 + $0x8] sm:$0xff]
    %v46 = vld [vmem:[%s4 + $0x10] sm:$0xff]
    %v47 = vld [vmem:[%s4 + $0x18] sm:$0xff]
    %v48 = vld [vmem:[%s4 + $0x20] sm:$0xff]
    %v49 = vld [vmem:[%s4 + $0x28] sm:$0xff]
    %v50 = vld [vmem:[%s4 + $0x30] sm:$0xff]
    %v51 = vld [vmem:[%s4 + $0x38] sm:$0xff]
    %v52 = vld [vmem:[%s4 + $0x40] sm:$0xff]
    %v53 = vld [vmem:[%s4 + $0x48] sm:$0xff]
    %v54 = vld [vmem:[%s4 + $0x50] sm:$0xff]
    %v55 = vld [vmem:[%s4 + $0x58] sm:$0xff]
    %v56 = vld [vmem:[%s4 + $0x60] sm:$0xff]
    %v57 = vld [vmem:[%s4 + $0x68] sm:$0xff]
    %v58 = vld [vmem:[%s4 + $0x70] sm:$0xff]
    %v59 = vld [vmem:[%s4 + $0x78] sm:$0xff]
    %v60 = vld [vmem:[%s4 + $0x80] sm:$0xff]
    %v61 = vld [vmem:[%s4 + $0x88] sm:$0xff]
    %v62 = vld [vmem:[%s4 + $0x90] sm:$0xff]
    %v63 = vld [vmem:[%s4 + $0x98] sm:$0xff]
    %v64 = vld [vmem:[%s4 + $0xa0] sm:$0xff]
    %v65 = vld [vmem:[%s4 + $0xa8] sm:$0xff]
    %v66 = vld [vmem:[%s4 + $0xb0] sm:$0xff]
    %v67 = vld [vmem:[%s4 + $0xb8] sm:$0xff]
    %v68 = vld [vmem:[%s4 + $0xc0] sm:$0xff]
    %v69 = vld [vmem:[%s4 + $0xc8] sm:$0xff]
    %v70 = vld [vmem:[%s4 + $0xd0] sm:$0xff]
    %v71 = vld [vmem:[%s4 + $0xd8] sm:$0xff]
    %v72 = vld [vmem:[%s4 + $0xe0] sm:$0xff]
    %v73 = vld [vmem:[%s4 + $0xe8] sm:$0xff]
    %v74 = vld [vmem:[%s4 + $0xf0] sm:$0xff]
    %v75 = vld [vmem:[%s4 + $0xf8] sm:$0xff]
    %vm76 = vcmask 261120
    %v78 = vsel %vm76, %v38, 0
    %v81 = vsel %vm76, %v39, 0
    %83 = vmatprep.subr.mxu0 0.0
    %84 = vmatpush1.msra.mxu0 %v44
    %85 = vmatprep.subr.mxu0 0.0
    %86 = vmatpush1.msra.mxu0 %v45
    %87 = vmatprep.subr.mxu0 0.0
    %88 = vmatpush1.msra.mxu0 %v46
    %89 = vmatprep.subr.mxu0 0.0
    %90 = vmatpush1.msra.mxu0 %v47
    %91 = vmatprep.subr.mxu0 0.0
    %92 = vmatpush1.msra.mxu0 0.0
    %93 = vmatprep.subr.mxu0 0.0
    %94 = vmatpush1.msra.mxu0 0.0
    %95 = vmatprep.subr.mxu0 0.0
    %96 = vmatpush1.msra.mxu0 0.0
    %97 = vmatprep.subr.mxu0 0.0
    %98 = vmatpush1.msra.mxu0 0.0
    %99 = vmatprep.subr.mxu0 0.0
    %100 = vmatpush1.msra.mxu0 0.0
    %101 = vmatprep.subr.mxu0 0.0
    %102 = vmatpush1.msra.mxu0 0.0
    %103 = vmatprep.subr.mxu0 0.0
    %104 = vmatpush1.msra.mxu0 0.0
    %105 = vmatprep.subr.mxu0 0.0
    %106 = vmatpush1.msra.mxu0 0.0
    %107 = vmatprep.subr.mxu0 0.0
    %108 = vmatpush1.msra.mxu0 0.0
    %109 = vmatprep.subr.mxu0 0.0
    %110 = vmatpush1.msra.mxu0 0.0
    %111 = vmatprep.subr.mxu0 0.0
    %112 = vmatpush1.msra.mxu0 0.0
    %113 = vmatprep.subr.mxu0 0.0
    %114 = vmatpush1.msra.mxu0 0.0
    %115 = vmatprep.subr.mxu0 0.0
    %116 = vmatpush1.msra.mxu0 0.0
    %117 = vmatprep.subr.mxu0 0.0
    %118 = vmatpush1.msra.mxu0 0.0
    %119 = vmatprep.subr.mxu0 0.0
    %120 = vmatpush1.msra.mxu0 0.0
    %121 = vmatprep.subr.mxu0 0.0
    %122 = vmatpush1.msra.mxu0 0.0
    %123 = vmatprep.subr.mxu0 0.0
    %124 = vmatpush1.msra.mxu0 0.0
    %125 = vmatprep.subr.mxu0 0.0
    %126 = vmatpush1.msra.mxu0 0.0
    %127 = vmatprep.subr.mxu0 0.0
    %128 = vmatpush1.msra.mxu0 0.0
    %129 = vmatprep.subr.mxu0 0.0
    %130 = vmatpush1.msra.mxu0 0.0
    %131 = vmatprep.subr.mxu0 0.0
    %132 = vmatpush1.msra.mxu0 0.0
    %133 = vmatprep.subr.mxu0 0.0
    %134 = vmatpush1.msra.mxu0 0.0
    %135 = vmatprep.subr.mxu0 0.0
    %136 = vmatpush1.msra.mxu0 0.0
    %137 = vmatprep.subr.mxu0 0.0
    %138 = vmatpush1.msra.mxu0 0.0
    %139 = vmatprep.subr.mxu0 0.0
    %140 = vmatpush1.msra.mxu0 0.0
    %141 = vmatprep.subr.mxu0 0.0
    %142 = vmatpush1.msra.mxu0 0.0
    %143 = vmatprep.subr.mxu0 0.0
    %144 = vmatpush1.msra.mxu0 0.0
    %145 = vmatprep.subr.mxu0 0.0
    %146 = vmatpush1.msra.mxu0 0.0
    %147 = vmatprep.mubr.f32.mxu0 0.0
    %148 = vmatmul.mubr.f32.gmra.mrb[0].mxu0 %v78
    %v149 = vpop.f32.mrb[0].mxu0
    %v150 = vadd.f32 0.0, %v149
    %v151 = vpop.f32.mrb[0].mxu0
    %152 = vmatprep.mubr.f32.mxu0 0.0
    %153 = vmatmul.mubr.f32.gmra.mrb[0].mxu0 %v81
    %v154 = vpop.f32.mrb[0].mxu0
    %v155 = vadd.f32 0.0, %v154
    %v156 = vpop.f32.mrb[0].mxu0
    %157 = vdwg.mxu0
    %158 = vmatprep.subr.mxu0 0.0
    %159 = vmatpush1.msra.mxu0 %v48
    %160 = vmatprep.subr.mxu0 0.0
    %161 = vmatpush1.msra.mxu0 %v49
    %162 = vmatprep.subr.mxu0 0.0
    %163 = vmatpush1.msra.mxu0 %v50
    %164 = vmatprep.subr.mxu0 0.0
    %165 = vmatpush1.msra.mxu0 %v51
    %166 = vmatprep.subr.mxu0 0.0
    %167 = vmatpush1.msra.mxu0 0.0
    %168 = vmatprep.subr.mxu0 0.0
    %169 = vmatpush1.msra.mxu0 0.0
    %170 = vmatprep.subr.mxu0 0.0
    %171 = vmatpush1.msra.mxu0 0.0
    %172 = vmatprep.subr.mxu0 0.0
    %173 = vmatpush1.msra.mxu0 0.0
    %174 = vmatprep.subr.mxu0 0.0
    %175 = vmatpush1.msra.mxu0 0.0
    %176 = vmatprep.subr.mxu0 0.0
    %177 = vmatpush1.msra.mxu0 0.0
    %178 = vmatprep.subr.mxu0 0.0
    %179 = vmatpush1.msra.mxu0 0.0
    %180 = vmatprep.subr.mxu0 0.0
    %181 = vmatpush1.msra.mxu0 0.0
    %182 = vmatprep.subr.mxu0 0.0
    %183 = vmatpush1.msra.mxu0 0.0
    %184 = vmatprep.subr.mxu0 0.0
    %185 = vmatpush1.msra.mxu0 0.0
    %186 = vmatprep.subr.mxu0 0.0
    %187 = vmatpush1.msra.mxu0 0.0
    %188 = vmatprep.subr.mxu0 0.0
    %189 = vmatpush1.msra.mxu0 0.0
    %190 = vmatprep.subr.mxu0 0.0
    %191 = vmatpush1.msra.mxu0 0.0
    %192 = vmatprep.subr.mxu0 0.0
    %193 = vmatpush1.msra.mxu0 0.0
    %194 = vmatprep.subr.mxu0 0.0
    %195 = vmatpush1.msra.mxu0 0.0
    %196 = vmatprep.subr.mxu0 0.0
    %197 = vmatpush1.msra.mxu0 0.0
    %198 = vmatprep.subr.mxu0 0.0
    %199 = vmatpush1.msra.mxu0 0.0
    %200 = vmatprep.subr.mxu0 0.0
    %201 = vmatpush1.msra.mxu0 0.0
    %202 = vmatprep.subr.mxu0 0.0
    %203 = vmatpush1.msra.mxu0 0.0
    %204 = vmatprep.subr.mxu0 0.0
    %205 = vmatpush1.msra.mxu0 0.0
    %206 = vmatprep.subr.mxu0 0.0
    %207 = vmatpush1.msra.mxu0 0.0
    %208 = vmatprep.subr.mxu0 0.0
    %209 = vmatpush1.msra.mxu0 0.0
    %210 = vmatprep.subr.mxu0 0.0
    %211 = vmatpush1.msra.mxu0 0.0
    %212 = vmatprep.subr.mxu0 0.0
    %213 = vmatpush1.msra.mxu0 0.0
    %214 = vmatprep.subr.mxu0 0.0
    %215 = vmatpush1.msra.mxu0 0.0
    %216 = vmatprep.subr.mxu0 0.0
    %217 = vmatpush1.msra.mxu0 0.0
    %218 = vmatprep.subr.mxu0 0.0
    %219 = vmatpush1.msra.mxu0 0.0
    %220 = vmatprep.subr.mxu0 0.0
    %221 = vmatpush1.msra.mxu0 0.0
    %222 = vmatprep.mubr.f32.mxu0 0.0
    %223 = vmatmul.mubr.f32.gmra.mrb[0].mxu0 %v78
    %v224 = vpop.f32.mrb[0].mxu0
    %v225 = vadd.f32 0.0, %v224
    %v226 = vpop.f32.mrb[0].mxu0
    %227 = vmatprep.mubr.f32.mxu0 0.0
    %228 = vmatmul.mubr.f32.gmra.mrb[0].mxu0 %v81
    %v229 = vpop.f32.mrb[0].mxu0
    %v230 = vadd.f32 0.0, %v229
    %v231 = vpop.f32.mrb[0].mxu0
    %232 = vdwg.mxu0
    %233 = vmatprep.subr.mxu0 0.0
    %234 = vmatpush1.msra.mxu0 %v52
    %235 = vmatprep.subr.mxu0 0.0
    %236 = vmatpush1.msra.mxu0 %v53
    %237 = vmatprep.subr.mxu0 0.0
    %238 = vmatpush1.msra.mxu0 %v54
    %239 = vmatprep.subr.mxu0 0.0
    %240 = vmatpush1.msra.mxu0 %v55
    %241 = vmatprep.subr.mxu0 0.0
    %242 = vmatpush1.msra.mxu0 0.0
    %243 = vmatprep.subr.mxu0 0.0
    %244 = vmatpush1.msra.mxu0 0.0
    %245 = vmatprep.subr.mxu0 0.0
    %246 = vmatpush1.msra.mxu0 0.0
    %247 = vmatprep.subr.mxu0 0.0
    %248 = vmatpush1.msra.mxu0 0.0
    %249 = vmatprep.subr.mxu0 0.0
    %250 = vmatpush1.msra.mxu0 0.0
    %251 = vmatprep.subr.mxu0 0.0
    %252 = vmatpush1.msra.mxu0 0.0
    %253 = vmatprep.subr.mxu0 0.0
    %254 = vmatpush1.msra.mxu0 0.0
    %255 = vmatprep.subr.mxu0 0.0
    %256 = vmatpush1.msra.mxu0 0.0
    %257 = vmatprep.subr.mxu0 0.0
    %258 = vmatpush1.msra.mxu0 0.0
    %259 = vmatprep.subr.mxu0 0.0
    %260 = vmatpush1.msra.mxu0 0.0
    %261 = vmatprep.subr.mxu0 0.0
    %262 = vmatpush1.msra.mxu0 0.0
    %263 = vmatprep.subr.mxu0 0.0
    %264 = vmatpush1.msra.mxu0 0.0
    %265 = vmatprep.subr.mxu0 0.0
    %266 = vmatpush1.msra.mxu0 0.0
    %267 = vmatprep.subr.mxu0 0.0
    %268 = vmatpush1.msra.mxu0 0.0
    %269 = vmatprep.subr.mxu0 0.0
    %270 = vmatpush1.msra.mxu0 0.0
    %271 = vmatprep.subr.mxu0 0.0
    %272 = vmatpush1.msra.mxu0 0.0
    %273 = vmatprep.subr.mxu0 0.0
    %274 = vmatpush1.msra.mxu0 0.0
    %275 = vmatprep.subr.mxu0 0.0
    %276 = vmatpush1.msra.mxu0 0.0
    %277 = vmatprep.subr.mxu0 0.0
    %278 = vmatpush1.msra.mxu0 0.0
    %279 = vmatprep.subr.mxu0 0.0
    %280 = vmatpush1.msra.mxu0 0.0
    %281 = vmatprep.subr.mxu0 0.0
    %282 = vmatpush1.msra.mxu0 0.0
    %283 = vmatprep.subr.mxu0 0.0
    %284 = vmatpush1.msra.mxu0 0.0
    %285 = vmatprep.subr.mxu0 0.0
    %286 = vmatpush1.msra.mxu0 0.0
    %287 = vmatprep.subr.mxu0 0.0
    %288 = vmatpush1.msra.mxu0 0.0
    %289 = vmatprep.subr.mxu0 0.0
    %290 = vmatpush1.msra.mxu0 0.0
    %291 = vmatprep.subr.mxu0 0.0
    %292 = vmatpush1.msra.mxu0 0.0
    %293 = vmatprep.subr.mxu0 0.0
    %294 = vmatpush1.msra.mxu0 0.0
    %295 = vmatprep.subr.mxu0 0.0
    %296 = vmatpush1.msra.mxu0 0.0
    %297 = vmatprep.mubr.f32.mxu0 0.0
    %298 = vmatmul.mubr.f32.gmra.mrb[0].mxu0 %v78
    %v299 = vpop.f32.mrb[0].mxu0
    %v300 = vadd.f32 0.0, %v299
    %v301 = vpop.f32.mrb[0].mxu0
    %302 = vmatprep.mubr.f32.mxu0 0.0
    %303 = vmatmul.mubr.f32.gmra.mrb[0].mxu0 %v81
    %v304 = vpop.f32.mrb[0].mxu0
    %v305 = vadd.f32 0.0, %v304
    %v306 = vpop.f32.mrb[0].mxu0
    %307 = vdwg.mxu0
    %308 = vmatprep.subr.mxu0 0.0
    %309 = vmatpush1.msra.mxu0 %v56
    %310 = vmatprep.subr.mxu0 0.0
    %311 = vmatpush1.msra.mxu0 %v57
    %312 = vmatprep.subr.mxu0 0.0
    %313 = vmatpush1.msra.mxu0 %v58
    %314 = vmatprep.subr.mxu0 0.0
    %315 = vmatpush1.msra.mxu0 %v59
    %316 = vmatprep.subr.mxu0 0.0
    %317 = vmatpush1.msra.mxu0 0.0
    %318 = vmatprep.subr.mxu0 0.0
    %319 = vmatpush1.msra.mxu0 0.0
    %320 = vmatprep.subr.mxu0 0.0
    %321 = vmatpush1.msra.mxu0 0.0
    %322 = vmatprep.subr.mxu0 0.0
    %323 = vmatpush1.msra.mxu0 0.0
    %324 = vmatprep.subr.mxu0 0.0
    %325 = vmatpush1.msra.mxu0 0.0
    %326 = vmatprep.subr.mxu0 0.0
    %327 = vmatpush1.msra.mxu0 0.0
    %328 = vmatprep.subr.mxu0 0.0
    %329 = vmatpush1.msra.mxu0 0.0
    %330 = vmatprep.subr.mxu0 0.0
    %331 = vmatpush1.msra.mxu0 0.0
    %332 = vmatprep.subr.mxu0 0.0
    %333 = vmatpush1.msra.mxu0 0.0
    %334 = vmatprep.subr.mxu0 0.0
    %335 = vmatpush1.msra.mxu0 0.0
    %336 = vmatprep.subr.mxu0 0.0
    %337 = vmatpush1.msra.mxu0 0.0
    %338 = vmatprep.subr.mxu0 0.0
    %339 = vmatpush1.msra.mxu0 0.0
    %340 = vmatprep.subr.mxu0 0.0
    %341 = vmatpush1.msra.mxu0 0.0
    %342 = vmatprep.subr.mxu0 0.0
    %343 = vmatpush1.msra.mxu0 0.0
    %344 = vmatprep.subr.mxu0 0.0
    %345 = vmatpush1.msra.mxu0 0.0
    %346 = vmatprep.subr.mxu0 0.0
    %347 = vmatpush1.msra.mxu0 0.0
    %348 = vmatprep.subr.mxu0 0.0
    %349 = vmatpush1.msra.mxu0 0.0
    %350 = vmatprep.subr.mxu0 0.0
    %351 = vmatpush1.msra.mxu0 0.0
    %352 = vmatprep.subr.mxu0 0.0
    %353 = vmatpush1.msra.mxu0 0.0
    %354 = vmatprep.subr.mxu0 0.0
    %355 = vmatpush1.msra.mxu0 0.0
    %356 = vmatprep.subr.mxu0 0.0
    %357 = vmatpush1.msra.mxu0 0.0
    %358 = vmatprep.subr.mxu0 0.0
    %359 = vmatpush1.msra.mxu0 0.0
    %360 = vmatprep.subr.mxu0 0.0
    %361 = vmatpush1.msra.mxu0 0.0
    %362 = vmatprep.subr.mxu0 0.0
    %363 = vmatpush1.msra.mxu0 0.0
    %364 = vmatprep.subr.mxu0 0.0
    %365 = vmatpush1.msra.mxu0 0.0
    %366 = vmatprep.subr.mxu0 0.0
    %367 = vmatpush1.msra.mxu0 0.0
    %368 = vmatprep.subr.mxu0 0.0
    %369 = vmatpush1.msra.mxu0 0.0
    %370 = vmatprep.subr.mxu0 0.0
    %371 = vmatpush1.msra.mxu0 0.0
    %372 = vmatprep.mubr.f32.mxu0 0.0
    %373 = vmatmul.mubr.f32.gmra.mrb[0].mxu0 %v78
    %v374 = vpop.f32.mrb[0].mxu0
    %v375 = vadd.f32 0.0, %v374
    %v376 = vpop.f32.mrb[0].mxu0
    %377 = vmatprep.mubr.f32.mxu0 0.0
    %378 = vmatmul.mubr.f32.gmra.mrb[0].mxu0 %v81
    %v379 = vpop.f32.mrb[0].mxu0
    %v380 = vadd.f32 0.0, %v379
    %v381 = vpop.f32.mrb[0].mxu0
    %382 = vdwg.mxu0
    %383 = vmatprep.subr.mxu0 0.0
    %384 = vmatpush1.msra.mxu0 %v60
    %385 = vmatprep.subr.mxu0 0.0
    %386 = vmatpush1.msra.mxu0 %v61
    %387 = vmatprep.subr.mxu0 0.0
    %388 = vmatpush1.msra.mxu0 %v62
    %389 = vmatprep.subr.mxu0 0.0
    %390 = vmatpush1.msra.mxu0 %v63
    %391 = vmatprep.subr.mxu0 0.0
    %392 = vmatpush1.msra.mxu0 0.0
    %393 = vmatprep.subr.mxu0 0.0
    %394 = vmatpush1.msra.mxu0 0.0
    %395 = vmatprep.subr.mxu0 0.0
    %396 = vmatpush1.msra.mxu0 0.0
    %397 = vmatprep.subr.mxu0 0.0
    %398 = vmatpush1.msra.mxu0 0.0
    %399 = vmatprep.subr.mxu0 0.0
    %400 = vmatpush1.msra.mxu0 0.0
    %401 = vmatprep.subr.mxu0 0.0
    %402 = vmatpush1.msra.mxu0 0.0
    %403 = vmatprep.subr.mxu0 0.0
    %404 = vmatpush1.msra.mxu0 0.0
    %405 = vmatprep.subr.mxu0 0.0
    %406 = vmatpush1.msra.mxu0 0.0
    %407 = vmatprep.subr.mxu0 0.0
    %408 = vmatpush1.msra.mxu0 0.0
    %409 = vmatprep.subr.mxu0 0.0
    %410 = vmatpush1.msra.mxu0 0.0
    %411 = vmatprep.subr.mxu0 0.0
    %412 = vmatpush1.msra.mxu0 0.0
    %413 = vmatprep.subr.mxu0 0.0
    %414 = vmatpush1.msra.mxu0 0.0
    %415 = vmatprep.subr.mxu0 0.0
    %416 = vmatpush1.msra.mxu0 0.0
    %417 = vmatprep.subr.mxu0 0.0
    %418 = vmatpush1.msra.mxu0 0.0
    %419 = vmatprep.subr.mxu0 0.0
    %420 = vmatpush1.msra.mxu0 0.0
    %421 = vmatprep.subr.mxu0 0.0
    %422 = vmatpush1.msra.mxu0 0.0
    %423 = vmatprep.subr.mxu0 0.0
    %424 = vmatpush1.msra.mxu0 0.0
    %425 = vmatprep.subr.mxu0 0.0
    %426 = vmatpush1.msra.mxu0 0.0
    %427 = vmatprep.subr.mxu0 0.0
    %428 = vmatpush1.msra.mxu0 0.0
    %429 = vmatprep.subr.mxu0 0.0
    %430 = vmatpush1.msra.mxu0 0.0
    %431 = vmatprep.subr.mxu0 0.0
    %432 = vmatpush1.msra.mxu0 0.0
    %433 = vmatprep.subr.mxu0 0.0
    %434 = vmatpush1.msra.mxu0 0.0
    %435 = vmatprep.subr.mxu0 0.0
    %436 = vmatpush1.msra.mxu0 0.0
    %437 = vmatprep.subr.mxu0 0.0
    %438 = vmatpush1.msra.mxu0 0.0
    %439 = vmatprep.subr.mxu0 0.0
    %440 = vmatpush1.msra.mxu0 0.0
    %441 = vmatprep.subr.mxu0 0.0
    %442 = vmatpush1.msra.mxu0 0.0
    %443 = vmatprep.subr.mxu0 0.0
    %444 = vmatpush1.msra.mxu0 0.0
    %445 = vmatprep.subr.mxu0 0.0
    %446 = vmatpush1.msra.mxu0 0.0
    %447 = vmatprep.mubr.f32.mxu0 0.0
    %448 = vmatmul.mubr.f32.gmra.mrb[0].mxu0 %v78
    %v449 = vpop.f32.mrb[0].mxu0
    %v450 = vadd.f32 0.0, %v449
    %v451 = vpop.f32.mrb[0].mxu0
    %452 = vmatprep.mubr.f32.mxu0 0.0
    %453 = vmatmul.mubr.f32.gmra.mrb[0].mxu0 %v81
    %v454 = vpop.f32.mrb[0].mxu0
    %v455 = vadd.f32 0.0, %v454
    %v456 = vpop.f32.mrb[0].mxu0
    %457 = vdwg.mxu0
    %458 = vmatprep.subr.mxu0 0.0
    %459 = vmatpush1.msra.mxu0 %v64
    %460 = vmatprep.subr.mxu0 0.0
    %461 = vmatpush1.msra.mxu0 %v65
    %462 = vmatprep.subr.mxu0 0.0
    %463 = vmatpush1.msra.mxu0 %v66
    %464 = vmatprep.subr.mxu0 0.0
    %465 = vmatpush1.msra.mxu0 %v67
    %466 = vmatprep.subr.mxu0 0.0
    %467 = vmatpush1.msra.mxu0 0.0
    %468 = vmatprep.subr.mxu0 0.0
    %469 = vmatpush1.msra.mxu0 0.0
    %470 = vmatprep.subr.mxu0 0.0
    %471 = vmatpush1.msra.mxu0 0.0
    %472 = vmatprep.subr.mxu0 0.0
    %473 = vmatpush1.msra.mxu0 0.0
    %474 = vmatprep.subr.mxu0 0.0
    %475 = vmatpush1.msra.mxu0 0.0
    %476 = vmatprep.subr.mxu0 0.0
    %477 = vmatpush1.msra.mxu0 0.0
    %478 = vmatprep.subr.mxu0 0.0
    %479 = vmatpush1.msra.mxu0 0.0
    %480 = vmatprep.subr.mxu0 0.0
    %481 = vmatpush1.msra.mxu0 0.0
    %482 = vmatprep.subr.mxu0 0.0
    %483 = vmatpush1.msra.mxu0 0.0
    %484 = vmatprep.subr.mxu0 0.0
    %485 = vmatpush1.msra.mxu0 0.0
    %486 = vmatprep.subr.mxu0 0.0
    %487 = vmatpush1.msra.mxu0 0.0
    %488 = vmatprep.subr.mxu0 0.0
    %489 = vmatpush1.msra.mxu0 0.0
    %490 = vmatprep.subr.mxu0 0.0
    %491 = vmatpush1.msra.mxu0 0.0
    %492 = vmatprep.subr.mxu0 0.0
    %493 = vmatpush1.msra.mxu0 0.0
    %494 = vmatprep.subr.mxu0 0.0
    %495 = vmatpush1.msra.mxu0 0.0
    %496 = vmatprep.subr.mxu0 0.0
    %497 = vmatpush1.msra.mxu0 0.0
    %498 = vmatprep.subr.mxu0 0.0
    %499 = vmatpush1.msra.mxu0 0.0
    %500 = vmatprep.subr.mxu0 0.0
    %501 = vmatpush1.msra.mxu0 0.0
    %502 = vmatprep.subr.mxu0 0.0
    %503 = vmatpush1.msra.mxu0 0.0
    %504 = vmatprep.subr.mxu0 0.0
    %505 = vmatpush1.msra.mxu0 0.0
    %506 = vmatprep.subr.mxu0 0.0
    %507 = vmatpush1.msra.mxu0 0.0
    %508 = vmatprep.subr.mxu0 0.0
    %509 = vmatpush1.msra.mxu0 0.0
    %510 = vmatprep.subr.mxu0 0.0
    %511 = vmatpush1.msra.mxu0 0.0
    %512 = vmatprep.subr.mxu0 0.0
    %513 = vmatpush1.msra.mxu0 0.0
    %514 = vmatprep.subr.mxu0 0.0
    %515 = vmatpush1.msra.mxu0 0.0
    %516 = vmatprep.subr.mxu0 0.0
    %517 = vmatpush1.msra.mxu0 0.0
    %518 = vmatprep.subr.mxu0 0.0
    %519 = vmatpush1.msra.mxu0 0.0
    %520 = vmatprep.subr.mxu0 0.0
    %521 = vmatpush1.msra.mxu0 0.0
    %522 = vmatprep.mubr.f32.mxu0 0.0
    %523 = vmatmul.mubr.f32.gmra.mrb[0].mxu0 %v78
    %v524 = vpop.f32.mrb[0].mxu0
    %v525 = vadd.f32 0.0, %v524
    %v526 = vpop.f32.mrb[0].mxu0
    %527 = vmatprep.mubr.f32.mxu0 0.0
    %528 = vmatmul.mubr.f32.gmra.mrb[0].mxu0 %v81
    %v529 = vpop.f32.mrb[0].mxu0
    %v530 = vadd.f32 0.0, %v529
    %v531 = vpop.f32.mrb[0].mxu0
    %532 = vdwg.mxu0
    %533 = vmatprep.subr.mxu0 0.0
    %534 = vmatpush1.msra.mxu0 %v68
    %535 = vmatprep.subr.mxu0 0.0
    %536 = vmatpush1.msra.mxu0 %v69
    %537 = vmatprep.subr.mxu0 0.0
    %538 = vmatpush1.msra.mxu0 %v70
    %539 = vmatprep.subr.mxu0 0.0
    %540 = vmatpush1.msra.mxu0 %v71
    %541 = vmatprep.subr.mxu0 0.0
    %542 = vmatpush1.msra.mxu0 0.0
    %543 = vmatprep.subr.mxu0 0.0
    %544 = vmatpush1.msra.mxu0 0.0
    %545 = vmatprep.subr.mxu0 0.0
    %546 = vmatpush1.msra.mxu0 0.0
    %547 = vmatprep.subr.mxu0 0.0
    %548 = vmatpush1.msra.mxu0 0.0
    %549 = vmatprep.subr.mxu0 0.0
    %550 = vmatpush1.msra.mxu0 0.0
    %551 = vmatprep.subr.mxu0 0.0
    %552 = vmatpush1.msra.mxu0 0.0
    %553 = vmatprep.subr.mxu0 0.0
    %554 = vmatpush1.msra.mxu0 0.0
    %555 = vmatprep.subr.mxu0 0.0
    %556 = vmatpush1.msra.mxu0 0.0
    %557 = vmatprep.subr.mxu0 0.0
    %558 = vmatpush1.msra.mxu0 0.0
    %559 = vmatprep.subr.mxu0 0.0
    %560 = vmatpush1.msra.mxu0 0.0
    %561 = vmatprep.subr.mxu0 0.0
    %562 = vmatpush1.msra.mxu0 0.0
    %563 = vmatprep.subr.mxu0 0.0
    %564 = vmatpush1.msra.mxu0 0.0
    %565 = vmatprep.subr.mxu0 0.0
    %566 = vmatpush1.msra.mxu0 0.0
    %567 = vmatprep.subr.mxu0 0.0
    %568 = vmatpush1.msra.mxu0 0.0
    %569 = vmatprep.subr.mxu0 0.0
    %570 = vmatpush1.msra.mxu0 0.0
    %571 = vmatprep.subr.mxu0 0.0
    %572 = vmatpush1.msra.mxu0 0.0
    %573 = vmatprep.subr.mxu0 0.0
    %574 = vmatpush1.msra.mxu0 0.0
    %575 = vmatprep.subr.mxu0 0.0
    %576 = vmatpush1.msra.mxu0 0.0
    %577 = vmatprep.subr.mxu0 0.0
    %578 = vmatpush1.msra.mxu0 0.0
    %579 = vmatprep.subr.mxu0 0.0
    %580 = vmatpush1.msra.mxu0 0.0
    %581 = vmatprep.subr.mxu0 0.0
    %582 = vmatpush1.msra.mxu0 0.0
    %583 = vmatprep.subr.mxu0 0.0
    %584 = vmatpush1.msra.mxu0 0.0
    %585 = vmatprep.subr.mxu0 0.0
    %586 = vmatpush1.msra.mxu0 0.0
    %587 = vmatprep.subr.mxu0 0.0
    %588 = vmatpush1.msra.mxu0 0.0
    %589 = vmatprep.subr.mxu0 0.0
    %590 = vmatpush1.msra.mxu0 0.0
    %591 = vmatprep.subr.mxu0 0.0
    %592 = vmatpush1.msra.mxu0 0.0
    %593 = vmatprep.subr.mxu0 0.0
    %594 = vmatpush1.msra.mxu0 0.0
    %595 = vmatprep.subr.mxu0 0.0
    %596 = vmatpush1.msra.mxu0 0.0
    %597 = vmatprep.mubr.f32.mxu0 0.0
    %598 = vmatmul.mubr.f32.gmra.mrb[0].mxu0 %v78
    %v599 = vpop.f32.mrb[0].mxu0
    %v600 = vadd.f32 0.0, %v599
    %v601 = vpop.f32.mrb[0].mxu0
    %602 = vmatprep.mubr.f32.mxu0 0.0
    %603 = vmatmul.mubr.f32.gmra.mrb[0].mxu0 %v81
    %v604 = vpop.f32.mrb[0].mxu0
    %v605 = vadd.f32 0.0, %v604
    %v606 = vpop.f32.mrb[0].mxu0
    %607 = vdwg.mxu0
    %608 = vmatprep.subr.mxu0 0.0
    %609 = vmatpush1.msra.mxu0 %v72
    %610 = vmatprep.subr.mxu0 0.0
    %611 = vmatpush1.msra.mxu0 %v73
    %612 = vmatprep.subr.mxu0 0.0
    %613 = vmatpush1.msra.mxu0 %v74
    %614 = vmatprep.subr.mxu0 0.0
    %615 = vmatpush1.msra.mxu0 %v75
    %616 = vmatprep.subr.mxu0 0.0
    %617 = vmatpush1.msra.mxu0 0.0
    %618 = vmatprep.subr.mxu0 0.0
    %619 = vmatpush1.msra.mxu0 0.0
    %620 = vmatprep.subr.mxu0 0.0
    %621 = vmatpush1.msra.mxu0 0.0
    %622 = vmatprep.subr.mxu0 0.0
    %623 = vmatpush1.msra.mxu0 0.0
    %624 = vmatprep.subr.mxu0 0.0
    %625 = vmatpush1.msra.mxu0 0.0
    %626 = vmatprep.subr.mxu0 0.0
    %627 = vmatpush1.msra.mxu0 0.0
    %628 = vmatprep.subr.mxu0 0.0
    %629 = vmatpush1.msra.mxu0 0.0
    %630 = vmatprep.subr.mxu0 0.0
    %631 = vmatpush1.msra.mxu0 0.0
    %632 = vmatprep.subr.mxu0 0.0
    %633 = vmatpush1.msra.mxu0 0.0
    %634 = vmatprep.subr.mxu0 0.0
    %635 = vmatpush1.msra.mxu0 0.0
    %636 = vmatprep.subr.mxu0 0.0
    %637 = vmatpush1.msra.mxu0 0.0
    %638 = vmatprep.subr.mxu0 0.0
    %639 = vmatpush1.msra.mxu0 0.0
    %640 = vmatprep.subr.mxu0 0.0
    %641 = vmatpush1.msra.mxu0 0.0
    %642 = vmatprep.subr.mxu0 0.0
    %643 = vmatpush1.msra.mxu0 0.0
    %644 = vmatprep.subr.mxu0 0.0
    %645 = vmatpush1.msra.mxu0 0.0
    %646 = vmatprep.subr.mxu0 0.0
    %647 = vmatpush1.msra.mxu0 0.0
    %648 = vmatprep.subr.mxu0 0.0
    %649 = vmatpush1.msra.mxu0 0.0
    %650 = vmatprep.subr.mxu0 0.0
    %651 = vmatpush1.msra.mxu0 0.0
    %652 = vmatprep.subr.mxu0 0.0
    %653 = vmatpush1.msra.mxu0 0.0
    %654 = vmatprep.subr.mxu0 0.0
    %655 = vmatpush1.msra.mxu0 0.0
    %656 = vmatprep.subr.mxu0 0.0
    %657 = vmatpush1.msra.mxu0 0.0
    %658 = vmatprep.subr.mxu0 0.0
    %659 = vmatpush1.msra.mxu0 0.0
    %660 = vmatprep.subr.mxu0 0.0
    %661 = vmatpush1.msra.mxu0 0.0
    %662 = vmatprep.subr.mxu0 0.0
    %663 = vmatpush1.msra.mxu0 0.0
    %664 = vmatprep.subr.mxu0 0.0
    %665 = vmatpush1.msra.mxu0 0.0
    %666 = vmatprep.subr.mxu0 0.0
    %667 = vmatpush1.msra.mxu0 0.0
    %668 = vmatprep.subr.mxu0 0.0
    %669 = vmatpush1.msra.mxu0 0.0
    %670 = vmatprep.subr.mxu0 0.0
    %671 = vmatpush1.msra.mxu0 0.0
    %672 = vmatprep.mubr.f32.mxu0 0.0
    %673 = vmatmul.mubr.f32.gmra.mrb[0].mxu0 %v78
    %v674 = vpop.f32.mrb[0].mxu0
    %v675 = vadd.f32 0.0, %v674
    %v676 = vpop.f32.mrb[0].mxu0
    %677 = vmatprep.mubr.f32.mxu0 0.0
    %678 = vmatmul.mubr.f32.gmra.mrb[0].mxu0 %v81
    %v679 = vpop.f32.mrb[0].mxu0
    %v680 = vadd.f32 0.0, %v679
    %v681 = vpop.f32.mrb[0].mxu0
    %682 = vdwg.mxu0
    %v683 = vld [vmem:[%s5] sm:$0xff]
    %v684 = vld [vmem:[%s5 + $0x8] sm:$0xff]
    %v685 = vld [vmem:[%s5 + $0x10] sm:$0xff]
    %v686 = vld [vmem:[%s5 + $0x18] sm:$0xff]
    %v687 = vld [vmem:[%s5 + $0x20] sm:$0xff]
    %v688 = vld [vmem:[%s5 + $0x28] sm:$0xff]
    %v689 = vld [vmem:[%s5 + $0x30] sm:$0xff]
    %v690 = vld [vmem:[%s5 + $0x38] sm:$0xff]
    %v691 = vld [vmem:[%s5 + $0x40] sm:$0xff]
    %v692 = vld [vmem:[%s5 + $0x48] sm:$0xff]
    %v693 = vld [vmem:[%s5 + $0x50] sm:$0xff]
    %v694 = vld [vmem:[%s5 + $0x58] sm:$0xff]
    %v695 = vld [vmem:[%s5 + $0x60] sm:$0xff]
    %v696 = vld [vmem:[%s5 + $0x68] sm:$0xff]
    %v697 = vld [vmem:[%s5 + $0x70] sm:$0xff]
    %v698 = vld [vmem:[%s5 + $0x78] sm:$0xff]
    %v699 = vld [vmem:[%s5 + $0x80] sm:$0xff]
    %v700 = vld [vmem:[%s5 + $0x88] sm:$0xff]
    %v701 = vld [vmem:[%s5 + $0x90] sm:$0xff]
    %v702 = vld [vmem:[%s5 + $0x98] sm:$0xff]
    %v703 = vld [vmem:[%s5 + $0xa0] sm:$0xff]
    %v704 = vld [vmem:[%s5 + $0xa8] sm:$0xff]
    %v705 = vld [vmem:[%s5 + $0xb0] sm:$0xff]
    %v706 = vld [vmem:[%s5 + $0xb8] sm:$0xff]
    %v707 = vld [vmem:[%s5 + $0xc0] sm:$0xff]
    %v708 = vld [vmem:[%s5 + $0xc8] sm:$0xff]
    %v709 = vld [vmem:[%s5 + $0xd0] sm:$0xff]
    %v710 = vld [vmem:[%s5 + $0xd8] sm:$0xff]
    %v711 = vld [vmem:[%s5 + $0xe0] sm:$0xff]
    %v712 = vld [vmem:[%s5 + $0xe8] sm:$0xff]
    %v713 = vld [vmem:[%s5 + $0xf0] sm:$0xff]
    %v714 = vld [vmem:[%s5 + $0xf8] sm:$0xff]
    %v716 = vsel %vm76, %v40, 0
    %v719 = vsel %vm76, %v41, 0
    %721 = vmatprep.subr.mxu0 0.0
    %722 = vmatpush1.msra.mxu0 %v683
    %723 = vmatprep.subr.mxu0 0.0
    %724 = vmatpush1.msra.mxu0 %v684
    %725 = vmatprep.subr.mxu0 0.0
    %726 = vmatpush1.msra.mxu0 %v685
    %727 = vmatprep.subr.mxu0 0.0
    %728 = vmatpush1.msra.mxu0 %v686
    %729 = vmatprep.subr.mxu0 0.0
    %730 = vmatpush1.msra.mxu0 0.0
    %731 = vmatprep.subr.mxu0 0.0
    %732 = vmatpush1.msra.mxu0 0.0
    %733 = vmatprep.subr.mxu0 0.0
    %734 = vmatpush1.msra.mxu0 0.0
    %735 = vmatprep.subr.mxu0 0.0
    %736 = vmatpush1.msra.mxu0 0.0
    %737 = vmatprep.subr.mxu0 0.0
    %738 = vmatpush1.msra.mxu0 0.0
    %739 = vmatprep.subr.mxu0 0.0
    %740 = vmatpush1.msra.mxu0 0.0
    %741 = vmatprep.subr.mxu0 0.0
    %742 = vmatpush1.msra.mxu0 0.0
    %743 = vmatprep.subr.mxu0 0.0
    %744 = vmatpush1.msra.mxu0 0.0
    %745 = vmatprep.subr.mxu0 0.0
    %746 = vmatpush1.msra.mxu0 0.0
    %747 = vmatprep.subr.mxu0 0.0
    %748 = vmatpush1.msra.mxu0 0.0
    %749 = vmatprep.subr.mxu0 0.0
    %750 = vmatpush1.msra.mxu0 0.0
    %751 = vmatprep.subr.mxu0 0.0
    %752 = vmatpush1.msra.mxu0 0.0
    %753 = vmatprep.subr.mxu0 0.0
    %754 = vmatpush1.msra.mxu0 0.0
    %755 = vmatprep.subr.mxu0 0.0
    %756 = vmatpush1.msra.mxu0 0.0
    %757 = vmatprep.subr.mxu0 0.0
    %758 = vmatpush1.msra.mxu0 0.0
    %759 = vmatprep.subr.mxu0 0.0
    %760 = vmatpush1.msra.mxu0 0.0
    %761 = vmatprep.subr.mxu0 0.0
    %762 = vmatpush1.msra.mxu0 0.0
    %763 = vmatprep.subr.mxu0 0.0
    %764 = vmatpush1.msra.mxu0 0.0
    %765 = vmatprep.subr.mxu0 0.0
    %766 = vmatpush1.msra.mxu0 0.0
    %767 = vmatprep.subr.mxu0 0.0
    %768 = vmatpush1.msra.mxu0 0.0
    %769 = vmatprep.subr.mxu0 0.0
    %770 = vmatpush1.msra.mxu0 0.0
    %771 = vmatprep.subr.mxu0 0.0
    %772 = vmatpush1.msra.mxu0 0.0
    %773 = vmatprep.subr.mxu0 0.0
    %774 = vmatpush1.msra.mxu0 0.0
    %775 = vmatprep.subr.mxu0 0.0
    %776 = vmatpush1.msra.mxu0 0.0
    %777 = vmatprep.subr.mxu0 0.0
    %778 = vmatpush1.msra.mxu0 0.0
    %779 = vmatprep.subr.mxu0 0.0
    %780 = vmatpush1.msra.mxu0 0.0
    %781 = vmatprep.subr.mxu0 0.0
    %782 = vmatpush1.msra.mxu0 0.0
    %783 = vmatprep.subr.mxu0 0.0
    %784 = vmatpush1.msra.mxu0 0.0
    %785 = vmatprep.mubr.f32.mxu0 0.0
    %786 = vmatmul.mubr.f32.gmra.mrb[0].mxu0 %v716
    %v787 = vpop.f32.mrb[0].mxu0
    %v788 = vadd.f32 0.0, %v787
    %v789 = vpop.f32.mrb[0].mxu0
    %790 = vmatprep.mubr.f32.mxu0 0.0
    %791 = vmatmul.mubr.f32.gmra.mrb[0].mxu0 %v719
    %v792 = vpop.f32.mrb[0].mxu0
    %v793 = vadd.f32 0.0, %v792
    %v794 = vpop.f32.mrb[0].mxu0
    %795 = vdwg.mxu0
    %796 = vmatprep.subr.mxu0 0.0
    %797 = vmatpush1.msra.mxu0 %v687
    %798 = vmatprep.subr.mxu0 0.0
    %799 = vmatpush1.msra.mxu0 %v688
    %800 = vmatprep.subr.mxu0 0.0
    %801 = vmatpush1.msra.mxu0 %v689
    %802 = vmatprep.subr.mxu0 0.0
    %803 = vmatpush1.msra.mxu0 %v690
    %804 = vmatprep.subr.mxu0 0.0
    %805 = vmatpush1.msra.mxu0 0.0
    %806 = vmatprep.subr.mxu0 0.0
    %807 = vmatpush1.msra.mxu0 0.0
    %808 = vmatprep.subr.mxu0 0.0
    %809 = vmatpush1.msra.mxu0 0.0
    %810 = vmatprep.subr.mxu0 0.0
    %811 = vmatpush1.msra.mxu0 0.0
    %812 = vmatprep.subr.mxu0 0.0
    %813 = vmatpush1.msra.mxu0 0.0
    %814 = vmatprep.subr.mxu0 0.0
    %815 = vmatpush1.msra.mxu0 0.0
    %816 = vmatprep.subr.mxu0 0.0
    %817 = vmatpush1.msra.mxu0 0.0
    %818 = vmatprep.subr.mxu0 0.0
    %819 = vmatpush1.msra.mxu0 0.0
    %820 = vmatprep.subr.mxu0 0.0
    %821 = vmatpush1.msra.mxu0 0.0
    %822 = vmatprep.subr.mxu0 0.0
    %823 = vmatpush1.msra.mxu0 0.0
    %824 = vmatprep.subr.mxu0 0.0
    %825 = vmatpush1.msra.mxu0 0.0
    %826 = vmatprep.subr.mxu0 0.0
    %827 = vmatpush1.msra.mxu0 0.0
    %828 = vmatprep.subr.mxu0 0.0
    %829 = vmatpush1.msra.mxu0 0.0
    %830 = vmatprep.subr.mxu0 0.0
    %831 = vmatpush1.msra.mxu0 0.0
    %832 = vmatprep.subr.mxu0 0.0
    %833 = vmatpush1.msra.mxu0 0.0
    %834 = vmatprep.subr.mxu0 0.0
    %835 = vmatpush1.msra.mxu0 0.0
    %836 = vmatprep.subr.mxu0 0.0
    %837 = vmatpush1.msra.mxu0 0.0
    %838 = vmatprep.subr.mxu0 0.0
    %839 = vmatpush1.msra.mxu0 0.0
    %840 = vmatprep.subr.mxu0 0.0
    %841 = vmatpush1.msra.mxu0 0.0
    %842 = vmatprep.subr.mxu0 0.0
    %843 = vmatpush1.msra.mxu0 0.0
    %844 = vmatprep.subr.mxu0 0.0
    %845 = vmatpush1.msra.mxu0 0.0
    %846 = vmatprep.subr.mxu0 0.0
    %847 = vmatpush1.msra.mxu0 0.0
    %848 = vmatprep.subr.mxu0 0.0
    %849 = vmatpush1.msra.mxu0 0.0
    %850 = vmatprep.subr.mxu0 0.0
    %851 = vmatpush1.msra.mxu0 0.0
    %852 = vmatprep.subr.mxu0 0.0
    %853 = vmatpush1.msra.mxu0 0.0
    %854 = vmatprep.subr.mxu0 0.0
    %855 = vmatpush1.msra.mxu0 0.0
    %856 = vmatprep.subr.mxu0 0.0
    %857 = vmatpush1.msra.mxu0 0.0
    %858 = vmatprep.subr.mxu0 0.0
    %859 = vmatpush1.msra.mxu0 0.0
    %860 = vmatprep.mubr.f32.mxu0 0.0
    %861 = vmatmul.mubr.f32.gmra.mrb[0].mxu0 %v716
    %v862 = vpop.f32.mrb[0].mxu0
    %v863 = vadd.f32 0.0, %v862
    %v864 = vpop.f32.mrb[0].mxu0
    %865 = vmatprep.mubr.f32.mxu0 0.0
    %866 = vmatmul.mubr.f32.gmra.mrb[0].mxu0 %v719
    %v867 = vpop.f32.mrb[0].mxu0
    %v868 = vadd.f32 0.0, %v867
    %v869 = vpop.f32.mrb[0].mxu0
    %870 = vdwg.mxu0
    %871 = vmatprep.subr.mxu0 0.0
    %872 = vmatpush1.msra.mxu0 %v691
    %873 = vmatprep.subr.mxu0 0.0
    %874 = vmatpush1.msra.mxu0 %v692
    %875 = vmatprep.subr.mxu0 0.0
    %876 = vmatpush1.msra.mxu0 %v693
    %877 = vmatprep.subr.mxu0 0.0
    %878 = vmatpush1.msra.mxu0 %v694
    %879 = vmatprep.subr.mxu0 0.0
    %880 = vmatpush1.msra.mxu0 0.0
    %881 = vmatprep.subr.mxu0 0.0
    %882 = vmatpush1.msra.mxu0 0.0
    %883 = vmatprep.subr.mxu0 0.0
    %884 = vmatpush1.msra.mxu0 0.0
    %885 = vmatprep.subr.mxu0 0.0
    %886 = vmatpush1.msra.mxu0 0.0
    %887 = vmatprep.subr.mxu0 0.0
    %888 = vmatpush1.msra.mxu0 0.0
    %889 = vmatprep.subr.mxu0 0.0
    %890 = vmatpush1.msra.mxu0 0.0
    %891 = vmatprep.subr.mxu0 0.0
    %892 = vmatpush1.msra.mxu0 0.0
    %893 = vmatprep.subr.mxu0 0.0
    %894 = vmatpush1.msra.mxu0 0.0
    %895 = vmatprep.subr.mxu0 0.0
    %896 = vmatpush1.msra.mxu0 0.0
    %897 = vmatprep.subr.mxu0 0.0
    %898 = vmatpush1.msra.mxu0 0.0
    %899 = vmatprep.subr.mxu0 0.0
    %900 = vmatpush1.msra.mxu0 0.0
    %901 = vmatprep.subr.mxu0 0.0
    %902 = vmatpush1.msra.mxu0 0.0
    %903 = vmatprep.subr.mxu0 0.0
    %904 = vmatpush1.msra.mxu0 0.0
    %905 = vmatprep.subr.mxu0 0.0
    %906 = vmatpush1.msra.mxu0 0.0
    %907 = vmatprep.subr.mxu0 0.0
    %908 = vmatpush1.msra.mxu0 0.0
    %909 = vmatprep.subr.mxu0 0.0
    %910 = vmatpush1.msra.mxu0 0.0
    %911 = vmatprep.subr.mxu0 0.0
    %912 = vmatpush1.msra.mxu0 0.0
    %913 = vmatprep.subr.mxu0 0.0
    %914 = vmatpush1.msra.mxu0 0.0
    %915 = vmatprep.subr.mxu0 0.0
    %916 = vmatpush1.msra.mxu0 0.0
    %917 = vmatprep.subr.mxu0 0.0
    %918 = vmatpush1.msra.mxu0 0.0
    %919 = vmatprep.subr.mxu0 0.0
    %920 = vmatpush1.msra.mxu0 0.0
    %921 = vmatprep.subr.mxu0 0.0
    %922 = vmatpush1.msra.mxu0 0.0
    %923 = vmatprep.subr.mxu0 0.0
    %924 = vmatpush1.msra.mxu0 0.0
    %925 = vmatprep.subr.mxu0 0.0
    %926 = vmatpush1.msra.mxu0 0.0
    %927 = vmatprep.subr.mxu0 0.0
    %928 = vmatpush1.msra.mxu0 0.0
    %929 = vmatprep.subr.mxu0 0.0
    %930 = vmatpush1.msra.mxu0 0.0
    %931 = vmatprep.subr.mxu0 0.0
    %932 = vmatpush1.msra.mxu0 0.0
    %933 = vmatprep.subr.mxu0 0.0
    %934 = vmatpush1.msra.mxu0 0.0
    %935 = vmatprep.mubr.f32.mxu0 0.0
    %936 = vmatmul.mubr.f32.gmra.mrb[0].mxu0 %v716
    %v937 = vpop.f32.mrb[0].mxu0
    %v938 = vadd.f32 0.0, %v937
    %v939 = vpop.f32.mrb[0].mxu0
    %940 = vmatprep.mubr.f32.mxu0 0.0
    %941 = vmatmul.mubr.f32.gmra.mrb[0].mxu0 %v719
    %v942 = vpop.f32.mrb[0].mxu0
    %v943 = vadd.f32 0.0, %v942
    %v944 = vpop.f32.mrb[0].mxu0
    %945 = vdwg.mxu0
    %946 = vmatprep.subr.mxu0 0.0
    %947 = vmatpush1.msra.mxu0 %v695
    %948 = vmatprep.subr.mxu0 0.0
    %949 = vmatpush1.msra.mxu0 %v696
    %950 = vmatprep.subr.mxu0 0.0
    %951 = vmatpush1.msra.mxu0 %v697
    %952 = vmatprep.subr.mxu0 0.0
    %953 = vmatpush1.msra.mxu0 %v698
    %954 = vmatprep.subr.mxu0 0.0
    %955 = vmatpush1.msra.mxu0 0.0
    %956 = vmatprep.subr.mxu0 0.0
    %957 = vmatpush1.msra.mxu0 0.0
    %958 = vmatprep.subr.mxu0 0.0
    %959 = vmatpush1.msra.mxu0 0.0
    %960 = vmatprep.subr.mxu0 0.0
    %961 = vmatpush1.msra.mxu0 0.0
    %962 = vmatprep.subr.mxu0 0.0
    %963 = vmatpush1.msra.mxu0 0.0
    %964 = vmatprep.subr.mxu0 0.0
    %965 = vmatpush1.msra.mxu0 0.0
    %966 = vmatprep.subr.mxu0 0.0
    %967 = vmatpush1.msra.mxu0 0.0
    %968 = vmatprep.subr.mxu0 0.0
    %969 = vmatpush1.msra.mxu0 0.0
    %970 = vmatprep.subr.mxu0 0.0
    %971 = vmatpush1.msra.mxu0 0.0
    %972 = vmatprep.subr.mxu0 0.0
    %973 = vmatpush1.msra.mxu0 0.0
    %974 = vmatprep.subr.mxu0 0.0
    %975 = vmatpush1.msra.mxu0 0.0
    %976 = vmatprep.subr.mxu0 0.0
    %977 = vmatpush1.msra.mxu0 0.0
    %978 = vmatprep.subr.mxu0 0.0
    %979 = vmatpush1.msra.mxu0 0.0
    %980 = vmatprep.subr.mxu0 0.0
    %981 = vmatpush1.msra.mxu0 0.0
    %982 = vmatprep.subr.mxu0 0.0
    %983 = vmatpush1.msra.mxu0 0.0
    %984 = vmatprep.subr.mxu0 0.0
    %985 = vmatpush1.msra.mxu0 0.0
    %986 = vmatprep.subr.mxu0 0.0
    %987 = vmatpush1.msra.mxu0 0.0
    %988 = vmatprep.subr.mxu0 0.0
    %989 = vmatpush1.msra.mxu0 0.0
    %990 = vmatprep.subr.mxu0 0.0
    %991 = vmatpush1.msra.mxu0 0.0
    %992 = vmatprep.subr.mxu0 0.0
    %993 = vmatpush1.msra.mxu0 0.0
    %994 = vmatprep.subr.mxu0 0.0
    %995 = vmatpush1.msra.mxu0 0.0
    %996 = vmatprep.subr.mxu0 0.0
    %997 = vmatpush1.msra.mxu0 0.0
    %998 = vmatprep.subr.mxu0 0.0
    %999 = vmatpush1.msra.mxu0 0.0
    %1000 = vmatprep.subr.mxu0 0.0
    %1001 = vmatpush1.msra.mxu0 0.0
    %1002 = vmatprep.subr.mxu0 0.0
    %1003 = vmatpush1.msra.mxu0 0.0
    %1004 = vmatprep.subr.mxu0 0.0
    %1005 = vmatpush1.msra.mxu0 0.0
    %1006 = vmatprep.subr.mxu0 0.0
    %1007 = vmatpush1.msra.mxu0 0.0
    %1008 = vmatprep.subr.mxu0 0.0
    %1009 = vmatpush1.msra.mxu0 0.0
    %1010 = vmatprep.mubr.f32.mxu0 0.0
    %1011 = vmatmul.mubr.f32.gmra.mrb[0].mxu0 %v716
    %v1012 = vpop.f32.mrb[0].mxu0
    %v1013 = vadd.f32 0.0, %v1012
    %v1014 = vpop.f32.mrb[0].mxu0
    %1015 = vmatprep.mubr.f32.mxu0 0.0
    %1016 = vmatmul.mubr.f32.gmra.mrb[0].mxu0 %v719
    %v1017 = vpop.f32.mrb[0].mxu0
    %v1018 = vadd.f32 0.0, %v1017
    %v1019 = vpop.f32.mrb[0].mxu0
    %1020 = vdwg.mxu0
    %1021 = vmatprep.subr.mxu0 0.0
    %1022 = vmatpush1.msra.mxu0 %v699
    %1023 = vmatprep.subr.mxu0 0.0
    %1024 = vmatpush1.msra.mxu0 %v700
    %1025 = vmatprep.subr.mxu0 0.0
    %1026 = vmatpush1.msra.mxu0 %v701
    %1027 = vmatprep.subr.mxu0 0.0
    %1028 = vmatpush1.msra.mxu0 %v702
    %1029 = vmatprep.subr.mxu0 0.0
    %1030 = vmatpush1.msra.mxu0 0.0
    %1031 = vmatprep.subr.mxu0 0.0
    %1032 = vmatpush1.msra.mxu0 0.0
    %1033 = vmatprep.subr.mxu0 0.0
    %1034 = vmatpush1.msra.mxu0 0.0
    %1035 = vmatprep.subr.mxu0 0.0
    %1036 = vmatpush1.msra.mxu0 0.0
    %1037 = vmatprep.subr.mxu0 0.0
    %1038 = vmatpush1.msra.mxu0 0.0
    %1039 = vmatprep.subr.mxu0 0.0
    %1040 = vmatpush1.msra.mxu0 0.0
    %1041 = vmatprep.subr.mxu0 0.0
    %1042 = vmatpush1.msra.mxu0 0.0
    %1043 = vmatprep.subr.mxu0 0.0
    %1044 = vmatpush1.msra.mxu0 0.0
    %1045 = vmatprep.subr.mxu0 0.0
    %1046 = vmatpush1.msra.mxu0 0.0
    %1047 = vmatprep.subr.mxu0 0.0
    %1048 = vmatpush1.msra.mxu0 0.0
    %1049 = vmatprep.subr.mxu0 0.0
    %1050 = vmatpush1.msra.mxu0 0.0
    %1051 = vmatprep.subr.mxu0 0.0
    %1052 = vmatpush1.msra.mxu0 0.0
    %1053 = vmatprep.subr.mxu0 0.0
    %1054 = vmatpush1.msra.mxu0 0.0
    %1055 = vmatprep.subr.mxu0 0.0
    %1056 = vmatpush1.msra.mxu0 0.0
    %1057 = vmatprep.subr.mxu0 0.0
    %1058 = vmatpush1.msra.mxu0 0.0
    %1059 = vmatprep.subr.mxu0 0.0
    %1060 = vmatpush1.msra.mxu0 0.0
    %1061 = vmatprep.subr.mxu0 0.0
    %1062 = vmatpush1.msra.mxu0 0.0
    %1063 = vmatprep.subr.mxu0 0.0
    %1064 = vmatpush1.msra.mxu0 0.0
    %1065 = vmatprep.subr.mxu0 0.0
    %1066 = vmatpush1.msra.mxu0 0.0
    %1067 = vmatprep.subr.mxu0 0.0
    %1068 = vmatpush1.msra.mxu0 0.0
    %1069 = vmatprep.subr.mxu0 0.0
    %1070 = vmatpush1.msra.mxu0 0.0
    %1071 = vmatprep.subr.mxu0 0.0
    %1072 = vmatpush1.msra.mxu0 0.0
    %1073 = vmatprep.subr.mxu0 0.0
    %1074 = vmatpush1.msra.mxu0 0.0
    %1075 = vmatprep.subr.mxu0 0.0
    %1076 = vmatpush1.msra.mxu0 0.0
    %1077 = vmatprep.subr.mxu0 0.0
    %1078 = vmatpush1.msra.mxu0 0.0
    %1079 = vmatprep.subr.mxu0 0.0
    %1080 = vmatpush1.msra.mxu0 0.0
    %1081 = vmatprep.subr.mxu0 0.0
    %1082 = vmatpush1.msra.mxu0 0.0
    %1083 = vmatprep.subr.mxu0 0.0
    %1084 = vmatpush1.msra.mxu0 0.0
    %1085 = vmatprep.mubr.f32.mxu0 0.0
    %1086 = vmatmul.mubr.f32.gmra.mrb[0].mxu0 %v716
    %v1087 = vpop.f32.mrb[0].mxu0
    %v1088 = vadd.f32 0.0, %v1087
    %v1089 = vpop.f32.mrb[0].mxu0
    %1090 = vmatprep.mubr.f32.mxu0 0.0
    %1091 = vmatmul.mubr.f32.gmra.mrb[0].mxu0 %v719
    %v1092 = vpop.f32.mrb[0].mxu0
    %v1093 = vadd.f32 0.0, %v1092
    %v1094 = vpop.f32.mrb[0].mxu0
    %1095 = vdwg.mxu0
    %1096 = vmatprep.subr.mxu0 0.0
    %1097 = vmatpush1.msra.mxu0 %v703
    %1098 = vmatprep.subr.mxu0 0.0
    %1099 = vmatpush1.msra.mxu0 %v704
    %1100 = vmatprep.subr.mxu0 0.0
    %1101 = vmatpush1.msra.mxu0 %v705
    %1102 = vmatprep.subr.mxu0 0.0
    %1103 = vmatpush1.msra.mxu0 %v706
    %1104 = vmatprep.subr.mxu0 0.0
    %1105 = vmatpush1.msra.mxu0 0.0
    %1106 = vmatprep.subr.mxu0 0.0
    %1107 = vmatpush1.msra.mxu0 0.0
    %1108 = vmatprep.subr.mxu0 0.0
    %1109 = vmatpush1.msra.mxu0 0.0
    %1110 = vmatprep.subr.mxu0 0.0
    %1111 = vmatpush1.msra.mxu0 0.0
    %1112 = vmatprep.subr.mxu0 0.0
    %1113 = vmatpush1.msra.mxu0 0.0
    %1114 = vmatprep.subr.mxu0 0.0
    %1115 = vmatpush1.msra.mxu0 0.0
    %1116 = vmatprep.subr.mxu0 0.0
    %1117 = vmatpush1.msra.mxu0 0.0
    %1118 = vmatprep.subr.mxu0 0.0
    %1119 = vmatpush1.msra.mxu0 0.0
    %1120 = vmatprep.subr.mxu0 0.0
    %1121 = vmatpush1.msra.mxu0 0.0
    %1122 = vmatprep.subr.mxu0 0.0
    %1123 = vmatpush1.msra.mxu0 0.0
    %1124 = vmatprep.subr.mxu0 0.0
    %1125 = vmatpush1.msra.mxu0 0.0
    %1126 = vmatprep.subr.mxu0 0.0
    %1127 = vmatpush1.msra.mxu0 0.0
    %1128 = vmatprep.subr.mxu0 0.0
    %1129 = vmatpush1.msra.mxu0 0.0
    %1130 = vmatprep.subr.mxu0 0.0
    %1131 = vmatpush1.msra.mxu0 0.0
    %1132 = vmatprep.subr.mxu0 0.0
    %1133 = vmatpush1.msra.mxu0 0.0
    %1134 = vmatprep.subr.mxu0 0.0
    %1135 = vmatpush1.msra.mxu0 0.0
    %1136 = vmatprep.subr.mxu0 0.0
    %1137 = vmatpush1.msra.mxu0 0.0
    %1138 = vmatprep.subr.mxu0 0.0
    %1139 = vmatpush1.msra.mxu0 0.0
    %1140 = vmatprep.subr.mxu0 0.0
    %1141 = vmatpush1.msra.mxu0 0.0
    %1142 = vmatprep.subr.mxu0 0.0
    %1143 = vmatpush1.msra.mxu0 0.0
    %1144 = vmatprep.subr.mxu0 0.0
    %1145 = vmatpush1.msra.mxu0 0.0
    %1146 = vmatprep.subr.mxu0 0.0
    %1147 = vmatpush1.msra.mxu0 0.0
    %1148 = vmatprep.subr.mxu0 0.0
    %1149 = vmatpush1.msra.mxu0 0.0
    %1150 = vmatprep.subr.mxu0 0.0
    %1151 = vmatpush1.msra.mxu0 0.0
    %1152 = vmatprep.subr.mxu0 0.0
    %1153 = vmatpush1.msra.mxu0 0.0
    %1154 = vmatprep.subr.mxu0 0.0
    %1155 = vmatpush1.msra.mxu0 0.0
    %1156 = vmatprep.subr.mxu0 0.0
    %1157 = vmatpush1.msra.mxu0 0.0
    %1158 = vmatprep.subr.mxu0 0.0
    %1159 = vmatpush1.msra.mxu0 0.0
    %1160 = vmatprep.mubr.f32.mxu0 0.0
    %1161 = vmatmul.mubr.f32.gmra.mrb[0].mxu0 %v716
    %v1162 = vpop.f32.mrb[0].mxu0
    %v1163 = vadd.f32 0.0, %v1162
    %v1164 = vpop.f32.mrb[0].mxu0
    %1165 = vmatprep.mubr.f32.mxu0 0.0
    %1166 = vmatmul.mubr.f32.gmra.mrb[0].mxu0 %v719
    %v1167 = vpop.f32.mrb[0].mxu0
    %v1168 = vadd.f32 0.0, %v1167
    %v1169 = vpop.f32.mrb[0].mxu0
    %1170 = vdwg.mxu0
    %1171 = vmatprep.subr.mxu0 0.0
    %1172 = vmatpush1.msra.mxu0 %v707
    %1173 = vmatprep.subr.mxu0 0.0
    %1174 = vmatpush1.msra.mxu0 %v708
    %1175 = vmatprep.subr.mxu0 0.0
    %1176 = vmatpush1.msra.mxu0 %v709
    %1177 = vmatprep.subr.mxu0 0.0
    %1178 = vmatpush1.msra.mxu0 %v710
    %1179 = vmatprep.subr.mxu0 0.0
    %1180 = vmatpush1.msra.mxu0 0.0
    %1181 = vmatprep.subr.mxu0 0.0
    %1182 = vmatpush1.msra.mxu0 0.0
    %1183 = vmatprep.subr.mxu0 0.0
    %1184 = vmatpush1.msra.mxu0 0.0
    %1185 = vmatprep.subr.mxu0 0.0
    %1186 = vmatpush1.msra.mxu0 0.0
    %1187 = vmatprep.subr.mxu0 0.0
    %1188 = vmatpush1.msra.mxu0 0.0
    %1189 = vmatprep.subr.mxu0 0.0
    %1190 = vmatpush1.msra.mxu0 0.0
    %1191 = vmatprep.subr.mxu0 0.0
    %1192 = vmatpush1.msra.mxu0 0.0
    %1193 = vmatprep.subr.mxu0 0.0
    %1194 = vmatpush1.msra.mxu0 0.0
    %1195 = vmatprep.subr.mxu0 0.0
    %1196 = vmatpush1.msra.mxu0 0.0
    %1197 = vmatprep.subr.mxu0 0.0
    %1198 = vmatpush1.msra.mxu0 0.0
    %1199 = vmatprep.subr.mxu0 0.0
    %1200 = vmatpush1.msra.mxu0 0.0
    %1201 = vmatprep.subr.mxu0 0.0
    %1202 = vmatpush1.msra.mxu0 0.0
    %1203 = vmatprep.subr.mxu0 0.0
    %1204 = vmatpush1.msra.mxu0 0.0
    %1205 = vmatprep.subr.mxu0 0.0
    %1206 = vmatpush1.msra.mxu0 0.0
    %1207 = vmatprep.subr.mxu0 0.0
    %1208 = vmatpush1.msra.mxu0 0.0
    %1209 = vmatprep.subr.mxu0 0.0
    %1210 = vmatpush1.msra.mxu0 0.0
    %1211 = vmatprep.subr.mxu0 0.0
    %1212 = vmatpush1.msra.mxu0 0.0
    %1213 = vmatprep.subr.mxu0 0.0
    %1214 = vmatpush1.msra.mxu0 0.0
    %1215 = vmatprep.subr.mxu0 0.0
    %1216 = vmatpush1.msra.mxu0 0.0
    %1217 = vmatprep.subr.mxu0 0.0
    %1218 = vmatpush1.msra.mxu0 0.0
    %1219 = vmatprep.subr.mxu0 0.0
    %1220 = vmatpush1.msra.mxu0 0.0
    %1221 = vmatprep.subr.mxu0 0.0
    %1222 = vmatpush1.msra.mxu0 0.0
    %1223 = vmatprep.subr.mxu0 0.0
    %1224 = vmatpush1.msra.mxu0 0.0
    %1225 = vmatprep.subr.mxu0 0.0
    %1226 = vmatpush1.msra.mxu0 0.0
    %1227 = vmatprep.subr.mxu0 0.0
    %1228 = vmatpush1.msra.mxu0 0.0
    %1229 = vmatprep.subr.mxu0 0.0
    %1230 = vmatpush1.msra.mxu0 0.0
    %1231 = vmatprep.subr.mxu0 0.0
    %1232 = vmatpush1.msra.mxu0 0.0
    %1233 = vmatprep.subr.mxu0 0.0
    %1234 = vmatpush1.msra.mxu0 0.0
    %1235 = vmatprep.mubr.f32.mxu0 0.0
    %1236 = vmatmul.mubr.f32.gmra.mrb[0].mxu0 %v716
    %v1237 = vpop.f32.mrb[0].mxu0
    %v1238 = vadd.f32 0.0, %v1237
    %v1239 = vpop.f32.mrb[0].mxu0
    %1240 = vmatprep.mubr.f32.mxu0 0.0
    %1241 = vmatmul.mubr.f32.gmra.mrb[0].mxu0 %v719
    %v1242 = vpop.f32.mrb[0].mxu0
    %v1243 = vadd.f32 0.0, %v1242
    %v1244 = vpop.f32.mrb[0].mxu0
    %1245 = vdwg.mxu0
    %1246 = vmatprep.subr.mxu0 0.0
    %1247 = vmatpush1.msra.mxu0 %v711
    %1248 = vmatprep.subr.mxu0 0.0
    %1249 = vmatpush1.msra.mxu0 %v712
    %1250 = vmatprep.subr.mxu0 0.0
    %1251 = vmatpush1.msra.mxu0 %v713
    %1252 = vmatprep.subr.mxu0 0.0
    %1253 = vmatpush1.msra.mxu0 %v714
    %1254 = vmatprep.subr.mxu0 0.0
    %1255 = vmatpush1.msra.mxu0 0.0
    %1256 = vmatprep.subr.mxu0 0.0
    %1257 = vmatpush1.msra.mxu0 0.0
    %1258 = vmatprep.subr.mxu0 0.0
    %1259 = vmatpush1.msra.mxu0 0.0
    %1260 = vmatprep.subr.mxu0 0.0
    %1261 = vmatpush1.msra.mxu0 0.0
    %1262 = vmatprep.subr.mxu0 0.0
    %1263 = vmatpush1.msra.mxu0 0.0
    %1264 = vmatprep.subr.mxu0 0.0
    %1265 = vmatpush1.msra.mxu0 0.0
    %1266 = vmatprep.subr.mxu0 0.0
    %1267 = vmatpush1.msra.mxu0 0.0
    %1268 = vmatprep.subr.mxu0 0.0
    %1269 = vmatpush1.msra.mxu0 0.0
    %1270 = vmatprep.subr.mxu0 0.0
    %1271 = vmatpush1.msra.mxu0 0.0
    %1272 = vmatprep.subr.mxu0 0.0
    %1273 = vmatpush1.msra.mxu0 0.0
    %1274 = vmatprep.subr.mxu0 0.0
    %1275 = vmatpush1.msra.mxu0 0.0
    %1276 = vmatprep.subr.mxu0 0.0
    %1277 = vmatpush1.msra.mxu0 0.0
    %1278 = vmatprep.subr.mxu0 0.0
    %1279 = vmatpush1.msra.mxu0 0.0
    %1280 = vmatprep.subr.mxu0 0.0
    %1281 = vmatpush1.msra.mxu0 0.0
    %1282 = vmatprep.subr.mxu0 0.0
    %1283 = vmatpush1.msra.mxu0 0.0
    %1284 = vmatprep.subr.mxu0 0.0
    %1285 = vmatpush1.msra.mxu0 0.0
    %1286 = vmatprep.subr.mxu0 0.0
    %1287 = vmatpush1.msra.mxu0 0.0
    %1288 = vmatprep.subr.mxu0 0.0
    %1289 = vmatpush1.msra.mxu0 0.0
    %1290 = vmatprep.subr.mxu0 0.0
    %1291 = vmatpush1.msra.mxu0 0.0
    %1292 = vmatprep.subr.mxu0 0.0
    %1293 = vmatpush1.msra.mxu0 0.0
    %1294 = vmatprep.subr.mxu0 0.0
    %1295 = vmatpush1.msra.mxu0 0.0
    %1296 = vmatprep.subr.mxu0 0.0
    %1297 = vmatpush1.msra.mxu0 0.0
    %1298 = vmatprep.subr.mxu0 0.0
    %1299 = vmatpush1.msra.mxu0 0.0
    %1300 = vmatprep.subr.mxu0 0.0
    %1301 = vmatpush1.msra.mxu0 0.0
    %1302 = vmatprep.subr.mxu0 0.0
    %1303 = vmatpush1.msra.mxu0 0.0
    %1304 = vmatprep.subr.mxu0 0.0
    %1305 = vmatpush1.msra.mxu0 0.0
    %1306 = vmatprep.subr.mxu0 0.0
    %1307 = vmatpush1.msra.mxu0 0.0
    %1308 = vmatprep.subr.mxu0 0.0
    %1309 = vmatpush1.msra.mxu0 0.0
    %1310 = vmatprep.mubr.f32.mxu0 0.0
    %1311 = vmatmul.mubr.f32.gmra.mrb[0].mxu0 %v716
    %v1312 = vpop.f32.mrb[0].mxu0
    %v1313 = vadd.f32 0.0, %v1312
    %v1314 = vpop.f32.mrb[0].mxu0
    %1315 = vmatprep.mubr.f32.mxu0 0.0
    %1316 = vmatmul.mubr.f32.gmra.mrb[0].mxu0 %v719
    %v1317 = vpop.f32.mrb[0].mxu0
    %v1318 = vadd.f32 0.0, %v1317
    %v1319 = vpop.f32.mrb[0].mxu0
    %1320 = vdwg.mxu0
    %v1321 = vld [vmem:[%s6] sm:$0xff]
    %v1322 = vld [vmem:[%s6 + $0x8] sm:$0xff]
    %v1323 = vld [vmem:[%s6 + $0x10] sm:$0xff]
    %v1324 = vld [vmem:[%s6 + $0x18] sm:$0xff]
    %v1325 = vld [vmem:[%s6 + $0x20] sm:$0xff]
    %v1326 = vld [vmem:[%s6 + $0x28] sm:$0xff]
    %v1327 = vld [vmem:[%s6 + $0x30] sm:$0xff]
    %v1328 = vld [vmem:[%s6 + $0x38] sm:$0xff]
    %v1329 = vld [vmem:[%s6 + $0x40] sm:$0xff]
    %v1330 = vld [vmem:[%s6 + $0x48] sm:$0xff]
    %v1331 = vld [vmem:[%s6 + $0x50] sm:$0xff]
    %v1332 = vld [vmem:[%s6 + $0x58] sm:$0xff]
    %v1333 = vld [vmem:[%s6 + $0x60] sm:$0xff]
    %v1334 = vld [vmem:[%s6 + $0x68] sm:$0xff]
    %v1335 = vld [vmem:[%s6 + $0x70] sm:$0xff]
    %v1336 = vld [vmem:[%s6 + $0x78] sm:$0xff]
    %v1337 = vld [vmem:[%s6 + $0x80] sm:$0xff]
    %v1338 = vld [vmem:[%s6 + $0x88] sm:$0xff]
    %v1339 = vld [vmem:[%s6 + $0x90] sm:$0xff]
    %v1340 = vld [vmem:[%s6 + $0x98] sm:$0xff]
    %v1341 = vld [vmem:[%s6 + $0xa0] sm:$0xff]
    %v1342 = vld [vmem:[%s6 + $0xa8] sm:$0xff]
    %v1343 = vld [vmem:[%s6 + $0xb0] sm:$0xff]
    %v1344 = vld [vmem:[%s6 + $0xb8] sm:$0xff]
    %v1345 = vld [vmem:[%s6 + $0xc0] sm:$0xff]
    %v1346 = vld [vmem:[%s6 + $0xc8] sm:$0xff]
    %v1347 = vld [vmem:[%s6 + $0xd0] sm:$0xff]
    %v1348 = vld [vmem:[%s6 + $0xd8] sm:$0xff]
    %v1349 = vld [vmem:[%s6 + $0xe0] sm:$0xff]
    %v1350 = vld [vmem:[%s6 + $0xe8] sm:$0xff]
    %v1351 = vld [vmem:[%s6 + $0xf0] sm:$0xff]
    %v1352 = vld [vmem:[%s6 + $0xf8] sm:$0xff]
    %v1354 = vsel %vm76, %v42, 0
    %v1357 = vsel %vm76, %v43, 0
    %1359 = vmatprep.subr.mxu0 0.0
    %1360 = vmatpush1.msra.mxu0 %v1321
    %1361 = vmatprep.subr.mxu0 0.0
    %1362 = vmatpush1.msra.mxu0 %v1322
    %1363 = vmatprep.subr.mxu0 0.0
    %1364 = vmatpush1.msra.mxu0 %v1323
    %1365 = vmatprep.subr.mxu0 0.0
    %1366 = vmatpush1.msra.mxu0 %v1324
    %1367 = vmatprep.subr.mxu0 0.0
    %1368 = vmatpush1.msra.mxu0 0.0
    %1369 = vmatprep.subr.mxu0 0.0
    %1370 = vmatpush1.msra.mxu0 0.0
    %1371 = vmatprep.subr.mxu0 0.0
    %1372 = vmatpush1.msra.mxu0 0.0
    %1373 = vmatprep.subr.mxu0 0.0
    %1374 = vmatpush1.msra.mxu0 0.0
    %1375 = vmatprep.subr.mxu0 0.0
    %1376 = vmatpush1.msra.mxu0 0.0
    %1377 = vmatprep.subr.mxu0 0.0
    %1378 = vmatpush1.msra.mxu0 0.0
    %1379 = vmatprep.subr.mxu0 0.0
    %1380 = vmatpush1.msra.mxu0 0.0
    %1381 = vmatprep.subr.mxu0 0.0
    %1382 = vmatpush1.msra.mxu0 0.0
    %1383 = vmatprep.subr.mxu0 0.0
    %1384 = vmatpush1.msra.mxu0 0.0
    %1385 = vmatprep.subr.mxu0 0.0
    %1386 = vmatpush1.msra.mxu0 0.0
    %1387 = vmatprep.subr.mxu0 0.0
    %1388 = vmatpush1.msra.mxu0 0.0
    %1389 = vmatprep.subr.mxu0 0.0
    %1390 = vmatpush1.msra.mxu0 0.0
    %1391 = vmatprep.subr.mxu0 0.0
    %1392 = vmatpush1.msra.mxu0 0.0
    %1393 = vmatprep.subr.mxu0 0.0
    %1394 = vmatpush1.msra.mxu0 0.0
    %1395 = vmatprep.subr.mxu0 0.0
    %1396 = vmatpush1.msra.mxu0 0.0
    %1397 = vmatprep.subr.mxu0 0.0
    %1398 = vmatpush1.msra.mxu0 0.0
    %1399 = vmatprep.subr.mxu0 0.0
    %1400 = vmatpush1.msra.mxu0 0.0
    %1401 = vmatprep.subr.mxu0 0.0
    %1402 = vmatpush1.msra.mxu0 0.0
    %1403 = vmatprep.subr.mxu0 0.0
    %1404 = vmatpush1.msra.mxu0 0.0
    %1405 = vmatprep.subr.mxu0 0.0
    %1406 = vmatpush1.msra.mxu0 0.0
    %1407 = vmatprep.subr.mxu0 0.0
    %1408 = vmatpush1.msra.mxu0 0.0
    %1409 = vmatprep.subr.mxu0 0.0
    %1410 = vmatpush1.msra.mxu0 0.0
    %1411 = vmatprep.subr.mxu0 0.0
    %1412 = vmatpush1.msra.mxu0 0.0
    %1413 = vmatprep.subr.mxu0 0.0
    %1414 = vmatpush1.msra.mxu0 0.0
    %1415 = vmatprep.subr.mxu0 0.0
    %1416 = vmatpush1.msra.mxu0 0.0
    %1417 = vmatprep.subr.mxu0 0.0
    %1418 = vmatpush1.msra.mxu0 0.0
    %1419 = vmatprep.subr.mxu0 0.0
    %1420 = vmatpush1.msra.mxu0 0.0
    %1421 = vmatprep.subr.mxu0 0.0
    %1422 = vmatpush1.msra.mxu0 0.0
    %1423 = vmatprep.mubr.f32.mxu0 0.0
    %1424 = vmatmul.mubr.f32.gmra.mrb[0].mxu0 %v1354
    %v1425 = vpop.f32.mrb[0].mxu0
    %v1426 = vadd.f32 0.0, %v1425
    %v1427 = vpop.f32.mrb[0].mxu0
    %1428 = vmatprep.mubr.f32.mxu0 0.0
    %1429 = vmatmul.mubr.f32.gmra.mrb[0].mxu0 %v1357
    %v1430 = vpop.f32.mrb[0].mxu0
    %v1431 = vadd.f32 0.0, %v1430
    %v1432 = vpop.f32.mrb[0].mxu0
    %1433 = vdwg.mxu0
    %1434 = vmatprep.subr.mxu0 0.0
    %1435 = vmatpush1.msra.mxu0 %v1325
    %1436 = vmatprep.subr.mxu0 0.0
    %1437 = vmatpush1.msra.mxu0 %v1326
    %1438 = vmatprep.subr.mxu0 0.0
    %1439 = vmatpush1.msra.mxu0 %v1327
    %1440 = vmatprep.subr.mxu0 0.0
    %1441 = vmatpush1.msra.mxu0 %v1328
    %1442 = vmatprep.subr.mxu0 0.0
    %1443 = vmatpush1.msra.mxu0 0.0
    %1444 = vmatprep.subr.mxu0 0.0
    %1445 = vmatpush1.msra.mxu0 0.0
    %1446 = vmatprep.subr.mxu0 0.0
    %1447 = vmatpush1.msra.mxu0 0.0
    %1448 = vmatprep.subr.mxu0 0.0
    %1449 = vmatpush1.msra.mxu0 0.0
    %1450 = vmatprep.subr.mxu0 0.0
    %1451 = vmatpush1.msra.mxu0 0.0
    %1452 = vmatprep.subr.mxu0 0.0
    %1453 = vmatpush1.msra.mxu0 0.0
    %1454 = vmatprep.subr.mxu0 0.0
    %1455 = vmatpush1.msra.mxu0 0.0
    %1456 = vmatprep.subr.mxu0 0.0
    %1457 = vmatpush1.msra.mxu0 0.0
    %1458 = vmatprep.subr.mxu0 0.0
    %1459 = vmatpush1.msra.mxu0 0.0
    %1460 = vmatprep.subr.mxu0 0.0
    %1461 = vmatpush1.msra.mxu0 0.0
    %1462 = vmatprep.subr.mxu0 0.0
    %1463 = vmatpush1.msra.mxu0 0.0
    %1464 = vmatprep.subr.mxu0 0.0
    %1465 = vmatpush1.msra.mxu0 0.0
    %1466 = vmatprep.subr.mxu0 0.0
    %1467 = vmatpush1.msra.mxu0 0.0
    %1468 = vmatprep.subr.mxu0 0.0
    %1469 = vmatpush1.msra.mxu0 0.0
    %1470 = vmatprep.subr.mxu0 0.0
    %1471 = vmatpush1.msra.mxu0 0.0
    %1472 = vmatprep.subr.mxu0 0.0
    %1473 = vmatpush1.msra.mxu0 0.0
    %1474 = vmatprep.subr.mxu0 0.0
    %1475 = vmatpush1.msra.mxu0 0.0
    %1476 = vmatprep.subr.mxu0 0.0
    %1477 = vmatpush1.msra.mxu0 0.0
    %1478 = vmatprep.subr.mxu0 0.0
    %1479 = vmatpush1.msra.mxu0 0.0
    %1480 = vmatprep.subr.mxu0 0.0
    %1481 = vmatpush1.msra.mxu0 0.0
    %1482 = vmatprep.subr.mxu0 0.0
    %1483 = vmatpush1.msra.mxu0 0.0
    %1484 = vmatprep.subr.mxu0 0.0
    %1485 = vmatpush1.msra.mxu0 0.0
    %1486 = vmatprep.subr.mxu0 0.0
    %1487 = vmatpush1.msra.mxu0 0.0
    %1488 = vmatprep.subr.mxu0 0.0
    %1489 = vmatpush1.msra.mxu0 0.0
    %1490 = vmatprep.subr.mxu0 0.0
    %1491 = vmatpush1.msra.mxu0 0.0
    %1492 = vmatprep.subr.mxu0 0.0
    %1493 = vmatpush1.msra.mxu0 0.0
    %1494 = vmatprep.subr.mxu0 0.0
    %1495 = vmatpush1.msra.mxu0 0.0
    %1496 = vmatprep.subr.mxu0 0.0
    %1497 = vmatpush1.msra.mxu0 0.0
    %1498 = vmatprep.mubr.f32.mxu0 0.0
    %1499 = vmatmul.mubr.f32.gmra.mrb[0].mxu0 %v1354
    %v1500 = vpop.f32.mrb[0].mxu0
    %v1501 = vadd.f32 0.0, %v1500
    %v1502 = vpop.f32.mrb[0].mxu0
    %1503 = vmatprep.mubr.f32.mxu0 0.0
    %1504 = vmatmul.mubr.f32.gmra.mrb[0].mxu0 %v1357
    %v1505 = vpop.f32.mrb[0].mxu0
    %v1506 = vadd.f32 0.0, %v1505
    %v1507 = vpop.f32.mrb[0].mxu0
    %1508 = vdwg.mxu0
    %1509 = vmatprep.subr.mxu0 0.0
    %1510 = vmatpush1.msra.mxu0 %v1329
    %1511 = vmatprep.subr.mxu0 0.0
    %1512 = vmatpush1.msra.mxu0 %v1330
    %1513 = vmatprep.subr.mxu0 0.0
    %1514 = vmatpush1.msra.mxu0 %v1331
    %1515 = vmatprep.subr.mxu0 0.0
    %1516 = vmatpush1.msra.mxu0 %v1332
    %1517 = vmatprep.subr.mxu0 0.0
    %1518 = vmatpush1.msra.mxu0 0.0
    %1519 = vmatprep.subr.mxu0 0.0
    %1520 = vmatpush1.msra.mxu0 0.0
    %1521 = vmatprep.subr.mxu0 0.0
    %1522 = vmatpush1.msra.mxu0 0.0
    %1523 = vmatprep.subr.mxu0 0.0
    %1524 = vmatpush1.msra.mxu0 0.0
    %1525 = vmatprep.subr.mxu0 0.0
    %1526 = vmatpush1.msra.mxu0 0.0
    %1527 = vmatprep.subr.mxu0 0.0
    %1528 = vmatpush1.msra.mxu0 0.0
    %1529 = vmatprep.subr.mxu0 0.0
    %1530 = vmatpush1.msra.mxu0 0.0
    %1531 = vmatprep.subr.mxu0 0.0
    %1532 = vmatpush1.msra.mxu0 0.0
    %1533 = vmatprep.subr.mxu0 0.0
    %1534 = vmatpush1.msra.mxu0 0.0
    %1535 = vmatprep.subr.mxu0 0.0
    %1536 = vmatpush1.msra.mxu0 0.0
    %1537 = vmatprep.subr.mxu0 0.0
    %1538 = vmatpush1.msra.mxu0 0.0
    %1539 = vmatprep.subr.mxu0 0.0
    %1540 = vmatpush1.msra.mxu0 0.0
    %1541 = vmatprep.subr.mxu0 0.0
    %1542 = vmatpush1.msra.mxu0 0.0
    %1543 = vmatprep.subr.mxu0 0.0
    %1544 = vmatpush1.msra.mxu0 0.0
    %1545 = vmatprep.subr.mxu0 0.0
    %1546 = vmatpush1.msra.mxu0 0.0
    %1547 = vmatprep.subr.mxu0 0.0
    %1548 = vmatpush1.msra.mxu0 0.0
    %1549 = vmatprep.subr.mxu0 0.0
    %1550 = vmatpush1.msra.mxu0 0.0
    %1551 = vmatprep.subr.mxu0 0.0
    %1552 = vmatpush1.msra.mxu0 0.0
    %1553 = vmatprep.subr.mxu0 0.0
    %1554 = vmatpush1.msra.mxu0 0.0
    %1555 = vmatprep.subr.mxu0 0.0
    %1556 = vmatpush1.msra.mxu0 0.0
    %1557 = vmatprep.subr.mxu0 0.0
    %1558 = vmatpush1.msra.mxu0 0.0
    %1559 = vmatprep.subr.mxu0 0.0
    %1560 = vmatpush1.msra.mxu0 0.0
    %1561 = vmatprep.subr.mxu0 0.0
    %1562 = vmatpush1.msra.mxu0 0.0
    %1563 = vmatprep.subr.mxu0 0.0
    %1564 = vmatpush1.msra.mxu0 0.0
    %1565 = vmatprep.subr.mxu0 0.0
    %1566 = vmatpush1.msra.mxu0 0.0
    %1567 = vmatprep.subr.mxu0 0.0
    %1568 = vmatpush1.msra.mxu0 0.0
    %1569 = vmatprep.subr.mxu0 0.0
    %1570 = vmatpush1.msra.mxu0 0.0
    %1571 = vmatprep.subr.mxu0 0.0
    %1572 = vmatpush1.msra.mxu0 0.0
    %1573 = vmatprep.mubr.f32.mxu0 0.0
    %1574 = vmatmul.mubr.f32.gmra.mrb[0].mxu0 %v1354
    %v1575 = vpop.f32.mrb[0].mxu0
    %v1576 = vadd.f32 0.0, %v1575
    %v1577 = vpop.f32.mrb[0].mxu0
    %1578 = vmatprep.mubr.f32.mxu0 0.0
    %1579 = vmatmul.mubr.f32.gmra.mrb[0].mxu0 %v1357
    %v1580 = vpop.f32.mrb[0].mxu0
    %v1581 = vadd.f32 0.0, %v1580
    %v1582 = vpop.f32.mrb[0].mxu0
    %1583 = vdwg.mxu0
    %1584 = vmatprep.subr.mxu0 0.0
    %1585 = vmatpush1.msra.mxu0 %v1333
    %1586 = vmatprep.subr.mxu0 0.0
    %1587 = vmatpush1.msra.mxu0 %v1334
    %1588 = vmatprep.subr.mxu0 0.0
    %1589 = vmatpush1.msra.mxu0 %v1335
    %1590 = vmatprep.subr.mxu0 0.0
    %1591 = vmatpush1.msra.mxu0 %v1336
    %1592 = vmatprep.subr.mxu0 0.0
    %1593 = vmatpush1.msra.mxu0 0.0
    %1594 = vmatprep.subr.mxu0 0.0
    %1595 = vmatpush1.msra.mxu0 0.0
    %1596 = vmatprep.subr.mxu0 0.0
    %1597 = vmatpush1.msra.mxu0 0.0
    %1598 = vmatprep.subr.mxu0 0.0
    %1599 = vmatpush1.msra.mxu0 0.0
    %1600 = vmatprep.subr.mxu0 0.0
    %1601 = vmatpush1.msra.mxu0 0.0
    %1602 = vmatprep.subr.mxu0 0.0
    %1603 = vmatpush1.msra.mxu0 0.0
    %1604 = vmatprep.subr.mxu0 0.0
    %1605 = vmatpush1.msra.mxu0 0.0
    %1606 = vmatprep.subr.mxu0 0.0
    %1607 = vmatpush1.msra.mxu0 0.0
    %1608 = vmatprep.subr.mxu0 0.0
    %1609 = vmatpush1.msra.mxu0 0.0
    %1610 = vmatprep.subr.mxu0 0.0
    %1611 = vmatpush1.msra.mxu0 0.0
    %1612 = vmatprep.subr.mxu0 0.0
    %1613 = vmatpush1.msra.mxu0 0.0
    %1614 = vmatprep.subr.mxu0 0.0
    %1615 = vmatpush1.msra.mxu0 0.0
    %1616 = vmatprep.subr.mxu0 0.0
    %1617 = vmatpush1.msra.mxu0 0.0
    %1618 = vmatprep.subr.mxu0 0.0
    %1619 = vmatpush1.msra.mxu0 0.0
    %1620 = vmatprep.subr.mxu0 0.0
    %1621 = vmatpush1.msra.mxu0 0.0
    %1622 = vmatprep.subr.mxu0 0.0
    %1623 = vmatpush1.msra.mxu0 0.0
    %1624 = vmatprep.subr.mxu0 0.0
    %1625 = vmatpush1.msra.mxu0 0.0
    %1626 = vmatprep.subr.mxu0 0.0
    %1627 = vmatpush1.msra.mxu0 0.0
    %1628 = vmatprep.subr.mxu0 0.0
    %1629 = vmatpush1.msra.mxu0 0.0
    %1630 = vmatprep.subr.mxu0 0.0
    %1631 = vmatpush1.msra.mxu0 0.0
    %1632 = vmatprep.subr.mxu0 0.0
    %1633 = vmatpush1.msra.mxu0 0.0
    %1634 = vmatprep.subr.mxu0 0.0
    %1635 = vmatpush1.msra.mxu0 0.0
    %1636 = vmatprep.subr.mxu0 0.0
    %1637 = vmatpush1.msra.mxu0 0.0
    %1638 = vmatprep.subr.mxu0 0.0
    %1639 = vmatpush1.msra.mxu0 0.0
    %1640 = vmatprep.subr.mxu0 0.0
    %1641 = vmatpush1.msra.mxu0 0.0
    %1642 = vmatprep.subr.mxu0 0.0
    %1643 = vmatpush1.msra.mxu0 0.0
    %1644 = vmatprep.subr.mxu0 0.0
    %1645 = vmatpush1.msra.mxu0 0.0
    %1646 = vmatprep.subr.mxu0 0.0
    %1647 = vmatpush1.msra.mxu0 0.0
    %1648 = vmatprep.mubr.f32.mxu0 0.0
    %1649 = vmatmul.mubr.f32.gmra.mrb[0].mxu0 %v1354
    %v1650 = vpop.f32.mrb[0].mxu0
    %v1651 = vadd.f32 0.0, %v1650
    %v1652 = vpop.f32.mrb[0].mxu0
    %1653 = vmatprep.mubr.f32.mxu0 0.0
    %1654 = vmatmul.mubr.f32.gmra.mrb[0].mxu0 %v1357
    %v1655 = vpop.f32.mrb[0].mxu0
    %v1656 = vadd.f32 0.0, %v1655
    %v1657 = vpop.f32.mrb[0].mxu0
    %1658 = vdwg.mxu0
    %1659 = vmatprep.subr.mxu0 0.0
    %1660 = vmatpush1.msra.mxu0 %v1337
    %1661 = vmatprep.subr.mxu0 0.0
    %1662 = vmatpush1.msra.mxu0 %v1338
    %1663 = vmatprep.subr.mxu0 0.0
    %1664 = vmatpush1.msra.mxu0 %v1339
    %1665 = vmatprep.subr.mxu0 0.0
    %1666 = vmatpush1.msra.mxu0 %v1340
    %1667 = vmatprep.subr.mxu0 0.0
    %1668 = vmatpush1.msra.mxu0 0.0
    %1669 = vmatprep.subr.mxu0 0.0
    %1670 = vmatpush1.msra.mxu0 0.0
    %1671 = vmatprep.subr.mxu0 0.0
    %1672 = vmatpush1.msra.mxu0 0.0
    %1673 = vmatprep.subr.mxu0 0.0
    %1674 = vmatpush1.msra.mxu0 0.0
    %1675 = vmatprep.subr.mxu0 0.0
    %1676 = vmatpush1.msra.mxu0 0.0
    %1677 = vmatprep.subr.mxu0 0.0
    %1678 = vmatpush1.msra.mxu0 0.0
    %1679 = vmatprep.subr.mxu0 0.0
    %1680 = vmatpush1.msra.mxu0 0.0
    %1681 = vmatprep.subr.mxu0 0.0
    %1682 = vmatpush1.msra.mxu0 0.0
    %1683 = vmatprep.subr.mxu0 0.0
    %1684 = vmatpush1.msra.mxu0 0.0
    %1685 = vmatprep.subr.mxu0 0.0
    %1686 = vmatpush1.msra.mxu0 0.0
    %1687 = vmatprep.subr.mxu0 0.0
    %1688 = vmatpush1.msra.mxu0 0.0
    %1689 = vmatprep.subr.mxu0 0.0
    %1690 = vmatpush1.msra.mxu0 0.0
    %1691 = vmatprep.subr.mxu0 0.0
    %1692 = vmatpush1.msra.mxu0 0.0
    %1693 = vmatprep.subr.mxu0 0.0
    %1694 = vmatpush1.msra.mxu0 0.0
    %1695 = vmatprep.subr.mxu0 0.0
    %1696 = vmatpush1.msra.mxu0 0.0
    %1697 = vmatprep.subr.mxu0 0.0
    %1698 = vmatpush1.msra.mxu0 0.0
    %1699 = vmatprep.subr.mxu0 0.0
    %1700 = vmatpush1.msra.mxu0 0.0
    %1701 = vmatprep.subr.mxu0 0.0
    %1702 = vmatpush1.msra.mxu0 0.0
    %1703 = vmatprep.subr.mxu0 0.0
    %1704 = vmatpush1.msra.mxu0 0.0
    %1705 = vmatprep.subr.mxu0 0.0
    %1706 = vmatpush1.msra.mxu0 0.0
    %1707 = vmatprep.subr.mxu0 0.0
    %1708 = vmatpush1.msra.mxu0 0.0
    %1709 = vmatprep.subr.mxu0 0.0
    %1710 = vmatpush1.msra.mxu0 0.0
    %1711 = vmatprep.subr.mxu0 0.0
    %1712 = vmatpush1.msra.mxu0 0.0
    %1713 = vmatprep.subr.mxu0 0.0
    %1714 = vmatpush1.msra.mxu0 0.0
    %1715 = vmatprep.subr.mxu0 0.0
    %1716 = vmatpush1.msra.mxu0 0.0
    %1717 = vmatprep.subr.mxu0 0.0
    %1718 = vmatpush1.msra.mxu0 0.0
    %1719 = vmatprep.subr.mxu0 0.0
    %1720 = vmatpush1.msra.mxu0 0.0
    %1721 = vmatprep.subr.mxu0 0.0
    %1722 = vmatpush1.msra.mxu0 0.0
    %1723 = vmatprep.mubr.f32.mxu0 0.0
    %1724 = vmatmul.mubr.f32.gmra.mrb[0].mxu0 %v1354
    %v1725 = vpop.f32.mrb[0].mxu0
    %v1726 = vadd.f32 0.0, %v1725
    %v1727 = vpop.f32.mrb[0].mxu0
    %1728 = vmatprep.mubr.f32.mxu0 0.0
    %1729 = vmatmul.mubr.f32.gmra.mrb[0].mxu0 %v1357
    %v1730 = vpop.f32.mrb[0].mxu0
    %v1731 = vadd.f32 0.0, %v1730
    %v1732 = vpop.f32.mrb[0].mxu0
    %1733 = vdwg.mxu0
    %1734 = vmatprep.subr.mxu0 0.0
    %1735 = vmatpush1.msra.mxu0 %v1341
    %1736 = vmatprep.subr.mxu0 0.0
    %1737 = vmatpush1.msra.mxu0 %v1342
    %1738 = vmatprep.subr.mxu0 0.0
    %1739 = vmatpush1.msra.mxu0 %v1343
    %1740 = vmatprep.subr.mxu0 0.0
    %1741 = vmatpush1.msra.mxu0 %v1344
    %1742 = vmatprep.subr.mxu0 0.0
    %1743 = vmatpush1.msra.mxu0 0.0
    %1744 = vmatprep.subr.mxu0 0.0
    %1745 = vmatpush1.msra.mxu0 0.0
    %1746 = vmatprep.subr.mxu0 0.0
    %1747 = vmatpush1.msra.mxu0 0.0
    %1748 = vmatprep.subr.mxu0 0.0
    %1749 = vmatpush1.msra.mxu0 0.0
    %1750 = vmatprep.subr.mxu0 0.0
    %1751 = vmatpush1.msra.mxu0 0.0
    %1752 = vmatprep.subr.mxu0 0.0
    %1753 = vmatpush1.msra.mxu0 0.0
    %1754 = vmatprep.subr.mxu0 0.0
    %1755 = vmatpush1.msra.mxu0 0.0
    %1756 = vmatprep.subr.mxu0 0.0
    %1757 = vmatpush1.msra.mxu0 0.0
    %1758 = vmatprep.subr.mxu0 0.0
    %1759 = vmatpush1.msra.mxu0 0.0
    %1760 = vmatprep.subr.mxu0 0.0
    %1761 = vmatpush1.msra.mxu0 0.0
    %1762 = vmatprep.subr.mxu0 0.0
    %1763 = vmatpush1.msra.mxu0 0.0
    %1764 = vmatprep.subr.mxu0 0.0
    %1765 = vmatpush1.msra.mxu0 0.0
    %1766 = vmatprep.subr.mxu0 0.0
    %1767 = vmatpush1.msra.mxu0 0.0
    %1768 = vmatprep.subr.mxu0 0.0
    %1769 = vmatpush1.msra.mxu0 0.0
    %1770 = vmatprep.subr.mxu0 0.0
    %1771 = vmatpush1.msra.mxu0 0.0
    %1772 = vmatprep.subr.mxu0 0.0
    %1773 = vmatpush1.msra.mxu0 0.0
    %1774 = vmatprep.subr.mxu0 0.0
    %1775 = vmatpush1.msra.mxu0 0.0
    %1776 = vmatprep.subr.mxu0 0.0
    %1777 = vmatpush1.msra.mxu0 0.0
    %1778 = vmatprep.subr.mxu0 0.0
    %1779 = vmatpush1.msra.mxu0 0.0
    %1780 = vmatprep.subr.mxu0 0.0
    %1781 = vmatpush1.msra.mxu0 0.0
    %1782 = vmatprep.subr.mxu0 0.0
    %1783 = vmatpush1.msra.mxu0 0.0
    %1784 = vmatprep.subr.mxu0 0.0
    %1785 = vmatpush1.msra.mxu0 0.0
    %1786 = vmatprep.subr.mxu0 0.0
    %1787 = vmatpush1.msra.mxu0 0.0
    %1788 = vmatprep.subr.mxu0 0.0
    %1789 = vmatpush1.msra.mxu0 0.0
    %1790 = vmatprep.subr.mxu0 0.0
    %1791 = vmatpush1.msra.mxu0 0.0
    %1792 = vmatprep.subr.mxu0 0.0
    %1793 = vmatpush1.msra.mxu0 0.0
    %1794 = vmatprep.subr.mxu0 0.0
    %1795 = vmatpush1.msra.mxu0 0.0
    %1796 = vmatprep.subr.mxu0 0.0
    %1797 = vmatpush1.msra.mxu0 0.0
    %1798 = vmatprep.mubr.f32.mxu0 0.0
    %1799 = vmatmul.mubr.f32.gmra.mrb[0].mxu0 %v1354
    %v1800 = vpop.f32.mrb[0].mxu0
    %v1801 = vadd.f32 0.0, %v1800
    %v1802 = vpop.f32.mrb[0].mxu0
    %1803 = vmatprep.mubr.f32.mxu0 0.0
    %1804 = vmatmul.mubr.f32.gmra.mrb[0].mxu0 %v1357
    %v1805 = vpop.f32.mrb[0].mxu0
    %v1806 = vadd.f32 0.0, %v1805
    %v1807 = vpop.f32.mrb[0].mxu0
    %1808 = vdwg.mxu0
    %1809 = vmatprep.subr.mxu0 0.0
    %1810 = vmatpush1.msra.mxu0 %v1345
    %1811 = vmatprep.subr.mxu0 0.0
    %1812 = vmatpush1.msra.mxu0 %v1346
    %1813 = vmatprep.subr.mxu0 0.0
    %1814 = vmatpush1.msra.mxu0 %v1347
    %1815 = vmatprep.subr.mxu0 0.0
    %1816 = vmatpush1.msra.mxu0 %v1348
    %1817 = vmatprep.subr.mxu0 0.0
    %1818 = vmatpush1.msra.mxu0 0.0
    %1819 = vmatprep.subr.mxu0 0.0
    %1820 = vmatpush1.msra.mxu0 0.0
    %1821 = vmatprep.subr.mxu0 0.0
    %1822 = vmatpush1.msra.mxu0 0.0
    %1823 = vmatprep.subr.mxu0 0.0
    %1824 = vmatpush1.msra.mxu0 0.0
    %1825 = vmatprep.subr.mxu0 0.0
    %1826 = vmatpush1.msra.mxu0 0.0
    %1827 = vmatprep.subr.mxu0 0.0
    %1828 = vmatpush1.msra.mxu0 0.0
    %1829 = vmatprep.subr.mxu0 0.0
    %1830 = vmatpush1.msra.mxu0 0.0
    %1831 = vmatprep.subr.mxu0 0.0
    %1832 = vmatpush1.msra.mxu0 0.0
    %1833 = vmatprep.subr.mxu0 0.0
    %1834 = vmatpush1.msra.mxu0 0.0
    %1835 = vmatprep.subr.mxu0 0.0
    %1836 = vmatpush1.msra.mxu0 0.0
    %1837 = vmatprep.subr.mxu0 0.0
    %1838 = vmatpush1.msra.mxu0 0.0
    %1839 = vmatprep.subr.mxu0 0.0
    %1840 = vmatpush1.msra.mxu0 0.0
    %1841 = vmatprep.subr.mxu0 0.0
    %1842 = vmatpush1.msra.mxu0 0.0
    %1843 = vmatprep.subr.mxu0 0.0
    %1844 = vmatpush1.msra.mxu0 0.0
    %1845 = vmatprep.subr.mxu0 0.0
    %1846 = vmatpush1.msra.mxu0 0.0
    %1847 = vmatprep.subr.mxu0 0.0
    %1848 = vmatpush1.msra.mxu0 0.0
    %1849 = vmatprep.subr.mxu0 0.0
    %1850 = vmatpush1.msra.mxu0 0.0
    %1851 = vmatprep.subr.mxu0 0.0
    %1852 = vmatpush1.msra.mxu0 0.0
    %1853 = vmatprep.subr.mxu0 0.0
    %1854 = vmatpush1.msra.mxu0 0.0
    %1855 = vmatprep.subr.mxu0 0.0
    %1856 = vmatpush1.msra.mxu0 0.0
    %1857 = vmatprep.subr.mxu0 0.0
    %1858 = vmatpush1.msra.mxu0 0.0
    %1859 = vmatprep.subr.mxu0 0.0
    %1860 = vmatpush1.msra.mxu0 0.0
    %1861 = vmatprep.subr.mxu0 0.0
    %1862 = vmatpush1.msra.mxu0 0.0
    %1863 = vmatprep.subr.mxu0 0.0
    %1864 = vmatpush1.msra.mxu0 0.0
    %1865 = vmatprep.subr.mxu0 0.0
    %1866 = vmatpush1.msra.mxu0 0.0
    %1867 = vmatprep.subr.mxu0 0.0
    %1868 = vmatpush1.msra.mxu0 0.0
    %1869 = vmatprep.subr.mxu0 0.0
    %1870 = vmatpush1.msra.mxu0 0.0
    %1871 = vmatprep.subr.mxu0 0.0
    %1872 = vmatpush1.msra.mxu0 0.0
    %1873 = vmatprep.mubr.f32.mxu0 0.0
    %1874 = vmatmul.mubr.f32.gmra.mrb[0].mxu0 %v1354
    %v1875 = vpop.f32.mrb[0].mxu0
    %v1876 = vadd.f32 0.0, %v1875
    %v1877 = vpop.f32.mrb[0].mxu0
    %1878 = vmatprep.mubr.f32.mxu0 0.0
    %1879 = vmatmul.mubr.f32.gmra.mrb[0].mxu0 %v1357
    %v1880 = vpop.f32.mrb[0].mxu0
    %v1881 = vadd.f32 0.0, %v1880
    %v1882 = vpop.f32.mrb[0].mxu0
    %1883 = vdwg.mxu0
    %1884 = vmatprep.subr.mxu0 0.0
    %1885 = vmatpush1.msra.mxu0 %v1349
    %1886 = vmatprep.subr.mxu0 0.0
    %1887 = vmatpush1.msra.mxu0 %v1350
    %1888 = vmatprep.subr.mxu0 0.0
    %1889 = vmatpush1.msra.mxu0 %v1351
    %1890 = vmatprep.subr.mxu0 0.0
    %1891 = vmatpush1.msra.mxu0 %v1352
    %1892 = vmatprep.subr.mxu0 0.0
    %1893 = vmatpush1.msra.mxu0 0.0
    %1894 = vmatprep.subr.mxu0 0.0
    %1895 = vmatpush1.msra.mxu0 0.0
    %1896 = vmatprep.subr.mxu0 0.0
    %1897 = vmatpush1.msra.mxu0 0.0
    %1898 = vmatprep.subr.mxu0 0.0
    %1899 = vmatpush1.msra.mxu0 0.0
    %1900 = vmatprep.subr.mxu0 0.0
    %1901 = vmatpush1.msra.mxu0 0.0
    %1902 = vmatprep.subr.mxu0 0.0
    %1903 = vmatpush1.msra.mxu0 0.0
    %1904 = vmatprep.subr.mxu0 0.0
    %1905 = vmatpush1.msra.mxu0 0.0
    %1906 = vmatprep.subr.mxu0 0.0
    %1907 = vmatpush1.msra.mxu0 0.0
    %1908 = vmatprep.subr.mxu0 0.0
    %1909 = vmatpush1.msra.mxu0 0.0
    %1910 = vmatprep.subr.mxu0 0.0
    %1911 = vmatpush1.msra.mxu0 0.0
    %1912 = vmatprep.subr.mxu0 0.0
    %1913 = vmatpush1.msra.mxu0 0.0
    %1914 = vmatprep.subr.mxu0 0.0
    %1915 = vmatpush1.msra.mxu0 0.0
    %1916 = vmatprep.subr.mxu0 0.0
    %1917 = vmatpush1.msra.mxu0 0.0
    %1918 = vmatprep.subr.mxu0 0.0
    %1919 = vmatpush1.msra.mxu0 0.0
    %1920 = vmatprep.subr.mxu0 0.0
    %1921 = vmatpush1.msra.mxu0 0.0
    %1922 = vmatprep.subr.mxu0 0.0
    %1923 = vmatpush1.msra.mxu0 0.0
    %1924 = vmatprep.subr.mxu0 0.0
    %1925 = vmatpush1.msra.mxu0 0.0
    %1926 = vmatprep.subr.mxu0 0.0
    %1927 = vmatpush1.msra.mxu0 0.0
    %1928 = vmatprep.subr.mxu0 0.0
    %1929 = vmatpush1.msra.mxu0 0.0
    %1930 = vmatprep.subr.mxu0 0.0
    %1931 = vmatpush1.msra.mxu0 0.0
    %1932 = vmatprep.subr.mxu0 0.0
    %1933 = vmatpush1.msra.mxu0 0.0
    %1934 = vmatprep.subr.mxu0 0.0
    %1935 = vmatpush1.msra.mxu0 0.0
    %1936 = vmatprep.subr.mxu0 0.0
    %1937 = vmatpush1.msra.mxu0 0.0
    %1938 = vmatprep.subr.mxu0 0.0
    %1939 = vmatpush1.msra.mxu0 0.0
    %1940 = vmatprep.subr.mxu0 0.0
    %1941 = vmatpush1.msra.mxu0 0.0
    %1942 = vmatprep.subr.mxu0 0.0
    %1943 = vmatpush1.msra.mxu0 0.0
    %1944 = vmatprep.subr.mxu0 0.0
    %1945 = vmatpush1.msra.mxu0 0.0
    %1946 = vmatprep.subr.mxu0 0.0
    %1947 = vmatpush1.msra.mxu0 0.0
    %1948 = vmatprep.mubr.f32.mxu0 0.0
    %1949 = vmatmul.mubr.f32.gmra.mrb[0].mxu0 %v1354
    %v1950 = vpop.f32.mrb[0].mxu0
    %v1951 = vadd.f32 0.0, %v1950
    %v1952 = vpop.f32.mrb[0].mxu0
    %1953 = vmatprep.mubr.f32.mxu0 0.0
    %1954 = vmatmul.mubr.f32.gmra.mrb[0].mxu0 %v1357
    %v1955 = vpop.f32.mrb[0].mxu0
    %v1956 = vadd.f32 0.0, %v1955
    %v1957 = vpop.f32.mrb[0].mxu0
    %1958 = vdwg.mxu0
    %v1960 = vsel %vm76, %v150, 0
    %v1963 = vsel %vm76, %v788, 0
    %1965 = vmatprep.subr.mxu0 0.0
    %1966 = vmatpush1.xpose.msra.mxu0 %v1963
    %1967 = vmatprep.subr.mxu0 0.0
    %1968 = vmatpush1.xpose.msra.mxu0 0.0
    %1969 = vmatprep.subr.mxu0 0.0
    %1970 = vmatpush1.xpose.msra.mxu0 0.0
    %1971 = vmatprep.subr.mxu0 0.0
    %1972 = vmatpush1.xpose.msra.mxu0 0.0
    %1973 = vmatprep.subr.mxu0 0.0
    %1974 = vmatpush1.xpose.msra.mxu0 0.0
    %1975 = vmatprep.subr.mxu0 0.0
    %1976 = vmatpush1.xpose.msra.mxu0 0.0
    %1977 = vmatprep.subr.mxu0 0.0
    %1978 = vmatpush1.xpose.msra.mxu0 0.0
    %1979 = vmatprep.subr.mxu0 0.0
    %1980 = vmatpush1.xpose.msra.mxu0 0.0
    %1981 = vmatprep.subr.mxu0 0.0
    %1982 = vmatpush1.xpose.msra.mxu0 0.0
    %1983 = vmatprep.subr.mxu0 0.0
    %1984 = vmatpush1.xpose.msra.mxu0 0.0
    %1985 = vmatprep.subr.mxu0 0.0
    %1986 = vmatpush1.xpose.msra.mxu0 0.0
    %1987 = vmatprep.subr.mxu0 0.0
    %1988 = vmatpush1.xpose.msra.mxu0 0.0
    %1989 = vmatprep.subr.mxu0 0.0
    %1990 = vmatpush1.xpose.msra.mxu0 0.0
    %1991 = vmatprep.subr.mxu0 0.0
    %1992 = vmatpush1.xpose.msra.mxu0 0.0
    %1993 = vmatprep.subr.mxu0 0.0
    %1994 = vmatpush1.xpose.msra.mxu0 0.0
    %1995 = vmatprep.subr.mxu0 0.0
    %1996 = vmatpush1.xpose.msra.mxu0 0.0
    %1997 = vmatprep.subr.mxu0 0.0
    %1998 = vmatpush1.xpose.msra.mxu0 0.0
    %1999 = vmatprep.subr.mxu0 0.0
    %2000 = vmatpush1.xpose.msra.mxu0 0.0
    %2001 = vmatprep.subr.mxu0 0.0
    %2002 = vmatpush1.xpose.msra.mxu0 0.0
    %2003 = vmatprep.subr.mxu0 0.0
    %2004 = vmatpush1.xpose.msra.mxu0 0.0
    %2005 = vmatprep.subr.mxu0 0.0
    %2006 = vmatpush1.xpose.msra.mxu0 0.0
    %2007 = vmatprep.subr.mxu0 0.0
    %2008 = vmatpush1.xpose.msra.mxu0 0.0
    %2009 = vmatprep.subr.mxu0 0.0
    %2010 = vmatpush1.xpose.msra.mxu0 0.0
    %2011 = vmatprep.subr.mxu0 0.0
    %2012 = vmatpush1.xpose.msra.mxu0 0.0
    %2013 = vmatprep.subr.mxu0 0.0
    %2014 = vmatpush1.xpose.msra.mxu0 0.0
    %2015 = vmatprep.subr.mxu0 0.0
    %2016 = vmatpush1.xpose.msra.mxu0 0.0
    %2017 = vmatprep.subr.mxu0 0.0
    %2018 = vmatpush1.xpose.msra.mxu0 0.0
    %2019 = vmatprep.subr.mxu0 0.0
    %2020 = vmatpush1.xpose.msra.mxu0 0.0
    %2021 = vmatprep.subr.mxu0 0.0
    %2022 = vmatpush1.xpose.msra.mxu0 0.0
    %2023 = vmatprep.subr.mxu0 0.0
    %2024 = vmatpush1.xpose.msra.mxu0 0.0
    %2025 = vmatprep.subr.mxu0 0.0
    %2026 = vmatpush1.xpose.msra.mxu0 0.0
    %2027 = vmatprep.subr.mxu0 0.0
    %2028 = vmatpush1.xpose.msra.mxu0 0.0
    %2029 = vmatprep.mubr.f32.mxu0 0.0
    %2030 = vmatmul.mubr.f32.gmra.mrb[0].mxu0 %v1960
    %v2031 = vpop.f32.mrb[0].mxu0
    %v2032 = vadd.f32 0.0, %v2031
    %v2033 = vpop.f32.mrb[0].mxu0
    %2034 = vdwg.mxu0
    %v2036 = vsel %vm76, %v155, 0
    %v2039 = vsel %vm76, %v793, 0
    %2041 = vmatprep.subr.mxu0 0.0
    %2042 = vmatpush1.xpose.msra.mxu0 %v2039
    %2043 = vmatprep.subr.mxu0 0.0
    %2044 = vmatpush1.xpose.msra.mxu0 0.0
    %2045 = vmatprep.subr.mxu0 0.0
    %2046 = vmatpush1.xpose.msra.mxu0 0.0
    %2047 = vmatprep.subr.mxu0 0.0
    %2048 = vmatpush1.xpose.msra.mxu0 0.0
    %2049 = vmatprep.subr.mxu0 0.0
    %2050 = vmatpush1.xpose.msra.mxu0 0.0
    %2051 = vmatprep.subr.mxu0 0.0
    %2052 = vmatpush1.xpose.msra.mxu0 0.0
    %2053 = vmatprep.subr.mxu0 0.0
    %2054 = vmatpush1.xpose.msra.mxu0 0.0
    %2055 = vmatprep.subr.mxu0 0.0
    %2056 = vmatpush1.xpose.msra.mxu0 0.0
    %2057 = vmatprep.subr.mxu0 0.0
    %2058 = vmatpush1.xpose.msra.mxu0 0.0
    %2059 = vmatprep.subr.mxu0 0.0
    %2060 = vmatpush1.xpose.msra.mxu0 0.0
    %2061 = vmatprep.subr.mxu0 0.0
    %2062 = vmatpush1.xpose.msra.mxu0 0.0
    %2063 = vmatprep.subr.mxu0 0.0
    %2064 = vmatpush1.xpose.msra.mxu0 0.0
    %2065 = vmatprep.subr.mxu0 0.0
    %2066 = vmatpush1.xpose.msra.mxu0 0.0
    %2067 = vmatprep.subr.mxu0 0.0
    %2068 = vmatpush1.xpose.msra.mxu0 0.0
    %2069 = vmatprep.subr.mxu0 0.0
    %2070 = vmatpush1.xpose.msra.mxu0 0.0
    %2071 = vmatprep.subr.mxu0 0.0
    %2072 = vmatpush1.xpose.msra.mxu0 0.0
    %2073 = vmatprep.subr.mxu0 0.0
    %2074 = vmatpush1.xpose.msra.mxu0 0.0
    %2075 = vmatprep.subr.mxu0 0.0
    %2076 = vmatpush1.xpose.msra.mxu0 0.0
    %2077 = vmatprep.subr.mxu0 0.0
    %2078 = vmatpush1.xpose.msra.mxu0 0.0
    %2079 = vmatprep.subr.mxu0 0.0
    %2080 = vmatpush1.xpose.msra.mxu0 0.0
    %2081 = vmatprep.subr.mxu0 0.0
    %2082 = vmatpush1.xpose.msra.mxu0 0.0
    %2083 = vmatprep.subr.mxu0 0.0
    %2084 = vmatpush1.xpose.msra.mxu0 0.0
    %2085 = vmatprep.subr.mxu0 0.0
    %2086 = vmatpush1.xpose.msra.mxu0 0.0
    %2087 = vmatprep.subr.mxu0 0.0
    %2088 = vmatpush1.xpose.msra.mxu0 0.0
    %2089 = vmatprep.subr.mxu0 0.0
    %2090 = vmatpush1.xpose.msra.mxu0 0.0
    %2091 = vmatprep.subr.mxu0 0.0
    %2092 = vmatpush1.xpose.msra.mxu0 0.0
    %2093 = vmatprep.subr.mxu0 0.0
    %2094 = vmatpush1.xpose.msra.mxu0 0.0
    %2095 = vmatprep.subr.mxu0 0.0
    %2096 = vmatpush1.xpose.msra.mxu0 0.0
    %2097 = vmatprep.subr.mxu0 0.0
    %2098 = vmatpush1.xpose.msra.mxu0 0.0
    %2099 = vmatprep.subr.mxu0 0.0
    %2100 = vmatpush1.xpose.msra.mxu0 0.0
    %2101 = vmatprep.subr.mxu0 0.0
    %2102 = vmatpush1.xpose.msra.mxu0 0.0
    %2103 = vmatprep.subr.mxu0 0.0
    %2104 = vmatpush1.xpose.msra.mxu0 0.0
    %2105 = vmatprep.mubr.f32.mxu0 0.0
    %2106 = vmatmul.mubr.f32.gmra.mrb[0].mxu0 %v2036
    %v2107 = vpop.f32.mrb[0].mxu0
    %v2108 = vadd.f32 0.0, %v2107
    %v2109 = vpop.f32.mrb[0].mxu0
    %2110 = vdwg.mxu0
    %v2112 = vsel %vm76, %v225, 0
    %v2115 = vsel %vm76, %v863, 0
    %2117 = vmatprep.subr.mxu0 0.0
    %2118 = vmatpush1.xpose.msra.mxu0 %v2115
    %2119 = vmatprep.subr.mxu0 0.0
    %2120 = vmatpush1.xpose.msra.mxu0 0.0
    %2121 = vmatprep.subr.mxu0 0.0
    %2122 = vmatpush1.xpose.msra.mxu0 0.0
    %2123 = vmatprep.subr.mxu0 0.0
    %2124 = vmatpush1.xpose.msra.mxu0 0.0
    %2125 = vmatprep.subr.mxu0 0.0
    %2126 = vmatpush1.xpose.msra.mxu0 0.0
    %2127 = vmatprep.subr.mxu0 0.0
    %2128 = vmatpush1.xpose.msra.mxu0 0.0
    %2129 = vmatprep.subr.mxu0 0.0
    %2130 = vmatpush1.xpose.msra.mxu0 0.0
    %2131 = vmatprep.subr.mxu0 0.0
    %2132 = vmatpush1.xpose.msra.mxu0 0.0
    %2133 = vmatprep.subr.mxu0 0.0
    %2134 = vmatpush1.xpose.msra.mxu0 0.0
    %2135 = vmatprep.subr.mxu0 0.0
    %2136 = vmatpush1.xpose.msra.mxu0 0.0
    %2137 = vmatprep.subr.mxu0 0.0
    %2138 = vmatpush1.xpose.msra.mxu0 0.0
    %2139 = vmatprep.subr.mxu0 0.0
    %2140 = vmatpush1.xpose.msra.mxu0 0.0
    %2141 = vmatprep.subr.mxu0 0.0
    %2142 = vmatpush1.xpose.msra.mxu0 0.0
    %2143 = vmatprep.subr.mxu0 0.0
    %2144 = vmatpush1.xpose.msra.mxu0 0.0
    %2145 = vmatprep.subr.mxu0 0.0
    %2146 = vmatpush1.xpose.msra.mxu0 0.0
    %2147 = vmatprep.subr.mxu0 0.0
    %2148 = vmatpush1.xpose.msra.mxu0 0.0
    %2149 = vmatprep.subr.mxu0 0.0
    %2150 = vmatpush1.xpose.msra.mxu0 0.0
    %2151 = vmatprep.subr.mxu0 0.0
    %2152 = vmatpush1.xpose.msra.mxu0 0.0
    %2153 = vmatprep.subr.mxu0 0.0
    %2154 = vmatpush1.xpose.msra.mxu0 0.0
    %2155 = vmatprep.subr.mxu0 0.0
    %2156 = vmatpush1.xpose.msra.mxu0 0.0
    %2157 = vmatprep.subr.mxu0 0.0
    %2158 = vmatpush1.xpose.msra.mxu0 0.0
    %2159 = vmatprep.subr.mxu0 0.0
    %2160 = vmatpush1.xpose.msra.mxu0 0.0
    %2161 = vmatprep.subr.mxu0 0.0
    %2162 = vmatpush1.xpose.msra.mxu0 0.0
    %2163 = vmatprep.subr.mxu0 0.0
    %2164 = vmatpush1.xpose.msra.mxu0 0.0
    %2165 = vmatprep.subr.mxu0 0.0
    %2166 = vmatpush1.xpose.msra.mxu0 0.0
    %2167 = vmatprep.subr.mxu0 0.0
    %2168 = vmatpush1.xpose.msra.mxu0 0.0
    %2169 = vmatprep.subr.mxu0 0.0
    %2170 = vmatpush1.xpose.msra.mxu0 0.0
    %2171 = vmatprep.subr.mxu0 0.0
    %2172 = vmatpush1.xpose.msra.mxu0 0.0
    %2173 = vmatprep.subr.mxu0 0.0
    %2174 = vmatpush1.xpose.msra.mxu0 0.0
    %2175 = vmatprep.subr.mxu0 0.0
    %2176 = vmatpush1.xpose.msra.mxu0 0.0
    %2177 = vmatprep.subr.mxu0 0.0
    %2178 = vmatpush1.xpose.msra.mxu0 0.0
    %2179 = vmatprep.subr.mxu0 0.0
    %2180 = vmatpush1.xpose.msra.mxu0 0.0
    %2181 = vmatprep.mubr.f32.mxu0 0.0
    %2182 = vmatmul.mubr.f32.gmra.mrb[0].mxu0 %v2112
    %v2183 = vpop.f32.mrb[0].mxu0
    %v2184 = vadd.f32 0.0, %v2183
    %v2185 = vpop.f32.mrb[0].mxu0
    %2186 = vdwg.mxu0
    %v2188 = vsel %vm76, %v230, 0
    %v2191 = vsel %vm76, %v868, 0
    %2193 = vmatprep.subr.mxu0 0.0
    %2194 = vmatpush1.xpose.msra.mxu0 %v2191
    %2195 = vmatprep.subr.mxu0 0.0
    %2196 = vmatpush1.xpose.msra.mxu0 0.0
    %2197 = vmatprep.subr.mxu0 0.0
    %2198 = vmatpush1.xpose.msra.mxu0 0.0
    %2199 = vmatprep.subr.mxu0 0.0
    %2200 = vmatpush1.xpose.msra.mxu0 0.0
    %2201 = vmatprep.subr.mxu0 0.0
    %2202 = vmatpush1.xpose.msra.mxu0 0.0
    %2203 = vmatprep.subr.mxu0 0.0
    %2204 = vmatpush1.xpose.msra.mxu0 0.0
    %2205 = vmatprep.subr.mxu0 0.0
    %2206 = vmatpush1.xpose.msra.mxu0 0.0
    %2207 = vmatprep.subr.mxu0 0.0
    %2208 = vmatpush1.xpose.msra.mxu0 0.0
    %2209 = vmatprep.subr.mxu0 0.0
    %2210 = vmatpush1.xpose.msra.mxu0 0.0
    %2211 = vmatprep.subr.mxu0 0.0
    %2212 = vmatpush1.xpose.msra.mxu0 0.0
    %2213 = vmatprep.subr.mxu0 0.0
    %2214 = vmatpush1.xpose.msra.mxu0 0.0
    %2215 = vmatprep.subr.mxu0 0.0
    %2216 = vmatpush1.xpose.msra.mxu0 0.0
    %2217 = vmatprep.subr.mxu0 0.0
    %2218 = vmatpush1.xpose.msra.mxu0 0.0
    %2219 = vmatprep.subr.mxu0 0.0
    %2220 = vmatpush1.xpose.msra.mxu0 0.0
    %2221 = vmatprep.subr.mxu0 0.0
    %2222 = vmatpush1.xpose.msra.mxu0 0.0
    %2223 = vmatprep.subr.mxu0 0.0
    %2224 = vmatpush1.xpose.msra.mxu0 0.0
    %2225 = vmatprep.subr.mxu0 0.0
    %2226 = vmatpush1.xpose.msra.mxu0 0.0
    %2227 = vmatprep.subr.mxu0 0.0
    %2228 = vmatpush1.xpose.msra.mxu0 0.0
    %2229 = vmatprep.subr.mxu0 0.0
    %2230 = vmatpush1.xpose.msra.mxu0 0.0
    %2231 = vmatprep.subr.mxu0 0.0
    %2232 = vmatpush1.xpose.msra.mxu0 0.0
    %2233 = vmatprep.subr.mxu0 0.0
    %2234 = vmatpush1.xpose.msra.mxu0 0.0
    %2235 = vmatprep.subr.mxu0 0.0
    %2236 = vmatpush1.xpose.msra.mxu0 0.0
    %2237 = vmatprep.subr.mxu0 0.0
    %2238 = vmatpush1.xpose.msra.mxu0 0.0
    %2239 = vmatprep.subr.mxu0 0.0
    %2240 = vmatpush1.xpose.msra.mxu0 0.0
    %2241 = vmatprep.subr.mxu0 0.0
    %2242 = vmatpush1.xpose.msra.mxu0 0.0
    %2243 = vmatprep.subr.mxu0 0.0
    %2244 = vmatpush1.xpose.msra.mxu0 0.0
    %2245 = vmatprep.subr.mxu0 0.0
    %2246 = vmatpush1.xpose.msra.mxu0 0.0
    %2247 = vmatprep.subr.mxu0 0.0
    %2248 = vmatpush1.xpose.msra.mxu0 0.0
    %2249 = vmatprep.subr.mxu0 0.0
    %2250 = vmatpush1.xpose.msra.mxu0 0.0
    %2251 = vmatprep.subr.mxu0 0.0
    %2252 = vmatpush1.xpose.msra.mxu0 0.0
    %2253 = vmatprep.subr.mxu0 0.0
    %2254 = vmatpush1.xpose.msra.mxu0 0.0
    %2255 = vmatprep.subr.mxu0 0.0
    %2256 = vmatpush1.xpose.msra.mxu0 0.0
    %2257 = vmatprep.mubr.f32.mxu0 0.0
    %2258 = vmatmul.mubr.f32.gmra.mrb[0].mxu0 %v2188
    %v2259 = vpop.f32.mrb[0].mxu0
    %v2260 = vadd.f32 0.0, %v2259
    %v2261 = vpop.f32.mrb[0].mxu0
    %2262 = vdwg.mxu0
    %v2264 = vsel %vm76, %v300, 0
    %v2267 = vsel %vm76, %v938, 0
    %2269 = vmatprep.subr.mxu0 0.0
    %2270 = vmatpush1.xpose.msra.mxu0 %v2267
    %2271 = vmatprep.subr.mxu0 0.0
    %2272 = vmatpush1.xpose.msra.mxu0 0.0
    %2273 = vmatprep.subr.mxu0 0.0
    %2274 = vmatpush1.xpose.msra.mxu0 0.0
    %2275 = vmatprep.subr.mxu0 0.0
    %2276 = vmatpush1.xpose.msra.mxu0 0.0
    %2277 = vmatprep.subr.mxu0 0.0
    %2278 = vmatpush1.xpose.msra.mxu0 0.0
    %2279 = vmatprep.subr.mxu0 0.0
    %2280 = vmatpush1.xpose.msra.mxu0 0.0
    %2281 = vmatprep.subr.mxu0 0.0
    %2282 = vmatpush1.xpose.msra.mxu0 0.0
    %2283 = vmatprep.subr.mxu0 0.0
    %2284 = vmatpush1.xpose.msra.mxu0 0.0
    %2285 = vmatprep.subr.mxu0 0.0
    %2286 = vmatpush1.xpose.msra.mxu0 0.0
    %2287 = vmatprep.subr.mxu0 0.0
    %2288 = vmatpush1.xpose.msra.mxu0 0.0
    %2289 = vmatprep.subr.mxu0 0.0
    %2290 = vmatpush1.xpose.msra.mxu0 0.0
    %2291 = vmatprep.subr.mxu0 0.0
    %2292 = vmatpush1.xpose.msra.mxu0 0.0
    %2293 = vmatprep.subr.mxu0 0.0
    %2294 = vmatpush1.xpose.msra.mxu0 0.0
    %2295 = vmatprep.subr.mxu0 0.0
    %2296 = vmatpush1.xpose.msra.mxu0 0.0
    %2297 = vmatprep.subr.mxu0 0.0
    %2298 = vmatpush1.xpose.msra.mxu0 0.0
    %2299 = vmatprep.subr.mxu0 0.0
    %2300 = vmatpush1.xpose.msra.mxu0 0.0
    %2301 = vmatprep.subr.mxu0 0.0
    %2302 = vmatpush1.xpose.msra.mxu0 0.0
    %2303 = vmatprep.subr.mxu0 0.0
    %2304 = vmatpush1.xpose.msra.mxu0 0.0
    %2305 = vmatprep.subr.mxu0 0.0
    %2306 = vmatpush1.xpose.msra.mxu0 0.0
    %2307 = vmatprep.subr.mxu0 0.0
    %2308 = vmatpush1.xpose.msra.mxu0 0.0
    %2309 = vmatprep.subr.mxu0 0.0
    %2310 = vmatpush1.xpose.msra.mxu0 0.0
    %2311 = vmatprep.subr.mxu0 0.0
    %2312 = vmatpush1.xpose.msra.mxu0 0.0
    %2313 = vmatprep.subr.mxu0 0.0
    %2314 = vmatpush1.xpose.msra.mxu0 0.0
    %2315 = vmatprep.subr.mxu0 0.0
    %2316 = vmatpush1.xpose.msra.mxu0 0.0
    %2317 = vmatprep.subr.mxu0 0.0
    %2318 = vmatpush1.xpose.msra.mxu0 0.0
    %2319 = vmatprep.subr.mxu0 0.0
    %2320 = vmatpush1.xpose.msra.mxu0 0.0
    %2321 = vmatprep.subr.mxu0 0.0
    %2322 = vmatpush1.xpose.msra.mxu0 0.0
    %2323 = vmatprep.subr.mxu0 0.0
    %2324 = vmatpush1.xpose.msra.mxu0 0.0
    %2325 = vmatprep.subr.mxu0 0.0
    %2326 = vmatpush1.xpose.msra.mxu0 0.0
    %2327 = vmatprep.subr.mxu0 0.0
    %2328 = vmatpush1.xpose.msra.mxu0 0.0
    %2329 = vmatprep.subr.mxu0 0.0
    %2330 = vmatpush1.xpose.msra.mxu0 0.0
    %2331 = vmatprep.subr.mxu0 0.0
    %2332 = vmatpush1.xpose.msra.mxu0 0.0
    %2333 = vmatprep.mubr.f32.mxu0 0.0
    %2334 = vmatmul.mubr.f32.gmra.mrb[0].mxu0 %v2264
    %v2335 = vpop.f32.mrb[0].mxu0
    %v2336 = vadd.f32 0.0, %v2335
    %v2337 = vpop.f32.mrb[0].mxu0
    %2338 = vdwg.mxu0
    %v2340 = vsel %vm76, %v305, 0
    %v2343 = vsel %vm76, %v943, 0
    %2345 = vmatprep.subr.mxu0 0.0
    %2346 = vmatpush1.xpose.msra.mxu0 %v2343
    %2347 = vmatprep.subr.mxu0 0.0
    %2348 = vmatpush1.xpose.msra.mxu0 0.0
    %2349 = vmatprep.subr.mxu0 0.0
    %2350 = vmatpush1.xpose.msra.mxu0 0.0
    %2351 = vmatprep.subr.mxu0 0.0
    %2352 = vmatpush1.xpose.msra.mxu0 0.0
    %2353 = vmatprep.subr.mxu0 0.0
    %2354 = vmatpush1.xpose.msra.mxu0 0.0
    %2355 = vmatprep.subr.mxu0 0.0
    %2356 = vmatpush1.xpose.msra.mxu0 0.0
    %2357 = vmatprep.subr.mxu0 0.0
    %2358 = vmatpush1.xpose.msra.mxu0 0.0
    %2359 = vmatprep.subr.mxu0 0.0
    %2360 = vmatpush1.xpose.msra.mxu0 0.0
    %2361 = vmatprep.subr.mxu0 0.0
    %2362 = vmatpush1.xpose.msra.mxu0 0.0
    %2363 = vmatprep.subr.mxu0 0.0
    %2364 = vmatpush1.xpose.msra.mxu0 0.0
    %2365 = vmatprep.subr.mxu0 0.0
    %2366 = vmatpush1.xpose.msra.mxu0 0.0
    %2367 = vmatprep.subr.mxu0 0.0
    %2368 = vmatpush1.xpose.msra.mxu0 0.0
    %2369 = vmatprep.subr.mxu0 0.0
    %2370 = vmatpush1.xpose.msra.mxu0 0.0
    %2371 = vmatprep.subr.mxu0 0.0
    %2372 = vmatpush1.xpose.msra.mxu0 0.0
    %2373 = vmatprep.subr.mxu0 0.0
    %2374 = vmatpush1.xpose.msra.mxu0 0.0
    %2375 = vmatprep.subr.mxu0 0.0
    %2376 = vmatpush1.xpose.msra.mxu0 0.0
    %2377 = vmatprep.subr.mxu0 0.0
    %2378 = vmatpush1.xpose.msra.mxu0 0.0
    %2379 = vmatprep.subr.mxu0 0.0
    %2380 = vmatpush1.xpose.msra.mxu0 0.0
    %2381 = vmatprep.subr.mxu0 0.0
    %2382 = vmatpush1.xpose.msra.mxu0 0.0
    %2383 = vmatprep.subr.mxu0 0.0
    %2384 = vmatpush1.xpose.msra.mxu0 0.0
    %2385 = vmatprep.subr.mxu0 0.0
    %2386 = vmatpush1.xpose.msra.mxu0 0.0
    %2387 = vmatprep.subr.mxu0 0.0
    %2388 = vmatpush1.xpose.msra.mxu0 0.0
    %2389 = vmatprep.subr.mxu0 0.0
    %2390 = vmatpush1.xpose.msra.mxu0 0.0
    %2391 = vmatprep.subr.mxu0 0.0
    %2392 = vmatpush1.xpose.msra.mxu0 0.0
    %2393 = vmatprep.subr.mxu0 0.0
    %2394 = vmatpush1.xpose.msra.mxu0 0.0
    %2395 = vmatprep.subr.mxu0 0.0
    %2396 = vmatpush1.xpose.msra.mxu0 0.0
    %2397 = vmatprep.subr.mxu0 0.0
    %2398 = vmatpush1.xpose.msra.mxu0 0.0
    %2399 = vmatprep.subr.mxu0 0.0
    %2400 = vmatpush1.xpose.msra.mxu0 0.0
    %2401 = vmatprep.subr.mxu0 0.0
    %2402 = vmatpush1.xpose.msra.mxu0 0.0
    %2403 = vmatprep.subr.mxu0 0.0
    %2404 = vmatpush1.xpose.msra.mxu0 0.0
    %2405 = vmatprep.subr.mxu0 0.0
    %2406 = vmatpush1.xpose.msra.mxu0 0.0
    %2407 = vmatprep.subr.mxu0 0.0
    %2408 = vmatpush1.xpose.msra.mxu0 0.0
    %2409 = vmatprep.mubr.f32.mxu0 0.0
    %2410 = vmatmul.mubr.f32.gmra.mrb[0].mxu0 %v2340
    %v2411 = vpop.f32.mrb[0].mxu0
    %v2412 = vadd.f32 0.0, %v2411
    %v2413 = vpop.f32.mrb[0].mxu0
    %2414 = vdwg.mxu0
    %v2416 = vsel %vm76, %v375, 0
    %v2419 = vsel %vm76, %v1013, 0
    %2421 = vmatprep.subr.mxu0 0.0
    %2422 = vmatpush1.xpose.msra.mxu0 %v2419
    %2423 = vmatprep.subr.mxu0 0.0
    %2424 = vmatpush1.xpose.msra.mxu0 0.0
    %2425 = vmatprep.subr.mxu0 0.0
    %2426 = vmatpush1.xpose.msra.mxu0 0.0
    %2427 = vmatprep.subr.mxu0 0.0
    %2428 = vmatpush1.xpose.msra.mxu0 0.0
    %2429 = vmatprep.subr.mxu0 0.0
    %2430 = vmatpush1.xpose.msra.mxu0 0.0
    %2431 = vmatprep.subr.mxu0 0.0
    %2432 = vmatpush1.xpose.msra.mxu0 0.0
    %2433 = vmatprep.subr.mxu0 0.0
    %2434 = vmatpush1.xpose.msra.mxu0 0.0
    %2435 = vmatprep.subr.mxu0 0.0
    %2436 = vmatpush1.xpose.msra.mxu0 0.0
    %2437 = vmatprep.subr.mxu0 0.0
    %2438 = vmatpush1.xpose.msra.mxu0 0.0
    %2439 = vmatprep.subr.mxu0 0.0
    %2440 = vmatpush1.xpose.msra.mxu0 0.0
    %2441 = vmatprep.subr.mxu0 0.0
    %2442 = vmatpush1.xpose.msra.mxu0 0.0
    %2443 = vmatprep.subr.mxu0 0.0
    %2444 = vmatpush1.xpose.msra.mxu0 0.0
    %2445 = vmatprep.subr.mxu0 0.0
    %2446 = vmatpush1.xpose.msra.mxu0 0.0
    %2447 = vmatprep.subr.mxu0 0.0
    %2448 = vmatpush1.xpose.msra.mxu0 0.0
    %2449 = vmatprep.subr.mxu0 0.0
    %2450 = vmatpush1.xpose.msra.mxu0 0.0
    %2451 = vmatprep.subr.mxu0 0.0
    %2452 = vmatpush1.xpose.msra.mxu0 0.0
    %2453 = vmatprep.subr.mxu0 0.0
    %2454 = vmatpush1.xpose.msra.mxu0 0.0
    %2455 = vmatprep.subr.mxu0 0.0
    %2456 = vmatpush1.xpose.msra.mxu0 0.0
    %2457 = vmatprep.subr.mxu0 0.0
    %2458 = vmatpush1.xpose.msra.mxu0 0.0
    %2459 = vmatprep.subr.mxu0 0.0
    %2460 = vmatpush1.xpose.msra.mxu0 0.0
    %2461 = vmatprep.subr.mxu0 0.0
    %2462 = vmatpush1.xpose.msra.mxu0 0.0
    %2463 = vmatprep.subr.mxu0 0.0
    %2464 = vmatpush1.xpose.msra.mxu0 0.0
    %2465 = vmatprep.subr.mxu0 0.0
    %2466 = vmatpush1.xpose.msra.mxu0 0.0
    %2467 = vmatprep.subr.mxu0 0.0
    %2468 = vmatpush1.xpose.msra.mxu0 0.0
    %2469 = vmatprep.subr.mxu0 0.0
    %2470 = vmatpush1.xpose.msra.mxu0 0.0
    %2471 = vmatprep.subr.mxu0 0.0
    %2472 = vmatpush1.xpose.msra.mxu0 0.0
    %2473 = vmatprep.subr.mxu0 0.0
    %2474 = vmatpush1.xpose.msra.mxu0 0.0
    %2475 = vmatprep.subr.mxu0 0.0
    %2476 = vmatpush1.xpose.msra.mxu0 0.0
    %2477 = vmatprep.subr.mxu0 0.0
    %2478 = vmatpush1.xpose.msra.mxu0 0.0
    %2479 = vmatprep.subr.mxu0 0.0
    %2480 = vmatpush1.xpose.msra.mxu0 0.0
    %2481 = vmatprep.subr.mxu0 0.0
    %2482 = vmatpush1.xpose.msra.mxu0 0.0
    %2483 = vmatprep.subr.mxu0 0.0
    %2484 = vmatpush1.xpose.msra.mxu0 0.0
    %2485 = vmatprep.mubr.f32.mxu0 0.0
    %2486 = vmatmul.mubr.f32.gmra.mrb[0].mxu0 %v2416
    %v2487 = vpop.f32.mrb[0].mxu0
    %v2488 = vadd.f32 0.0, %v2487
    %v2489 = vpop.f32.mrb[0].mxu0
    %2490 = vdwg.mxu0
    %v2492 = vsel %vm76, %v380, 0
    %v2495 = vsel %vm76, %v1018, 0
    %2497 = vmatprep.subr.mxu0 0.0
    %2498 = vmatpush1.xpose.msra.mxu0 %v2495
    %2499 = vmatprep.subr.mxu0 0.0
    %2500 = vmatpush1.xpose.msra.mxu0 0.0
    %2501 = vmatprep.subr.mxu0 0.0
    %2502 = vmatpush1.xpose.msra.mxu0 0.0
    %2503 = vmatprep.subr.mxu0 0.0
    %2504 = vmatpush1.xpose.msra.mxu0 0.0
    %2505 = vmatprep.subr.mxu0 0.0
    %2506 = vmatpush1.xpose.msra.mxu0 0.0
    %2507 = vmatprep.subr.mxu0 0.0
    %2508 = vmatpush1.xpose.msra.mxu0 0.0
    %2509 = vmatprep.subr.mxu0 0.0
    %2510 = vmatpush1.xpose.msra.mxu0 0.0
    %2511 = vmatprep.subr.mxu0 0.0
    %2512 = vmatpush1.xpose.msra.mxu0 0.0
    %2513 = vmatprep.subr.mxu0 0.0
    %2514 = vmatpush1.xpose.msra.mxu0 0.0
    %2515 = vmatprep.subr.mxu0 0.0
    %2516 = vmatpush1.xpose.msra.mxu0 0.0
    %2517 = vmatprep.subr.mxu0 0.0
    %2518 = vmatpush1.xpose.msra.mxu0 0.0
    %2519 = vmatprep.subr.mxu0 0.0
    %2520 = vmatpush1.xpose.msra.mxu0 0.0
    %2521 = vmatprep.subr.mxu0 0.0
    %2522 = vmatpush1.xpose.msra.mxu0 0.0
    %2523 = vmatprep.subr.mxu0 0.0
    %2524 = vmatpush1.xpose.msra.mxu0 0.0
    %2525 = vmatprep.subr.mxu0 0.0
    %2526 = vmatpush1.xpose.msra.mxu0 0.0
    %2527 = vmatprep.subr.mxu0 0.0
    %2528 = vmatpush1.xpose.msra.mxu0 0.0
    %2529 = vmatprep.subr.mxu0 0.0
    %2530 = vmatpush1.xpose.msra.mxu0 0.0
    %2531 = vmatprep.subr.mxu0 0.0
    %2532 = vmatpush1.xpose.msra.mxu0 0.0
    %2533 = vmatprep.subr.mxu0 0.0
    %2534 = vmatpush1.xpose.msra.mxu0 0.0
    %2535 = vmatprep.subr.mxu0 0.0
    %2536 = vmatpush1.xpose.msra.mxu0 0.0
    %2537 = vmatprep.subr.mxu0 0.0
    %2538 = vmatpush1.xpose.msra.mxu0 0.0
    %2539 = vmatprep.subr.mxu0 0.0
    %2540 = vmatpush1.xpose.msra.mxu0 0.0
    %2541 = vmatprep.subr.mxu0 0.0
    %2542 = vmatpush1.xpose.msra.mxu0 0.0
    %2543 = vmatprep.subr.mxu0 0.0
    %2544 = vmatpush1.xpose.msra.mxu0 0.0
    %2545 = vmatprep.subr.mxu0 0.0
    %2546 = vmatpush1.xpose.msra.mxu0 0.0
    %2547 = vmatprep.subr.mxu0 0.0
    %2548 = vmatpush1.xpose.msra.mxu0 0.0
    %2549 = vmatprep.subr.mxu0 0.0
    %2550 = vmatpush1.xpose.msra.mxu0 0.0
    %2551 = vmatprep.subr.mxu0 0.0
    %2552 = vmatpush1.xpose.msra.mxu0 0.0
    %2553 = vmatprep.subr.mxu0 0.0
    %2554 = vmatpush1.xpose.msra.mxu0 0.0
    %2555 = vmatprep.subr.mxu0 0.0
    %2556 = vmatpush1.xpose.msra.mxu0 0.0
    %2557 = vmatprep.subr.mxu0 0.0
    %2558 = vmatpush1.xpose.msra.mxu0 0.0
    %2559 = vmatprep.subr.mxu0 0.0
    %2560 = vmatpush1.xpose.msra.mxu0 0.0
    %2561 = vmatprep.mubr.f32.mxu0 0.0
    %2562 = vmatmul.mubr.f32.gmra.mrb[0].mxu0 %v2492
    %v2563 = vpop.f32.mrb[0].mxu0
    %v2564 = vadd.f32 0.0, %v2563
    %v2565 = vpop.f32.mrb[0].mxu0
    %2566 = vdwg.mxu0
    %v2568 = vsel %vm76, %v450, 0
    %v2571 = vsel %vm76, %v1088, 0
    %2573 = vmatprep.subr.mxu0 0.0
    %2574 = vmatpush1.xpose.msra.mxu0 %v2571
    %2575 = vmatprep.subr.mxu0 0.0
    %2576 = vmatpush1.xpose.msra.mxu0 0.0
    %2577 = vmatprep.subr.mxu0 0.0
    %2578 = vmatpush1.xpose.msra.mxu0 0.0
    %2579 = vmatprep.subr.mxu0 0.0
    %2580 = vmatpush1.xpose.msra.mxu0 0.0
    %2581 = vmatprep.subr.mxu0 0.0
    %2582 = vmatpush1.xpose.msra.mxu0 0.0
    %2583 = vmatprep.subr.mxu0 0.0
    %2584 = vmatpush1.xpose.msra.mxu0 0.0
    %2585 = vmatprep.subr.mxu0 0.0
    %2586 = vmatpush1.xpose.msra.mxu0 0.0
    %2587 = vmatprep.subr.mxu0 0.0
    %2588 = vmatpush1.xpose.msra.mxu0 0.0
    %2589 = vmatprep.subr.mxu0 0.0
    %2590 = vmatpush1.xpose.msra.mxu0 0.0
    %2591 = vmatprep.subr.mxu0 0.0
    %2592 = vmatpush1.xpose.msra.mxu0 0.0
    %2593 = vmatprep.subr.mxu0 0.0
    %2594 = vmatpush1.xpose.msra.mxu0 0.0
    %2595 = vmatprep.subr.mxu0 0.0
    %2596 = vmatpush1.xpose.msra.mxu0 0.0
    %2597 = vmatprep.subr.mxu0 0.0
    %2598 = vmatpush1.xpose.msra.mxu0 0.0
    %2599 = vmatprep.subr.mxu0 0.0
    %2600 = vmatpush1.xpose.msra.mxu0 0.0
    %2601 = vmatprep.subr.mxu0 0.0
    %2602 = vmatpush1.xpose.msra.mxu0 0.0
    %2603 = vmatprep.subr.mxu0 0.0
    %2604 = vmatpush1.xpose.msra.mxu0 0.0
    %2605 = vmatprep.subr.mxu0 0.0
    %2606 = vmatpush1.xpose.msra.mxu0 0.0
    %2607 = vmatprep.subr.mxu0 0.0
    %2608 = vmatpush1.xpose.msra.mxu0 0.0
    %2609 = vmatprep.subr.mxu0 0.0
    %2610 = vmatpush1.xpose.msra.mxu0 0.0
    %2611 = vmatprep.subr.mxu0 0.0
    %2612 = vmatpush1.xpose.msra.mxu0 0.0
    %2613 = vmatprep.subr.mxu0 0.0
    %2614 = vmatpush1.xpose.msra.mxu0 0.0
    %2615 = vmatprep.subr.mxu0 0.0
    %2616 = vmatpush1.xpose.msra.mxu0 0.0
    %2617 = vmatprep.subr.mxu0 0.0
    %2618 = vmatpush1.xpose.msra.mxu0 0.0
    %2619 = vmatprep.subr.mxu0 0.0
    %2620 = vmatpush1.xpose.msra.mxu0 0.0
    %2621 = vmatprep.subr.mxu0 0.0
    %2622 = vmatpush1.xpose.msra.mxu0 0.0
    %2623 = vmatprep.subr.mxu0 0.0
    %2624 = vmatpush1.xpose.msra.mxu0 0.0
    %2625 = vmatprep.subr.mxu0 0.0
    %2626 = vmatpush1.xpose.msra.mxu0 0.0
    %2627 = vmatprep.subr.mxu0 0.0
    %2628 = vmatpush1.xpose.msra.mxu0 0.0
    %2629 = vmatprep.subr.mxu0 0.0
    %2630 = vmatpush1.xpose.msra.mxu0 0.0
    %2631 = vmatprep.subr.mxu0 0.0
    %2632 = vmatpush1.xpose.msra.mxu0 0.0
    %2633 = vmatprep.subr.mxu0 0.0
    %2634 = vmatpush1.xpose.msra.mxu0 0.0
    %2635 = vmatprep.subr.mxu0 0.0
    %2636 = vmatpush1.xpose.msra.mxu0 0.0
    %2637 = vmatprep.mubr.f32.mxu0 0.0
    %2638 = vmatmul.mubr.f32.gmra.mrb[0].mxu0 %v2568
    %v2639 = vpop.f32.mrb[0].mxu0
    %v2640 = vadd.f32 0.0, %v2639
    %v2641 = vpop.f32.mrb[0].mxu0
    %2642 = vdwg.mxu0
    %v2644 = vsel %vm76, %v455, 0
    %v2647 = vsel %vm76, %v1093, 0
    %2649 = vmatprep.subr.mxu0 0.0
    %2650 = vmatpush1.xpose.msra.mxu0 %v2647
    %2651 = vmatprep.subr.mxu0 0.0
    %2652 = vmatpush1.xpose.msra.mxu0 0.0
    %2653 = vmatprep.subr.mxu0 0.0
    %2654 = vmatpush1.xpose.msra.mxu0 0.0
    %2655 = vmatprep.subr.mxu0 0.0
    %2656 = vmatpush1.xpose.msra.mxu0 0.0
    %2657 = vmatprep.subr.mxu0 0.0
    %2658 = vmatpush1.xpose.msra.mxu0 0.0
    %2659 = vmatprep.subr.mxu0 0.0
    %2660 = vmatpush1.xpose.msra.mxu0 0.0
    %2661 = vmatprep.subr.mxu0 0.0
    %2662 = vmatpush1.xpose.msra.mxu0 0.0
    %2663 = vmatprep.subr.mxu0 0.0
    %2664 = vmatpush1.xpose.msra.mxu0 0.0
    %2665 = vmatprep.subr.mxu0 0.0
    %2666 = vmatpush1.xpose.msra.mxu0 0.0
    %2667 = vmatprep.subr.mxu0 0.0
    %2668 = vmatpush1.xpose.msra.mxu0 0.0
    %2669 = vmatprep.subr.mxu0 0.0
    %2670 = vmatpush1.xpose.msra.mxu0 0.0
    %2671 = vmatprep.subr.mxu0 0.0
    %2672 = vmatpush1.xpose.msra.mxu0 0.0
    %2673 = vmatprep.subr.mxu0 0.0
    %2674 = vmatpush1.xpose.msra.mxu0 0.0
    %2675 = vmatprep.subr.mxu0 0.0
    %2676 = vmatpush1.xpose.msra.mxu0 0.0
    %2677 = vmatprep.subr.mxu0 0.0
    %2678 = vmatpush1.xpose.msra.mxu0 0.0
    %2679 = vmatprep.subr.mxu0 0.0
    %2680 = vmatpush1.xpose.msra.mxu0 0.0
    %2681 = vmatprep.subr.mxu0 0.0
    %2682 = vmatpush1.xpose.msra.mxu0 0.0
    %2683 = vmatprep.subr.mxu0 0.0
    %2684 = vmatpush1.xpose.msra.mxu0 0.0
    %2685 = vmatprep.subr.mxu0 0.0
    %2686 = vmatpush1.xpose.msra.mxu0 0.0
    %2687 = vmatprep.subr.mxu0 0.0
    %2688 = vmatpush1.xpose.msra.mxu0 0.0
    %2689 = vmatprep.subr.mxu0 0.0
    %2690 = vmatpush1.xpose.msra.mxu0 0.0
    %2691 = vmatprep.subr.mxu0 0.0
    %2692 = vmatpush1.xpose.msra.mxu0 0.0
    %2693 = vmatprep.subr.mxu0 0.0
    %2694 = vmatpush1.xpose.msra.mxu0 0.0
    %2695 = vmatprep.subr.mxu0 0.0
    %2696 = vmatpush1.xpose.msra.mxu0 0.0
    %2697 = vmatprep.subr.mxu0 0.0
    %2698 = vmatpush1.xpose.msra.mxu0 0.0
    %2699 = vmatprep.subr.mxu0 0.0
    %2700 = vmatpush1.xpose.msra.mxu0 0.0
    %2701 = vmatprep.subr.mxu0 0.0
    %2702 = vmatpush1.xpose.msra.mxu0 0.0
    %2703 = vmatprep.subr.mxu0 0.0
    %2704 = vmatpush1.xpose.msra.mxu0 0.0
    %2705 = vmatprep.subr.mxu0 0.0
    %2706 = vmatpush1.xpose.msra.mxu0 0.0
    %2707 = vmatprep.subr.mxu0 0.0
    %2708 = vmatpush1.xpose.msra.mxu0 0.0
    %2709 = vmatprep.subr.mxu0 0.0
    %2710 = vmatpush1.xpose.msra.mxu0 0.0
    %2711 = vmatprep.subr.mxu0 0.0
    %2712 = vmatpush1.xpose.msra.mxu0 0.0
    %2713 = vmatprep.mubr.f32.mxu0 0.0
    %2714 = vmatmul.mubr.f32.gmra.mrb[0].mxu0 %v2644
    %v2715 = vpop.f32.mrb[0].mxu0
    %v2716 = vadd.f32 0.0, %v2715
    %v2717 = vpop.f32.mrb[0].mxu0
    %2718 = vdwg.mxu0
    %v2720 = vsel %vm76, %v525, 0
    %v2723 = vsel %vm76, %v1163, 0
    %2725 = vmatprep.subr.mxu0 0.0
    %2726 = vmatpush1.xpose.msra.mxu0 %v2723
    %2727 = vmatprep.subr.mxu0 0.0
    %2728 = vmatpush1.xpose.msra.mxu0 0.0
    %2729 = vmatprep.subr.mxu0 0.0
    %2730 = vmatpush1.xpose.msra.mxu0 0.0
    %2731 = vmatprep.subr.mxu0 0.0
    %2732 = vmatpush1.xpose.msra.mxu0 0.0
    %2733 = vmatprep.subr.mxu0 0.0
    %2734 = vmatpush1.xpose.msra.mxu0 0.0
    %2735 = vmatprep.subr.mxu0 0.0
    %2736 = vmatpush1.xpose.msra.mxu0 0.0
    %2737 = vmatprep.subr.mxu0 0.0
    %2738 = vmatpush1.xpose.msra.mxu0 0.0
    %2739 = vmatprep.subr.mxu0 0.0
    %2740 = vmatpush1.xpose.msra.mxu0 0.0
    %2741 = vmatprep.subr.mxu0 0.0
    %2742 = vmatpush1.xpose.msra.mxu0 0.0
    %2743 = vmatprep.subr.mxu0 0.0
    %2744 = vmatpush1.xpose.msra.mxu0 0.0
    %2745 = vmatprep.subr.mxu0 0.0
    %2746 = vmatpush1.xpose.msra.mxu0 0.0
    %2747 = vmatprep.subr.mxu0 0.0
    %2748 = vmatpush1.xpose.msra.mxu0 0.0
    %2749 = vmatprep.subr.mxu0 0.0
    %2750 = vmatpush1.xpose.msra.mxu0 0.0
    %2751 = vmatprep.subr.mxu0 0.0
    %2752 = vmatpush1.xpose.msra.mxu0 0.0
    %2753 = vmatprep.subr.mxu0 0.0
    %2754 = vmatpush1.xpose.msra.mxu0 0.0
    %2755 = vmatprep.subr.mxu0 0.0
    %2756 = vmatpush1.xpose.msra.mxu0 0.0
    %2757 = vmatprep.subr.mxu0 0.0
    %2758 = vmatpush1.xpose.msra.mxu0 0.0
    %2759 = vmatprep.subr.mxu0 0.0
    %2760 = vmatpush1.xpose.msra.mxu0 0.0
    %2761 = vmatprep.subr.mxu0 0.0
    %2762 = vmatpush1.xpose.msra.mxu0 0.0
    %2763 = vmatprep.subr.mxu0 0.0
    %2764 = vmatpush1.xpose.msra.mxu0 0.0
    %2765 = vmatprep.subr.mxu0 0.0
    %2766 = vmatpush1.xpose.msra.mxu0 0.0
    %2767 = vmatprep.subr.mxu0 0.0
    %2768 = vmatpush1.xpose.msra.mxu0 0.0
    %2769 = vmatprep.subr.mxu0 0.0
    %2770 = vmatpush1.xpose.msra.mxu0 0.0
    %2771 = vmatprep.subr.mxu0 0.0
    %2772 = vmatpush1.xpose.msra.mxu0 0.0
    %2773 = vmatprep.subr.mxu0 0.0
    %2774 = vmatpush1.xpose.msra.mxu0 0.0
    %2775 = vmatprep.subr.mxu0 0.0
    %2776 = vmatpush1.xpose.msra.mxu0 0.0
    %2777 = vmatprep.subr.mxu0 0.0
    %2778 = vmatpush1.xpose.msra.mxu0 0.0
    %2779 = vmatprep.subr.mxu0 0.0
    %2780 = vmatpush1.xpose.msra.mxu0 0.0
    %2781 = vmatprep.subr.mxu0 0.0
    %2782 = vmatpush1.xpose.msra.mxu0 0.0
    %2783 = vmatprep.subr.mxu0 0.0
    %2784 = vmatpush1.xpose.msra.mxu0 0.0
    %2785 = vmatprep.subr.mxu0 0.0
    %2786 = vmatpush1.xpose.msra.mxu0 0.0
    %2787 = vmatprep.subr.mxu0 0.0
    %2788 = vmatpush1.xpose.msra.mxu0 0.0
    %2789 = vmatprep.mubr.f32.mxu0 0.0
    %2790 = vmatmul.mubr.f32.gmra.mrb[0].mxu0 %v2720
    %v2791 = vpop.f32.mrb[0].mxu0
    %v2792 = vadd.f32 0.0, %v2791
    %v2793 = vpop.f32.mrb[0].mxu0
    %2794 = vdwg.mxu0
    %v2796 = vsel %vm76, %v530, 0
    %v2799 = vsel %vm76, %v1168, 0
    %2801 = vmatprep.subr.mxu0 0.0
    %2802 = vmatpush1.xpose.msra.mxu0 %v2799
    %2803 = vmatprep.subr.mxu0 0.0
    %2804 = vmatpush1.xpose.msra.mxu0 0.0
    %2805 = vmatprep.subr.mxu0 0.0
    %2806 = vmatpush1.xpose.msra.mxu0 0.0
    %2807 = vmatprep.subr.mxu0 0.0
    %2808 = vmatpush1.xpose.msra.mxu0 0.0
    %2809 = vmatprep.subr.mxu0 0.0
    %2810 = vmatpush1.xpose.msra.mxu0 0.0
    %2811 = vmatprep.subr.mxu0 0.0
    %2812 = vmatpush1.xpose.msra.mxu0 0.0
    %2813 = vmatprep.subr.mxu0 0.0
    %2814 = vmatpush1.xpose.msra.mxu0 0.0
    %2815 = vmatprep.subr.mxu0 0.0
    %2816 = vmatpush1.xpose.msra.mxu0 0.0
    %2817 = vmatprep.subr.mxu0 0.0
    %2818 = vmatpush1.xpose.msra.mxu0 0.0
    %2819 = vmatprep.subr.mxu0 0.0
    %2820 = vmatpush1.xpose.msra.mxu0 0.0
    %2821 = vmatprep.subr.mxu0 0.0
    %2822 = vmatpush1.xpose.msra.mxu0 0.0
    %2823 = vmatprep.subr.mxu0 0.0
    %2824 = vmatpush1.xpose.msra.mxu0 0.0
    %2825 = vmatprep.subr.mxu0 0.0
    %2826 = vmatpush1.xpose.msra.mxu0 0.0
    %2827 = vmatprep.subr.mxu0 0.0
    %2828 = vmatpush1.xpose.msra.mxu0 0.0
    %2829 = vmatprep.subr.mxu0 0.0
    %2830 = vmatpush1.xpose.msra.mxu0 0.0
    %2831 = vmatprep.subr.mxu0 0.0
    %2832 = vmatpush1.xpose.msra.mxu0 0.0
    %2833 = vmatprep.subr.mxu0 0.0
    %2834 = vmatpush1.xpose.msra.mxu0 0.0
    %2835 = vmatprep.subr.mxu0 0.0
    %2836 = vmatpush1.xpose.msra.mxu0 0.0
    %2837 = vmatprep.subr.mxu0 0.0
    %2838 = vmatpush1.xpose.msra.mxu0 0.0
    %2839 = vmatprep.subr.mxu0 0.0
    %2840 = vmatpush1.xpose.msra.mxu0 0.0
    %2841 = vmatprep.subr.mxu0 0.0
    %2842 = vmatpush1.xpose.msra.mxu0 0.0
    %2843 = vmatprep.subr.mxu0 0.0
    %2844 = vmatpush1.xpose.msra.mxu0 0.0
    %2845 = vmatprep.subr.mxu0 0.0
    %2846 = vmatpush1.xpose.msra.mxu0 0.0
    %2847 = vmatprep.subr.mxu0 0.0
    %2848 = vmatpush1.xpose.msra.mxu0 0.0
    %2849 = vmatprep.subr.mxu0 0.0
    %2850 = vmatpush1.xpose.msra.mxu0 0.0
    %2851 = vmatprep.subr.mxu0 0.0
    %2852 = vmatpush1.xpose.msra.mxu0 0.0
    %2853 = vmatprep.subr.mxu0 0.0
    %2854 = vmatpush1.xpose.msra.mxu0 0.0
    %2855 = vmatprep.subr.mxu0 0.0
    %2856 = vmatpush1.xpose.msra.mxu0 0.0
    %2857 = vmatprep.subr.mxu0 0.0
    %2858 = vmatpush1.xpose.msra.mxu0 0.0
    %2859 = vmatprep.subr.mxu0 0.0
    %2860 = vmatpush1.xpose.msra.mxu0 0.0
    %2861 = vmatprep.subr.mxu0 0.0
    %2862 = vmatpush1.xpose.msra.mxu0 0.0
    %2863 = vmatprep.subr.mxu0 0.0
    %2864 = vmatpush1.xpose.msra.mxu0 0.0
    %2865 = vmatprep.mubr.f32.mxu0 0.0
    %2866 = vmatmul.mubr.f32.gmra.mrb[0].mxu0 %v2796
    %v2867 = vpop.f32.mrb[0].mxu0
    %v2868 = vadd.f32 0.0, %v2867
    %v2869 = vpop.f32.mrb[0].mxu0
    %2870 = vdwg.mxu0
    %v2872 = vsel %vm76, %v600, 0
    %v2875 = vsel %vm76, %v1238, 0
    %2877 = vmatprep.subr.mxu0 0.0
    %2878 = vmatpush1.xpose.msra.mxu0 %v2875
    %2879 = vmatprep.subr.mxu0 0.0
    %2880 = vmatpush1.xpose.msra.mxu0 0.0
    %2881 = vmatprep.subr.mxu0 0.0
    %2882 = vmatpush1.xpose.msra.mxu0 0.0
    %2883 = vmatprep.subr.mxu0 0.0
    %2884 = vmatpush1.xpose.msra.mxu0 0.0
    %2885 = vmatprep.subr.mxu0 0.0
    %2886 = vmatpush1.xpose.msra.mxu0 0.0
    %2887 = vmatprep.subr.mxu0 0.0
    %2888 = vmatpush1.xpose.msra.mxu0 0.0
    %2889 = vmatprep.subr.mxu0 0.0
    %2890 = vmatpush1.xpose.msra.mxu0 0.0
    %2891 = vmatprep.subr.mxu0 0.0
    %2892 = vmatpush1.xpose.msra.mxu0 0.0
    %2893 = vmatprep.subr.mxu0 0.0
    %2894 = vmatpush1.xpose.msra.mxu0 0.0
    %2895 = vmatprep.subr.mxu0 0.0
    %2896 = vmatpush1.xpose.msra.mxu0 0.0
    %2897 = vmatprep.subr.mxu0 0.0
    %2898 = vmatpush1.xpose.msra.mxu0 0.0
    %2899 = vmatprep.subr.mxu0 0.0
    %2900 = vmatpush1.xpose.msra.mxu0 0.0
    %2901 = vmatprep.subr.mxu0 0.0
    %2902 = vmatpush1.xpose.msra.mxu0 0.0
    %2903 = vmatprep.subr.mxu0 0.0
    %2904 = vmatpush1.xpose.msra.mxu0 0.0
    %2905 = vmatprep.subr.mxu0 0.0
    %2906 = vmatpush1.xpose.msra.mxu0 0.0
    %2907 = vmatprep.subr.mxu0 0.0
    %2908 = vmatpush1.xpose.msra.mxu0 0.0
    %2909 = vmatprep.subr.mxu0 0.0
    %2910 = vmatpush1.xpose.msra.mxu0 0.0
    %2911 = vmatprep.subr.mxu0 0.0
    %2912 = vmatpush1.xpose.msra.mxu0 0.0
    %2913 = vmatprep.subr.mxu0 0.0
    %2914 = vmatpush1.xpose.msra.mxu0 0.0
    %2915 = vmatprep.subr.mxu0 0.0
    %2916 = vmatpush1.xpose.msra.mxu0 0.0
    %2917 = vmatprep.subr.mxu0 0.0
    %2918 = vmatpush1.xpose.msra.mxu0 0.0
    %2919 = vmatprep.subr.mxu0 0.0
    %2920 = vmatpush1.xpose.msra.mxu0 0.0
    %2921 = vmatprep.subr.mxu0 0.0
    %2922 = vmatpush1.xpose.msra.mxu0 0.0
    %2923 = vmatprep.subr.mxu0 0.0
    %2924 = vmatpush1.xpose.msra.mxu0 0.0
    %2925 = vmatprep.subr.mxu0 0.0
    %2926 = vmatpush1.xpose.msra.mxu0 0.0
    %2927 = vmatprep.subr.mxu0 0.0
    %2928 = vmatpush1.xpose.msra.mxu0 0.0
    %2929 = vmatprep.subr.mxu0 0.0
    %2930 = vmatpush1.xpose.msra.mxu0 0.0
    %2931 = vmatprep.subr.mxu0 0.0
    %2932 = vmatpush1.xpose.msra.mxu0 0.0
    %2933 = vmatprep.subr.mxu0 0.0
    %2934 = vmatpush1.xpose.msra.mxu0 0.0
    %2935 = vmatprep.subr.mxu0 0.0
    %2936 = vmatpush1.xpose.msra.mxu0 0.0
    %2937 = vmatprep.subr.mxu0 0.0
    %2938 = vmatpush1.xpose.msra.mxu0 0.0
    %2939 = vmatprep.subr.mxu0 0.0
    %2940 = vmatpush1.xpose.msra.mxu0 0.0
    %2941 = vmatprep.mubr.f32.mxu0 0.0
    %2942 = vmatmul.mubr.f32.gmra.mrb[0].mxu0 %v2872
    %v2943 = vpop.f32.mrb[0].mxu0
    %v2944 = vadd.f32 0.0, %v2943
    %v2945 = vpop.f32.mrb[0].mxu0
    %2946 = vdwg.mxu0
    %v2948 = vsel %vm76, %v605, 0
    %v2951 = vsel %vm76, %v1243, 0
    %2953 = vmatprep.subr.mxu0 0.0
    %2954 = vmatpush1.xpose.msra.mxu0 %v2951
    %2955 = vmatprep.subr.mxu0 0.0
    %2956 = vmatpush1.xpose.msra.mxu0 0.0
    %2957 = vmatprep.subr.mxu0 0.0
    %2958 = vmatpush1.xpose.msra.mxu0 0.0
    %2959 = vmatprep.subr.mxu0 0.0
    %2960 = vmatpush1.xpose.msra.mxu0 0.0
    %2961 = vmatprep.subr.mxu0 0.0
    %2962 = vmatpush1.xpose.msra.mxu0 0.0
    %2963 = vmatprep.subr.mxu0 0.0
    %2964 = vmatpush1.xpose.msra.mxu0 0.0
    %2965 = vmatprep.subr.mxu0 0.0
    %2966 = vmatpush1.xpose.msra.mxu0 0.0
    %2967 = vmatprep.subr.mxu0 0.0
    %2968 = vmatpush1.xpose.msra.mxu0 0.0
    %2969 = vmatprep.subr.mxu0 0.0
    %2970 = vmatpush1.xpose.msra.mxu0 0.0
    %2971 = vmatprep.subr.mxu0 0.0
    %2972 = vmatpush1.xpose.msra.mxu0 0.0
    %2973 = vmatprep.subr.mxu0 0.0
    %2974 = vmatpush1.xpose.msra.mxu0 0.0
    %2975 = vmatprep.subr.mxu0 0.0
    %2976 = vmatpush1.xpose.msra.mxu0 0.0
    %2977 = vmatprep.subr.mxu0 0.0
    %2978 = vmatpush1.xpose.msra.mxu0 0.0
    %2979 = vmatprep.subr.mxu0 0.0
    %2980 = vmatpush1.xpose.msra.mxu0 0.0
    %2981 = vmatprep.subr.mxu0 0.0
    %2982 = vmatpush1.xpose.msra.mxu0 0.0
    %2983 = vmatprep.subr.mxu0 0.0
    %2984 = vmatpush1.xpose.msra.mxu0 0.0
    %2985 = vmatprep.subr.mxu0 0.0
    %2986 = vmatpush1.xpose.msra.mxu0 0.0
    %2987 = vmatprep.subr.mxu0 0.0
    %2988 = vmatpush1.xpose.msra.mxu0 0.0
    %2989 = vmatprep.subr.mxu0 0.0
    %2990 = vmatpush1.xpose.msra.mxu0 0.0
    %2991 = vmatprep.subr.mxu0 0.0
    %2992 = vmatpush1.xpose.msra.mxu0 0.0
    %2993 = vmatprep.subr.mxu0 0.0
    %2994 = vmatpush1.xpose.msra.mxu0 0.0
    %2995 = vmatprep.subr.mxu0 0.0
    %2996 = vmatpush1.xpose.msra.mxu0 0.0
    %2997 = vmatprep.subr.mxu0 0.0
    %2998 = vmatpush1.xpose.msra.mxu0 0.0
    %2999 = vmatprep.subr.mxu0 0.0
    %3000 = vmatpush1.xpose.msra.mxu0 0.0
    %3001 = vmatprep.subr.mxu0 0.0
    %3002 = vmatpush1.xpose.msra.mxu0 0.0
    %3003 = vmatprep.subr.mxu0 0.0
    %3004 = vmatpush1.xpose.msra.mxu0 0.0
    %3005 = vmatprep.subr.mxu0 0.0
    %3006 = vmatpush1.xpose.msra.mxu0 0.0
    %3007 = vmatprep.subr.mxu0 0.0
    %3008 = vmatpush1.xpose.msra.mxu0 0.0
    %3009 = vmatprep.subr.mxu0 0.0
    %3010 = vmatpush1.xpose.msra.mxu0 0.0
    %3011 = vmatprep.subr.mxu0 0.0
    %3012 = vmatpush1.xpose.msra.mxu0 0.0
    %3013 = vmatprep.subr.mxu0 0.0
    %3014 = vmatpush1.xpose.msra.mxu0 0.0
    %3015 = vmatprep.subr.mxu0 0.0
    %3016 = vmatpush1.xpose.msra.mxu0 0.0
    %3017 = vmatprep.mubr.f32.mxu0 0.0
    %3018 = vmatmul.mubr.f32.gmra.mrb[0].mxu0 %v2948
    %v3019 = vpop.f32.mrb[0].mxu0
    %v3020 = vadd.f32 0.0, %v3019
    %v3021 = vpop.f32.mrb[0].mxu0
    %3022 = vdwg.mxu0
    %v3024 = vsel %vm76, %v675, 0
    %v3027 = vsel %vm76, %v1313, 0
    %3029 = vmatprep.subr.mxu0 0.0
    %3030 = vmatpush1.xpose.msra.mxu0 %v3027
    %3031 = vmatprep.subr.mxu0 0.0
    %3032 = vmatpush1.xpose.msra.mxu0 0.0
    %3033 = vmatprep.subr.mxu0 0.0
    %3034 = vmatpush1.xpose.msra.mxu0 0.0
    %3035 = vmatprep.subr.mxu0 0.0
    %3036 = vmatpush1.xpose.msra.mxu0 0.0
    %3037 = vmatprep.subr.mxu0 0.0
    %3038 = vmatpush1.xpose.msra.mxu0 0.0
    %3039 = vmatprep.subr.mxu0 0.0
    %3040 = vmatpush1.xpose.msra.mxu0 0.0
    %3041 = vmatprep.subr.mxu0 0.0
    %3042 = vmatpush1.xpose.msra.mxu0 0.0
    %3043 = vmatprep.subr.mxu0 0.0
    %3044 = vmatpush1.xpose.msra.mxu0 0.0
    %3045 = vmatprep.subr.mxu0 0.0
    %3046 = vmatpush1.xpose.msra.mxu0 0.0
    %3047 = vmatprep.subr.mxu0 0.0
    %3048 = vmatpush1.xpose.msra.mxu0 0.0
    %3049 = vmatprep.subr.mxu0 0.0
    %3050 = vmatpush1.xpose.msra.mxu0 0.0
    %3051 = vmatprep.subr.mxu0 0.0
    %3052 = vmatpush1.xpose.msra.mxu0 0.0
    %3053 = vmatprep.subr.mxu0 0.0
    %3054 = vmatpush1.xpose.msra.mxu0 0.0
    %3055 = vmatprep.subr.mxu0 0.0
    %3056 = vmatpush1.xpose.msra.mxu0 0.0
    %3057 = vmatprep.subr.mxu0 0.0
    %3058 = vmatpush1.xpose.msra.mxu0 0.0
    %3059 = vmatprep.subr.mxu0 0.0
    %3060 = vmatpush1.xpose.msra.mxu0 0.0
    %3061 = vmatprep.subr.mxu0 0.0
    %3062 = vmatpush1.xpose.msra.mxu0 0.0
    %3063 = vmatprep.subr.mxu0 0.0
    %3064 = vmatpush1.xpose.msra.mxu0 0.0
    %3065 = vmatprep.subr.mxu0 0.0
    %3066 = vmatpush1.xpose.msra.mxu0 0.0
    %3067 = vmatprep.subr.mxu0 0.0
    %3068 = vmatpush1.xpose.msra.mxu0 0.0
    %3069 = vmatprep.subr.mxu0 0.0
    %3070 = vmatpush1.xpose.msra.mxu0 0.0
    %3071 = vmatprep.subr.mxu0 0.0
    %3072 = vmatpush1.xpose.msra.mxu0 0.0
    %3073 = vmatprep.subr.mxu0 0.0
    %3074 = vmatpush1.xpose.msra.mxu0 0.0
    %3075 = vmatprep.subr.mxu0 0.0
    %3076 = vmatpush1.xpose.msra.mxu0 0.0
    %3077 = vmatprep.subr.mxu0 0.0
    %3078 = vmatpush1.xpose.msra.mxu0 0.0
    %3079 = vmatprep.subr.mxu0 0.0
    %3080 = vmatpush1.xpose.msra.mxu0 0.0
    %3081 = vmatprep.subr.mxu0 0.0
    %3082 = vmatpush1.xpose.msra.mxu0 0.0
    %3083 = vmatprep.subr.mxu0 0.0
    %3084 = vmatpush1.xpose.msra.mxu0 0.0
    %3085 = vmatprep.subr.mxu0 0.0
    %3086 = vmatpush1.xpose.msra.mxu0 0.0
    %3087 = vmatprep.subr.mxu0 0.0
    %3088 = vmatpush1.xpose.msra.mxu0 0.0
    %3089 = vmatprep.subr.mxu0 0.0
    %3090 = vmatpush1.xpose.msra.mxu0 0.0
    %3091 = vmatprep.subr.mxu0 0.0
    %3092 = vmatpush1.xpose.msra.mxu0 0.0
    %3093 = vmatprep.mubr.f32.mxu0 0.0
    %3094 = vmatmul.mubr.f32.gmra.mrb[0].mxu0 %v3024
    %v3095 = vpop.f32.mrb[0].mxu0
    %v3096 = vadd.f32 0.0, %v3095
    %v3097 = vpop.f32.mrb[0].mxu0
    %3098 = vdwg.mxu0
    %v3100 = vsel %vm76, %v680, 0
    %v3103 = vsel %vm76, %v1318, 0
    %3105 = vmatprep.subr.mxu0 0.0
    %3106 = vmatpush1.xpose.msra.mxu0 %v3103
    %3107 = vmatprep.subr.mxu0 0.0
    %3108 = vmatpush1.xpose.msra.mxu0 0.0
    %3109 = vmatprep.subr.mxu0 0.0
    %3110 = vmatpush1.xpose.msra.mxu0 0.0
    %3111 = vmatprep.subr.mxu0 0.0
    %3112 = vmatpush1.xpose.msra.mxu0 0.0
    %3113 = vmatprep.subr.mxu0 0.0
    %3114 = vmatpush1.xpose.msra.mxu0 0.0
    %3115 = vmatprep.subr.mxu0 0.0
    %3116 = vmatpush1.xpose.msra.mxu0 0.0
    %3117 = vmatprep.subr.mxu0 0.0
    %3118 = vmatpush1.xpose.msra.mxu0 0.0
    %3119 = vmatprep.subr.mxu0 0.0
    %3120 = vmatpush1.xpose.msra.mxu0 0.0
    %3121 = vmatprep.subr.mxu0 0.0
    %3122 = vmatpush1.xpose.msra.mxu0 0.0
    %3123 = vmatprep.subr.mxu0 0.0
    %3124 = vmatpush1.xpose.msra.mxu0 0.0
    %3125 = vmatprep.subr.mxu0 0.0
    %3126 = vmatpush1.xpose.msra.mxu0 0.0
    %3127 = vmatprep.subr.mxu0 0.0
    %3128 = vmatpush1.xpose.msra.mxu0 0.0
    %3129 = vmatprep.subr.mxu0 0.0
    %3130 = vmatpush1.xpose.msra.mxu0 0.0
    %3131 = vmatprep.subr.mxu0 0.0
    %3132 = vmatpush1.xpose.msra.mxu0 0.0
    %3133 = vmatprep.subr.mxu0 0.0
    %3134 = vmatpush1.xpose.msra.mxu0 0.0
    %3135 = vmatprep.subr.mxu0 0.0
    %3136 = vmatpush1.xpose.msra.mxu0 0.0
    %3137 = vmatprep.subr.mxu0 0.0
    %3138 = vmatpush1.xpose.msra.mxu0 0.0
    %3139 = vmatprep.subr.mxu0 0.0
    %3140 = vmatpush1.xpose.msra.mxu0 0.0
    %3141 = vmatprep.subr.mxu0 0.0
    %3142 = vmatpush1.xpose.msra.mxu0 0.0
    %3143 = vmatprep.subr.mxu0 0.0
    %3144 = vmatpush1.xpose.msra.mxu0 0.0
    %3145 = vmatprep.subr.mxu0 0.0
    %3146 = vmatpush1.xpose.msra.mxu0 0.0
    %3147 = vmatprep.subr.mxu0 0.0
    %3148 = vmatpush1.xpose.msra.mxu0 0.0
    %3149 = vmatprep.subr.mxu0 0.0
    %3150 = vmatpush1.xpose.msra.mxu0 0.0
    %3151 = vmatprep.subr.mxu0 0.0
    %3152 = vmatpush1.xpose.msra.mxu0 0.0
    %3153 = vmatprep.subr.mxu0 0.0
    %3154 = vmatpush1.xpose.msra.mxu0 0.0
    %3155 = vmatprep.subr.mxu0 0.0
    %3156 = vmatpush1.xpose.msra.mxu0 0.0
    %3157 = vmatprep.subr.mxu0 0.0
    %3158 = vmatpush1.xpose.msra.mxu0 0.0
    %3159 = vmatprep.subr.mxu0 0.0
    %3160 = vmatpush1.xpose.msra.mxu0 0.0
    %3161 = vmatprep.subr.mxu0 0.0
    %3162 = vmatpush1.xpose.msra.mxu0 0.0
    %3163 = vmatprep.subr.mxu0 0.0
    %3164 = vmatpush1.xpose.msra.mxu0 0.0
    %3165 = vmatprep.subr.mxu0 0.0
    %3166 = vmatpush1.xpose.msra.mxu0 0.0
    %3167 = vmatprep.subr.mxu0 0.0
    %3168 = vmatpush1.xpose.msra.mxu0 0.0
    %3169 = vmatprep.mubr.f32.mxu0 0.0
    %3170 = vmatmul.mubr.f32.gmra.mrb[0].mxu0 %v3100
    %v3171 = vpop.f32.mrb[0].mxu0
    %v3172 = vadd.f32 0.0, %v3171
    %v3173 = vpop.f32.mrb[0].mxu0
    %3174 = vdwg.mxu0
    %v3175 = vmul.f32 %v2032, 0.17677669
    %v3176 = vmul.f32 %v2108, 0.17677669
    %v3177 = vmul.f32 %v2184, 0.17677669
    %v3178 = vmul.f32 %v2260, 0.17677669
    %v3179 = vmul.f32 %v2336, 0.17677669
    %v3180 = vmul.f32 %v2412, 0.17677669
    %v3181 = vmul.f32 %v2488, 0.17677669
    %v3182 = vmul.f32 %v2564, 0.17677669
    %v3183 = vmul.f32 %v2640, 0.17677669
    %v3184 = vmul.f32 %v2716, 0.17677669
    %v3185 = vmul.f32 %v2792, 0.17677669
    %v3186 = vmul.f32 %v2868, 0.17677669
    %v3187 = vmul.f32 %v2944, 0.17677669
    %v3188 = vmul.f32 %v3020, 0.17677669
    %v3189 = vmul.f32 %v3096, 0.17677669
    %v3190 = vmul.f32 %v3172, 0.17677669
    %v3191 = vld [vmem:[%s3] sm:$0xff]
    %v3192 = vld [vmem:[%s3 + $0x8] sm:$0xff]
    %v3193 = vld [vmem:[%s3 + $0x10] sm:$0xff]
    %v3194 = vld [vmem:[%s3 + $0x18] sm:$0xff]
    %v3195 = vld [vmem:[%s3 + $0x20] sm:$0xff]
    %v3196 = vld [vmem:[%s3 + $0x28] sm:$0xff]
    %v3197 = vld [vmem:[%s3 + $0x30] sm:$0xff]
    %v3198 = vld [vmem:[%s3 + $0x38] sm:$0xff]
    %v3199 = vld [vmem:[%s3 + $0x40] sm:$0xff]
    %v3200 = vld [vmem:[%s3 + $0x48] sm:$0xff]
    %v3201 = vld [vmem:[%s3 + $0x50] sm:$0xff]
    %v3202 = vld [vmem:[%s3 + $0x58] sm:$0xff]
    %v3203 = vld [vmem:[%s3 + $0x60] sm:$0xff]
    %v3204 = vld [vmem:[%s3 + $0x68] sm:$0xff]
    %v3205 = vld [vmem:[%s3 + $0x70] sm:$0xff]
    %v3206 = vld [vmem:[%s3 + $0x78] sm:$0xff]
    %vm3207 = vcmp.ne.s32.totalorder %v3191, 0
    %vm3208 = vcmp.ne.s32.totalorder %v3192, 0
    %vm3209 = vcmp.ne.s32.totalorder %v3193, 0
    %vm3210 = vcmp.ne.s32.totalorder %v3194, 0
    %vm3211 = vcmp.ne.s32.totalorder %v3195, 0
    %vm3212 = vcmp.ne.s32.totalorder %v3196, 0
    %vm3213 = vcmp.ne.s32.totalorder %v3197, 0
    %vm3214 = vcmp.ne.s32.totalorder %v3198, 0
    %vm3215 = vcmp.ne.s32.totalorder %v3199, 0
    %vm3216 = vcmp.ne.s32.totalorder %v3200, 0
    %vm3217 = vcmp.ne.s32.totalorder %v3201, 0
    %vm3218 = vcmp.ne.s32.totalorder %v3202, 0
    %vm3219 = vcmp.ne.s32.totalorder %v3203, 0
    %vm3220 = vcmp.ne.s32.totalorder %v3204, 0
    %vm3221 = vcmp.ne.s32.totalorder %v3205, 0
    %vm3222 = vcmp.ne.s32.totalorder %v3206, 0
    %v3223 = vsel %vm3207, -1e+09, %v3175
    %v3224 = vsel %vm3208, -1e+09, %v3176
    %v3225 = vsel %vm3209, -1e+09, %v3177
    %v3226 = vsel %vm3210, -1e+09, %v3178
    %v3227 = vsel %vm3211, -1e+09, %v3179
    %v3228 = vsel %vm3212, -1e+09, %v3180
    %v3229 = vsel %vm3213, -1e+09, %v3181
    %v3230 = vsel %vm3214, -1e+09, %v3182
    %v3231 = vsel %vm3215, -1e+09, %v3183
    %v3232 = vsel %vm3216, -1e+09, %v3184
    %v3233 = vsel %vm3217, -1e+09, %v3185
    %v3234 = vsel %vm3218, -1e+09, %v3186
    %v3235 = vsel %vm3219, -1e+09, %v3187
    %v3236 = vsel %vm3220, -1e+09, %v3188
    %v3237 = vsel %vm3221, -1e+09, %v3189
    %v3238 = vsel %vm3222, -1e+09, %v3190
    %vm3239 = vcmask 64512
    %v3240 = vsel %vm3239, %v3223, -inf
    %3241 = vmax.xlane.f32.xlu0 %v3240
    %v3242 = vpop.xlane.xlu0 %3241
    %v3243 = vsel %vm3239, %v3224, -inf
    %3244 = vmax.xlane.f32.xlu0 %v3243
    %v3245 = vpop.xlane.xlu0 %3244
    %v3246 = vsel %vm3239, %v3225, -inf
    %3247 = vmax.xlane.f32.xlu0 %v3246
    %v3248 = vpop.xlane.xlu0 %3247
    %v3249 = vsel %vm3239, %v3226, -inf
    %3250 = vmax.xlane.f32.xlu0 %v3249
    %v3251 = vpop.xlane.xlu0 %3250
    %v3252 = vsel %vm3239, %v3227, -inf
    %3253 = vmax.xlane.f32.xlu0 %v3252
    %v3254 = vpop.xlane.xlu0 %3253
    %v3255 = vsel %vm3239, %v3228, -inf
    %3256 = vmax.xlane.f32.xlu0 %v3255
    %v3257 = vpop.xlane.xlu0 %3256
    %v3258 = vsel %vm3239, %v3229, -inf
    %3259 = vmax.xlane.f32.xlu0 %v3258
    %v3260 = vpop.xlane.xlu0 %3259
    %v3261 = vsel %vm3239, %v3230, -inf
    %3262 = vmax.xlane.f32.xlu0 %v3261
    %v3263 = vpop.xlane.xlu0 %3262
    %v3264 = vsel %vm3239, %v3231, -inf
    %3265 = vmax.xlane.f32.xlu0 %v3264
    %v3266 = vpop.xlane.xlu0 %3265
    %v3267 = vsel %vm3239, %v3232, -inf
    %3268 = vmax.xlane.f32.xlu0 %v3267
    %v3269 = vpop.xlane.xlu0 %3268
    %v3270 = vsel %vm3239, %v3233, -inf
    %3271 = vmax.xlane.f32.xlu0 %v3270
    %v3272 = vpop.xlane.xlu0 %3271
    %v3273 = vsel %vm3239, %v3234, -inf
    %3274 = vmax.xlane.f32.xlu0 %v3273
    %v3275 = vpop.xlane.xlu0 %3274
    %v3276 = vsel %vm3239, %v3235, -inf
    %3277 = vmax.xlane.f32.xlu0 %v3276
    %v3278 = vpop.xlane.xlu0 %3277
    %v3279 = vsel %vm3239, %v3236, -inf
    %3280 = vmax.xlane.f32.xlu0 %v3279
    %v3281 = vpop.xlane.xlu0 %3280
    %v3282 = vsel %vm3239, %v3237, -inf
    %3283 = vmax.xlane.f32.xlu0 %v3282
    %v3284 = vpop.xlane.xlu0 %3283
    %v3285 = vsel %vm3239, %v3238, -inf
    %3286 = vmax.xlane.f32.xlu0 %v3285
    %v3287 = vpop.xlane.xlu0 %3286
    %v3288 = vsub.f32 %v3223, %v3242
    %v3289 = vsub.f32 %v3224, %v3245
    %v3290 = vsub.f32 %v3225, %v3248
    %v3291 = vsub.f32 %v3226, %v3251
    %v3292 = vsub.f32 %v3227, %v3254
    %v3293 = vsub.f32 %v3228, %v3257
    %v3294 = vsub.f32 %v3229, %v3260
    %v3295 = vsub.f32 %v3230, %v3263
    %v3296 = vsub.f32 %v3231, %v3266
    %v3297 = vsub.f32 %v3232, %v3269
    %v3298 = vsub.f32 %v3233, %v3272
    %v3299 = vsub.f32 %v3234, %v3275
    %v3300 = vsub.f32 %v3235, %v3278
    %v3301 = vsub.f32 %v3236, %v3281
    %v3302 = vsub.f32 %v3237, %v3284
    %v3303 = vsub.f32 %v3238, %v3287
    %v3304 = vmul.f32 %v3288, 1.442695
    %v3305 = vpow.pop %v3304
    %v3306 = vmul.f32 %v3289, 1.442695
    %v3307 = vpow.pop %v3306
    %v3308 = vmul.f32 %v3290, 1.442695
    %v3309 = vpow.pop %v3308
    %v3310 = vmul.f32 %v3291, 1.442695
    %v3311 = vpow.pop %v3310
    %v3312 = vmul.f32 %v3292, 1.442695
    %v3313 = vpow.pop %v3312
    %v3314 = vmul.f32 %v3293, 1.442695
    %v3315 = vpow.pop %v3314
    %v3316 = vmul.f32 %v3294, 1.442695
    %v3317 = vpow.pop %v3316
    %v3318 = vmul.f32 %v3295, 1.442695
    %v3319 = vpow.pop %v3318
    %v3320 = vmul.f32 %v3296, 1.442695
    %v3321 = vpow.pop %v3320
    %v3322 = vmul.f32 %v3297, 1.442695
    %v3323 = vpow.pop %v3322
    %v3324 = vmul.f32 %v3298, 1.442695
    %v3325 = vpow.pop %v3324
    %v3326 = vmul.f32 %v3299, 1.442695
    %v3327 = vpow.pop %v3326
    %v3328 = vmul.f32 %v3300, 1.442695
    %v3329 = vpow.pop %v3328
    %v3330 = vmul.f32 %v3301, 1.442695
    %v3331 = vpow.pop %v3330
    %v3332 = vmul.f32 %v3302, 1.442695
    %v3333 = vpow.pop %v3332
    %v3334 = vmul.f32 %v3303, 1.442695
    %v3335 = vpow.pop %v3334
    %v3336 = vsel %vm3239, %v3305, 0.0
    %3337 = vadd.xlane.f32.xlu0 %v3336
    %v3338 = vpop.xlane.xlu0 %3337
    %v3339 = vsel %vm3239, %v3307, 0.0
    %3340 = vadd.xlane.f32.xlu0 %v3339
    %v3341 = vpop.xlane.xlu0 %3340
    %v3342 = vsel %vm3239, %v3309, 0.0
    %3343 = vadd.xlane.f32.xlu0 %v3342
    %v3344 = vpop.xlane.xlu0 %3343
    %v3345 = vsel %vm3239, %v3311, 0.0
    %3346 = vadd.xlane.f32.xlu0 %v3345
    %v3347 = vpop.xlane.xlu0 %3346
    %v3348 = vsel %vm3239, %v3313, 0.0
    %3349 = vadd.xlane.f32.xlu0 %v3348
    %v3350 = vpop.xlane.xlu0 %3349
    %v3351 = vsel %vm3239, %v3315, 0.0
    %3352 = vadd.xlane.f32.xlu0 %v3351
    %v3353 = vpop.xlane.xlu0 %3352
    %v3354 = vsel %vm3239, %v3317, 0.0
    %3355 = vadd.xlane.f32.xlu0 %v3354
    %v3356 = vpop.xlane.xlu0 %3355
    %v3357 = vsel %vm3239, %v3319, 0.0
    %3358 = vadd.xlane.f32.xlu0 %v3357
    %v3359 = vpop.xlane.xlu0 %3358
    %v3360 = vsel %vm3239, %v3321, 0.0
    %3361 = vadd.xlane.f32.xlu0 %v3360
    %v3362 = vpop.xlane.xlu0 %3361
    %v3363 = vsel %vm3239, %v3323, 0.0
    %3364 = vadd.xlane.f32.xlu0 %v3363
    %v3365 = vpop.xlane.xlu0 %3364
    %v3366 = vsel %vm3239, %v3325, 0.0
    %3367 = vadd.xlane.f32.xlu0 %v3366
    %v3368 = vpop.xlane.xlu0 %3367
    %v3369 = vsel %vm3239, %v3327, 0.0
    %3370 = vadd.xlane.f32.xlu0 %v3369
    %v3371 = vpop.xlane.xlu0 %3370
    %v3372 = vsel %vm3239, %v3329, 0.0
    %3373 = vadd.xlane.f32.xlu0 %v3372
    %v3374 = vpop.xlane.xlu0 %3373
    %v3375 = vsel %vm3239, %v3331, 0.0
    %3376 = vadd.xlane.f32.xlu0 %v3375
    %v3377 = vpop.xlane.xlu0 %3376
    %v3378 = vsel %vm3239, %v3333, 0.0
    %3379 = vadd.xlane.f32.xlu0 %v3378
    %v3380 = vpop.xlane.xlu0 %3379
    %v3381 = vsel %vm3239, %v3335, 0.0
    %3382 = vadd.xlane.f32.xlu0 %v3381
    %v3383 = vpop.xlane.xlu0 %3382
    %v3384 = vrcp.pop %v3338
    %v3385 = vrcp.pop %v3341
    %v3386 = vrcp.pop %v3344
    %v3387 = vrcp.pop %v3347
    %v3388 = vrcp.pop %v3350
    %v3389 = vrcp.pop %v3353
    %v3390 = vrcp.pop %v3356
    %v3391 = vrcp.pop %v3359
    %v3392 = vrcp.pop %v3362
    %v3393 = vrcp.pop %v3365
    %v3394 = vrcp.pop %v3368
    %v3395 = vrcp.pop %v3371
    %v3396 = vrcp.pop %v3374
    %v3397 = vrcp.pop %v3377
    %v3398 = vrcp.pop %v3380
    %v3399 = vrcp.pop %v3383
    %v3400 = vmul.f32 %v3305, %v3384
    %v3401 = vmul.f32 %v3307, %v3385
    %v3402 = vmul.f32 %v3309, %v3386
    %v3403 = vmul.f32 %v3311, %v3387
    %v3404 = vmul.f32 %v3313, %v3388
    %v3405 = vmul.f32 %v3315, %v3389
    %v3406 = vmul.f32 %v3317, %v3390
    %v3407 = vmul.f32 %v3319, %v3391
    %v3408 = vmul.f32 %v3321, %v3392
    %v3409 = vmul.f32 %v3323, %v3393
    %v3410 = vmul.f32 %v3325, %v3394
    %v3411 = vmul.f32 %v3327, %v3395
    %v3412 = vmul.f32 %v3329, %v3396
    %v3413 = vmul.f32 %v3331, %v3397
    %v3414 = vmul.f32 %v3333, %v3398
    %v3415 = vmul.f32 %v3335, %v3399
    %3416 = vst.msk [vmem:[%s11] sm:$0xff] %vm3239, %v3400
    %3417 = vst.msk [vmem:[%s11 + $0x8] sm:$0xff] %vm3239, %v3401
    %3418 = vst.msk [vmem:[%s11 + $0x10] sm:$0xff] %vm3239, %v3402
    %3419 = vst.msk [vmem:[%s11 + $0x18] sm:$0xff] %vm3239, %v3403
    %3420 = vst.msk [vmem:[%s11 + $0x20] sm:$0xff] %vm3239, %v3404
    %3421 = vst.msk [vmem:[%s11 + $0x28] sm:$0xff] %vm3239, %v3405
    %3422 = vst.msk [vmem:[%s11 + $0x30] sm:$0xff] %vm3239, %v3406
    %3423 = vst.msk [vmem:[%s11 + $0x38] sm:$0xff] %vm3239, %v3407
    %3424 = vst.msk [vmem:[%s11 + $0x40] sm:$0xff] %vm3239, %v3408
    %3425 = vst.msk [vmem:[%s11 + $0x48] sm:$0xff] %vm3239, %v3409
    %3426 = vst.msk [vmem:[%s11 + $0x50] sm:$0xff] %vm3239, %v3410
    %3427 = vst.msk [vmem:[%s11 + $0x58] sm:$0xff] %vm3239, %v3411
    %3428 = vst.msk [vmem:[%s11 + $0x60] sm:$0xff] %vm3239, %v3412
    %3429 = vst.msk [vmem:[%s11 + $0x68] sm:$0xff] %vm3239, %v3413
    %3430 = vst.msk [vmem:[%s11 + $0x70] sm:$0xff] %vm3239, %v3414
    %3431 = vst.msk [vmem:[%s11 + $0x78] sm:$0xff] %vm3239, %v3415
    %v3433 = vsel %vm3239, %v3400, 0
    %3435 = vmatprep.subr.mxu0 0.0
    %3436 = vmatpush1.msra.mxu0 %v1426
    %3437 = vmatprep.subr.mxu0 0.0
    %3438 = vmatpush1.msra.mxu0 0.0
    %3439 = vmatprep.subr.mxu0 0.0
    %3440 = vmatpush1.msra.mxu0 0.0
    %3441 = vmatprep.subr.mxu0 0.0
    %3442 = vmatpush1.msra.mxu0 0.0
    %3443 = vmatprep.subr.mxu0 0.0
    %3444 = vmatpush1.msra.mxu0 0.0
    %3445 = vmatprep.subr.mxu0 0.0
    %3446 = vmatpush1.msra.mxu0 0.0
    %3447 = vmatprep.subr.mxu0 0.0
    %3448 = vmatpush1.msra.mxu0 0.0
    %3449 = vmatprep.subr.mxu0 0.0
    %3450 = vmatpush1.msra.mxu0 0.0
    %3451 = vmatprep.subr.mxu0 0.0
    %3452 = vmatpush1.msra.mxu0 0.0
    %3453 = vmatprep.subr.mxu0 0.0
    %3454 = vmatpush1.msra.mxu0 0.0
    %3455 = vmatprep.subr.mxu0 0.0
    %3456 = vmatpush1.msra.mxu0 0.0
    %3457 = vmatprep.subr.mxu0 0.0
    %3458 = vmatpush1.msra.mxu0 0.0
    %3459 = vmatprep.subr.mxu0 0.0
    %3460 = vmatpush1.msra.mxu0 0.0
    %3461 = vmatprep.subr.mxu0 0.0
    %3462 = vmatpush1.msra.mxu0 0.0
    %3463 = vmatprep.subr.mxu0 0.0
    %3464 = vmatpush1.msra.mxu0 0.0
    %3465 = vmatprep.subr.mxu0 0.0
    %3466 = vmatpush1.msra.mxu0 0.0
    %3467 = vmatprep.subr.mxu0 0.0
    %3468 = vmatpush1.msra.mxu0 0.0
    %3469 = vmatprep.subr.mxu0 0.0
    %3470 = vmatpush1.msra.mxu0 0.0
    %3471 = vmatprep.subr.mxu0 0.0
    %3472 = vmatpush1.msra.mxu0 0.0
    %3473 = vmatprep.subr.mxu0 0.0
    %3474 = vmatpush1.msra.mxu0 0.0
    %3475 = vmatprep.subr.mxu0 0.0
    %3476 = vmatpush1.msra.mxu0 0.0
    %3477 = vmatprep.subr.mxu0 0.0
    %3478 = vmatpush1.msra.mxu0 0.0
    %3479 = vmatprep.subr.mxu0 0.0
    %3480 = vmatpush1.msra.mxu0 0.0
    %3481 = vmatprep.subr.mxu0 0.0
    %3482 = vmatpush1.msra.mxu0 0.0
    %3483 = vmatprep.subr.mxu0 0.0
    %3484 = vmatpush1.msra.mxu0 0.0
    %3485 = vmatprep.subr.mxu0 0.0
    %3486 = vmatpush1.msra.mxu0 0.0
    %3487 = vmatprep.subr.mxu0 0.0
    %3488 = vmatpush1.msra.mxu0 0.0
    %3489 = vmatprep.subr.mxu0 0.0
    %3490 = vmatpush1.msra.mxu0 0.0
    %3491 = vmatprep.subr.mxu0 0.0
    %3492 = vmatpush1.msra.mxu0 0.0
    %3493 = vmatprep.subr.mxu0 0.0
    %3494 = vmatpush1.msra.mxu0 0.0
    %3495 = vmatprep.subr.mxu0 0.0
    %3496 = vmatpush1.msra.mxu0 0.0
    %3497 = vmatprep.subr.mxu0 0.0
    %3498 = vmatpush1.msra.mxu0 0.0
    %3499 = vmatprep.mubr.f32.mxu0 0.0
    %3500 = vmatmul.mubr.f32.gmra.mrb[0].mxu0 %v3433
    %v3501 = vpop.f32.mrb[0].mxu0
    %v3502 = vadd.f32 0.0, %v3501
    %v3503 = vpop.f32.mrb[0].mxu0
    %3504 = vdwg.mxu0
    %v3506 = vsel %vm3239, %v3401, 0
    %3508 = vmatprep.subr.mxu0 0.0
    %3509 = vmatpush1.msra.mxu0 %v1431
    %3510 = vmatprep.subr.mxu0 0.0
    %3511 = vmatpush1.msra.mxu0 0.0
    %3512 = vmatprep.subr.mxu0 0.0
    %3513 = vmatpush1.msra.mxu0 0.0
    %3514 = vmatprep.subr.mxu0 0.0
    %3515 = vmatpush1.msra.mxu0 0.0
    %3516 = vmatprep.subr.mxu0 0.0
    %3517 = vmatpush1.msra.mxu0 0.0
    %3518 = vmatprep.subr.mxu0 0.0
    %3519 = vmatpush1.msra.mxu0 0.0
    %3520 = vmatprep.subr.mxu0 0.0
    %3521 = vmatpush1.msra.mxu0 0.0
    %3522 = vmatprep.subr.mxu0 0.0
    %3523 = vmatpush1.msra.mxu0 0.0
    %3524 = vmatprep.subr.mxu0 0.0
    %3525 = vmatpush1.msra.mxu0 0.0
    %3526 = vmatprep.subr.mxu0 0.0
    %3527 = vmatpush1.msra.mxu0 0.0
    %3528 = vmatprep.subr.mxu0 0.0
    %3529 = vmatpush1.msra.mxu0 0.0
    %3530 = vmatprep.subr.mxu0 0.0
    %3531 = vmatpush1.msra.mxu0 0.0
    %3532 = vmatprep.subr.mxu0 0.0
    %3533 = vmatpush1.msra.mxu0 0.0
    %3534 = vmatprep.subr.mxu0 0.0
    %3535 = vmatpush1.msra.mxu0 0.0
    %3536 = vmatprep.subr.mxu0 0.0
    %3537 = vmatpush1.msra.mxu0 0.0
    %3538 = vmatprep.subr.mxu0 0.0
    %3539 = vmatpush1.msra.mxu0 0.0
    %3540 = vmatprep.subr.mxu0 0.0
    %3541 = vmatpush1.msra.mxu0 0.0
    %3542 = vmatprep.subr.mxu0 0.0
    %3543 = vmatpush1.msra.mxu0 0.0
    %3544 = vmatprep.subr.mxu0 0.0
    %3545 = vmatpush1.msra.mxu0 0.0
    %3546 = vmatprep.subr.mxu0 0.0
    %3547 = vmatpush1.msra.mxu0 0.0
    %3548 = vmatprep.subr.mxu0 0.0
    %3549 = vmatpush1.msra.mxu0 0.0
    %3550 = vmatprep.subr.mxu0 0.0
    %3551 = vmatpush1.msra.mxu0 0.0
    %3552 = vmatprep.subr.mxu0 0.0
    %3553 = vmatpush1.msra.mxu0 0.0
    %3554 = vmatprep.subr.mxu0 0.0
    %3555 = vmatpush1.msra.mxu0 0.0
    %3556 = vmatprep.subr.mxu0 0.0
    %3557 = vmatpush1.msra.mxu0 0.0
    %3558 = vmatprep.subr.mxu0 0.0
    %3559 = vmatpush1.msra.mxu0 0.0
    %3560 = vmatprep.subr.mxu0 0.0
    %3561 = vmatpush1.msra.mxu0 0.0
    %3562 = vmatprep.subr.mxu0 0.0
    %3563 = vmatpush1.msra.mxu0 0.0
    %3564 = vmatprep.subr.mxu0 0.0
    %3565 = vmatpush1.msra.mxu0 0.0
    %3566 = vmatprep.subr.mxu0 0.0
    %3567 = vmatpush1.msra.mxu0 0.0
    %3568 = vmatprep.subr.mxu0 0.0
    %3569 = vmatpush1.msra.mxu0 0.0
    %3570 = vmatprep.subr.mxu0 0.0
    %3571 = vmatpush1.msra.mxu0 0.0
    %3572 = vmatprep.mubr.f32.mxu0 0.0
    %3573 = vmatmul.mubr.f32.gmra.mrb[0].mxu0 %v3506
    %v3574 = vpop.f32.mrb[0].mxu0
    %v3575 = vadd.f32 0.0, %v3574
    %v3576 = vpop.f32.mrb[0].mxu0
    %3577 = vdwg.mxu0
    %v3579 = vsel %vm3239, %v3402, 0
    %3581 = vmatprep.subr.mxu0 0.0
    %3582 = vmatpush1.msra.mxu0 %v1501
    %3583 = vmatprep.subr.mxu0 0.0
    %3584 = vmatpush1.msra.mxu0 0.0
    %3585 = vmatprep.subr.mxu0 0.0
    %3586 = vmatpush1.msra.mxu0 0.0
    %3587 = vmatprep.subr.mxu0 0.0
    %3588 = vmatpush1.msra.mxu0 0.0
    %3589 = vmatprep.subr.mxu0 0.0
    %3590 = vmatpush1.msra.mxu0 0.0
    %3591 = vmatprep.subr.mxu0 0.0
    %3592 = vmatpush1.msra.mxu0 0.0
    %3593 = vmatprep.subr.mxu0 0.0
    %3594 = vmatpush1.msra.mxu0 0.0
    %3595 = vmatprep.subr.mxu0 0.0
    %3596 = vmatpush1.msra.mxu0 0.0
    %3597 = vmatprep.subr.mxu0 0.0
    %3598 = vmatpush1.msra.mxu0 0.0
    %3599 = vmatprep.subr.mxu0 0.0
    %3600 = vmatpush1.msra.mxu0 0.0
    %3601 = vmatprep.subr.mxu0 0.0
    %3602 = vmatpush1.msra.mxu0 0.0
    %3603 = vmatprep.subr.mxu0 0.0
    %3604 = vmatpush1.msra.mxu0 0.0
    %3605 = vmatprep.subr.mxu0 0.0
    %3606 = vmatpush1.msra.mxu0 0.0
    %3607 = vmatprep.subr.mxu0 0.0
    %3608 = vmatpush1.msra.mxu0 0.0
    %3609 = vmatprep.subr.mxu0 0.0
    %3610 = vmatpush1.msra.mxu0 0.0
    %3611 = vmatprep.subr.mxu0 0.0
    %3612 = vmatpush1.msra.mxu0 0.0
    %3613 = vmatprep.subr.mxu0 0.0
    %3614 = vmatpush1.msra.mxu0 0.0
    %3615 = vmatprep.subr.mxu0 0.0
    %3616 = vmatpush1.msra.mxu0 0.0
    %3617 = vmatprep.subr.mxu0 0.0
    %3618 = vmatpush1.msra.mxu0 0.0
    %3619 = vmatprep.subr.mxu0 0.0
    %3620 = vmatpush1.msra.mxu0 0.0
    %3621 = vmatprep.subr.mxu0 0.0
    %3622 = vmatpush1.msra.mxu0 0.0
    %3623 = vmatprep.subr.mxu0 0.0
    %3624 = vmatpush1.msra.mxu0 0.0
    %3625 = vmatprep.subr.mxu0 0.0
    %3626 = vmatpush1.msra.mxu0 0.0
    %3627 = vmatprep.subr.mxu0 0.0
    %3628 = vmatpush1.msra.mxu0 0.0
    %3629 = vmatprep.subr.mxu0 0.0
    %3630 = vmatpush1.msra.mxu0 0.0
    %3631 = vmatprep.subr.mxu0 0.0
    %3632 = vmatpush1.msra.mxu0 0.0
    %3633 = vmatprep.subr.mxu0 0.0
    %3634 = vmatpush1.msra.mxu0 0.0
    %3635 = vmatprep.subr.mxu0 0.0
    %3636 = vmatpush1.msra.mxu0 0.0
    %3637 = vmatprep.subr.mxu0 0.0
    %3638 = vmatpush1.msra.mxu0 0.0
    %3639 = vmatprep.subr.mxu0 0.0
    %3640 = vmatpush1.msra.mxu0 0.0
    %3641 = vmatprep.subr.mxu0 0.0
    %3642 = vmatpush1.msra.mxu0 0.0
    %3643 = vmatprep.subr.mxu0 0.0
    %3644 = vmatpush1.msra.mxu0 0.0
    %3645 = vmatprep.mubr.f32.mxu0 0.0
    %3646 = vmatmul.mubr.f32.gmra.mrb[0].mxu0 %v3579
    %v3647 = vpop.f32.mrb[0].mxu0
    %v3648 = vadd.f32 0.0, %v3647
    %v3649 = vpop.f32.mrb[0].mxu0
    %3650 = vdwg.mxu0
    %v3652 = vsel %vm3239, %v3403, 0
    %3654 = vmatprep.subr.mxu0 0.0
    %3655 = vmatpush1.msra.mxu0 %v1506
    %3656 = vmatprep.subr.mxu0 0.0
    %3657 = vmatpush1.msra.mxu0 0.0
    %3658 = vmatprep.subr.mxu0 0.0
    %3659 = vmatpush1.msra.mxu0 0.0
    %3660 = vmatprep.subr.mxu0 0.0
    %3661 = vmatpush1.msra.mxu0 0.0
    %3662 = vmatprep.subr.mxu0 0.0
    %3663 = vmatpush1.msra.mxu0 0.0
    %3664 = vmatprep.subr.mxu0 0.0
    %3665 = vmatpush1.msra.mxu0 0.0
    %3666 = vmatprep.subr.mxu0 0.0
    %3667 = vmatpush1.msra.mxu0 0.0
    %3668 = vmatprep.subr.mxu0 0.0
    %3669 = vmatpush1.msra.mxu0 0.0
    %3670 = vmatprep.subr.mxu0 0.0
    %3671 = vmatpush1.msra.mxu0 0.0
    %3672 = vmatprep.subr.mxu0 0.0
    %3673 = vmatpush1.msra.mxu0 0.0
    %3674 = vmatprep.subr.mxu0 0.0
    %3675 = vmatpush1.msra.mxu0 0.0
    %3676 = vmatprep.subr.mxu0 0.0
    %3677 = vmatpush1.msra.mxu0 0.0
    %3678 = vmatprep.subr.mxu0 0.0
    %3679 = vmatpush1.msra.mxu0 0.0
    %3680 = vmatprep.subr.mxu0 0.0
    %3681 = vmatpush1.msra.mxu0 0.0
    %3682 = vmatprep.subr.mxu0 0.0
    %3683 = vmatpush1.msra.mxu0 0.0
    %3684 = vmatprep.subr.mxu0 0.0
    %3685 = vmatpush1.msra.mxu0 0.0
    %3686 = vmatprep.subr.mxu0 0.0
    %3687 = vmatpush1.msra.mxu0 0.0
    %3688 = vmatprep.subr.mxu0 0.0
    %3689 = vmatpush1.msra.mxu0 0.0
    %3690 = vmatprep.subr.mxu0 0.0
    %3691 = vmatpush1.msra.mxu0 0.0
    %3692 = vmatprep.subr.mxu0 0.0
    %3693 = vmatpush1.msra.mxu0 0.0
    %3694 = vmatprep.subr.mxu0 0.0
    %3695 = vmatpush1.msra.mxu0 0.0
    %3696 = vmatprep.subr.mxu0 0.0
    %3697 = vmatpush1.msra.mxu0 0.0
    %3698 = vmatprep.subr.mxu0 0.0
    %3699 = vmatpush1.msra.mxu0 0.0
    %3700 = vmatprep.subr.mxu0 0.0
    %3701 = vmatpush1.msra.mxu0 0.0
    %3702 = vmatprep.subr.mxu0 0.0
    %3703 = vmatpush1.msra.mxu0 0.0
    %3704 = vmatprep.subr.mxu0 0.0
    %3705 = vmatpush1.msra.mxu0 0.0
    %3706 = vmatprep.subr.mxu0 0.0
    %3707 = vmatpush1.msra.mxu0 0.0
    %3708 = vmatprep.subr.mxu0 0.0
    %3709 = vmatpush1.msra.mxu0 0.0
    %3710 = vmatprep.subr.mxu0 0.0
    %3711 = vmatpush1.msra.mxu0 0.0
    %3712 = vmatprep.subr.mxu0 0.0
    %3713 = vmatpush1.msra.mxu0 0.0
    %3714 = vmatprep.subr.mxu0 0.0
    %3715 = vmatpush1.msra.mxu0 0.0
    %3716 = vmatprep.subr.mxu0 0.0
    %3717 = vmatpush1.msra.mxu0 0.0
    %3718 = vmatprep.mubr.f32.mxu0 0.0
    %3719 = vmatmul.mubr.f32.gmra.mrb[0].mxu0 %v3652
    %v3720 = vpop.f32.mrb[0].mxu0
    %v3721 = vadd.f32 0.0, %v3720
    %v3722 = vpop.f32.mrb[0].mxu0
    %3723 = vdwg.mxu0
    %v3725 = vsel %vm3239, %v3404, 0
    %3727 = vmatprep.subr.mxu0 0.0
    %3728 = vmatpush1.msra.mxu0 %v1576
    %3729 = vmatprep.subr.mxu0 0.0
    %3730 = vmatpush1.msra.mxu0 0.0
    %3731 = vmatprep.subr.mxu0 0.0
    %3732 = vmatpush1.msra.mxu0 0.0
    %3733 = vmatprep.subr.mxu0 0.0
    %3734 = vmatpush1.msra.mxu0 0.0
    %3735 = vmatprep.subr.mxu0 0.0
    %3736 = vmatpush1.msra.mxu0 0.0
    %3737 = vmatprep.subr.mxu0 0.0
    %3738 = vmatpush1.msra.mxu0 0.0
    %3739 = vmatprep.subr.mxu0 0.0
    %3740 = vmatpush1.msra.mxu0 0.0
    %3741 = vmatprep.subr.mxu0 0.0
    %3742 = vmatpush1.msra.mxu0 0.0
    %3743 = vmatprep.subr.mxu0 0.0
    %3744 = vmatpush1.msra.mxu0 0.0
    %3745 = vmatprep.subr.mxu0 0.0
    %3746 = vmatpush1.msra.mxu0 0.0
    %3747 = vmatprep.subr.mxu0 0.0
    %3748 = vmatpush1.msra.mxu0 0.0
    %3749 = vmatprep.subr.mxu0 0.0
    %3750 = vmatpush1.msra.mxu0 0.0
    %3751 = vmatprep.subr.mxu0 0.0
    %3752 = vmatpush1.msra.mxu0 0.0
    %3753 = vmatprep.subr.mxu0 0.0
    %3754 = vmatpush1.msra.mxu0 0.0
    %3755 = vmatprep.subr.mxu0 0.0
    %3756 = vmatpush1.msra.mxu0 0.0
    %3757 = vmatprep.subr.mxu0 0.0
    %3758 = vmatpush1.msra.mxu0 0.0
    %3759 = vmatprep.subr.mxu0 0.0
    %3760 = vmatpush1.msra.mxu0 0.0
    %3761 = vmatprep.subr.mxu0 0.0
    %3762 = vmatpush1.msra.mxu0 0.0
    %3763 = vmatprep.subr.mxu0 0.0
    %3764 = vmatpush1.msra.mxu0 0.0
    %3765 = vmatprep.subr.mxu0 0.0
    %3766 = vmatpush1.msra.mxu0 0.0
    %3767 = vmatprep.subr.mxu0 0.0
    %3768 = vmatpush1.msra.mxu0 0.0
    %3769 = vmatprep.subr.mxu0 0.0
    %3770 = vmatpush1.msra.mxu0 0.0
    %3771 = vmatprep.subr.mxu0 0.0
    %3772 = vmatpush1.msra.mxu0 0.0
    %3773 = vmatprep.subr.mxu0 0.0
    %3774 = vmatpush1.msra.mxu0 0.0
    %3775 = vmatprep.subr.mxu0 0.0
    %3776 = vmatpush1.msra.mxu0 0.0
    %3777 = vmatprep.subr.mxu0 0.0
    %3778 = vmatpush1.msra.mxu0 0.0
    %3779 = vmatprep.subr.mxu0 0.0
    %3780 = vmatpush1.msra.mxu0 0.0
    %3781 = vmatprep.subr.mxu0 0.0
    %3782 = vmatpush1.msra.mxu0 0.0
    %3783 = vmatprep.subr.mxu0 0.0
    %3784 = vmatpush1.msra.mxu0 0.0
    %3785 = vmatprep.subr.mxu0 0.0
    %3786 = vmatpush1.msra.mxu0 0.0
    %3787 = vmatprep.subr.mxu0 0.0
    %3788 = vmatpush1.msra.mxu0 0.0
    %3789 = vmatprep.subr.mxu0 0.0
    %3790 = vmatpush1.msra.mxu0 0.0
    %3791 = vmatprep.mubr.f32.mxu0 0.0
    %3792 = vmatmul.mubr.f32.gmra.mrb[0].mxu0 %v3725
    %v3793 = vpop.f32.mrb[0].mxu0
    %v3794 = vadd.f32 0.0, %v3793
    %v3795 = vpop.f32.mrb[0].mxu0
    %3796 = vdwg.mxu0
    %v3798 = vsel %vm3239, %v3405, 0
    %3800 = vmatprep.subr.mxu0 0.0
    %3801 = vmatpush1.msra.mxu0 %v1581
    %3802 = vmatprep.subr.mxu0 0.0
    %3803 = vmatpush1.msra.mxu0 0.0
    %3804 = vmatprep.subr.mxu0 0.0
    %3805 = vmatpush1.msra.mxu0 0.0
    %3806 = vmatprep.subr.mxu0 0.0
    %3807 = vmatpush1.msra.mxu0 0.0
    %3808 = vmatprep.subr.mxu0 0.0
    %3809 = vmatpush1.msra.mxu0 0.0
    %3810 = vmatprep.subr.mxu0 0.0
    %3811 = vmatpush1.msra.mxu0 0.0
    %3812 = vmatprep.subr.mxu0 0.0
    %3813 = vmatpush1.msra.mxu0 0.0
    %3814 = vmatprep.subr.mxu0 0.0
    %3815 = vmatpush1.msra.mxu0 0.0
    %3816 = vmatprep.subr.mxu0 0.0
    %3817 = vmatpush1.msra.mxu0 0.0
    %3818 = vmatprep.subr.mxu0 0.0
    %3819 = vmatpush1.msra.mxu0 0.0
    %3820 = vmatprep.subr.mxu0 0.0
    %3821 = vmatpush1.msra.mxu0 0.0
    %3822 = vmatprep.subr.mxu0 0.0
    %3823 = vmatpush1.msra.mxu0 0.0
    %3824 = vmatprep.subr.mxu0 0.0
    %3825 = vmatpush1.msra.mxu0 0.0
    %3826 = vmatprep.subr.mxu0 0.0
    %3827 = vmatpush1.msra.mxu0 0.0
    %3828 = vmatprep.subr.mxu0 0.0
    %3829 = vmatpush1.msra.mxu0 0.0
    %3830 = vmatprep.subr.mxu0 0.0
    %3831 = vmatpush1.msra.mxu0 0.0
    %3832 = vmatprep.subr.mxu0 0.0
    %3833 = vmatpush1.msra.mxu0 0.0
    %3834 = vmatprep.subr.mxu0 0.0
    %3835 = vmatpush1.msra.mxu0 0.0
    %3836 = vmatprep.subr.mxu0 0.0
    %3837 = vmatpush1.msra.mxu0 0.0
    %3838 = vmatprep.subr.mxu0 0.0
    %3839 = vmatpush1.msra.mxu0 0.0
    %3840 = vmatprep.subr.mxu0 0.0
    %3841 = vmatpush1.msra.mxu0 0.0
    %3842 = vmatprep.subr.mxu0 0.0
    %3843 = vmatpush1.msra.mxu0 0.0
    %3844 = vmatprep.subr.mxu0 0.0
    %3845 = vmatpush1.msra.mxu0 0.0
    %3846 = vmatprep.subr.mxu0 0.0
    %3847 = vmatpush1.msra.mxu0 0.0
    %3848 = vmatprep.subr.mxu0 0.0
    %3849 = vmatpush1.msra.mxu0 0.0
    %3850 = vmatprep.subr.mxu0 0.0
    %3851 = vmatpush1.msra.mxu0 0.0
    %3852 = vmatprep.subr.mxu0 0.0
    %3853 = vmatpush1.msra.mxu0 0.0
    %3854 = vmatprep.subr.mxu0 0.0
    %3855 = vmatpush1.msra.mxu0 0.0
    %3856 = vmatprep.subr.mxu0 0.0
    %3857 = vmatpush1.msra.mxu0 0.0
    %3858 = vmatprep.subr.mxu0 0.0
    %3859 = vmatpush1.msra.mxu0 0.0
    %3860 = vmatprep.subr.mxu0 0.0
    %3861 = vmatpush1.msra.mxu0 0.0
    %3862 = vmatprep.subr.mxu0 0.0
    %3863 = vmatpush1.msra.mxu0 0.0
    %3864 = vmatprep.mubr.f32.mxu0 0.0
    %3865 = vmatmul.mubr.f32.gmra.mrb[0].mxu0 %v3798
    %v3866 = vpop.f32.mrb[0].mxu0
    %v3867 = vadd.f32 0.0, %v3866
    %v3868 = vpop.f32.mrb[0].mxu0
    %3869 = vdwg.mxu0
    %v3871 = vsel %vm3239, %v3406, 0
    %3873 = vmatprep.subr.mxu0 0.0
    %3874 = vmatpush1.msra.mxu0 %v1651
    %3875 = vmatprep.subr.mxu0 0.0
    %3876 = vmatpush1.msra.mxu0 0.0
    %3877 = vmatprep.subr.mxu0 0.0
    %3878 = vmatpush1.msra.mxu0 0.0
    %3879 = vmatprep.subr.mxu0 0.0
    %3880 = vmatpush1.msra.mxu0 0.0
    %3881 = vmatprep.subr.mxu0 0.0
    %3882 = vmatpush1.msra.mxu0 0.0
    %3883 = vmatprep.subr.mxu0 0.0
    %3884 = vmatpush1.msra.mxu0 0.0
    %3885 = vmatprep.subr.mxu0 0.0
    %3886 = vmatpush1.msra.mxu0 0.0
    %3887 = vmatprep.subr.mxu0 0.0
    %3888 = vmatpush1.msra.mxu0 0.0
    %3889 = vmatprep.subr.mxu0 0.0
    %3890 = vmatpush1.msra.mxu0 0.0
    %3891 = vmatprep.subr.mxu0 0.0
    %3892 = vmatpush1.msra.mxu0 0.0
    %3893 = vmatprep.subr.mxu0 0.0
    %3894 = vmatpush1.msra.mxu0 0.0
    %3895 = vmatprep.subr.mxu0 0.0
    %3896 = vmatpush1.msra.mxu0 0.0
    %3897 = vmatprep.subr.mxu0 0.0
    %3898 = vmatpush1.msra.mxu0 0.0
    %3899 = vmatprep.subr.mxu0 0.0
    %3900 = vmatpush1.msra.mxu0 0.0
    %3901 = vmatprep.subr.mxu0 0.0
    %3902 = vmatpush1.msra.mxu0 0.0
    %3903 = vmatprep.subr.mxu0 0.0
    %3904 = vmatpush1.msra.mxu0 0.0
    %3905 = vmatprep.subr.mxu0 0.0
    %3906 = vmatpush1.msra.mxu0 0.0
    %3907 = vmatprep.subr.mxu0 0.0
    %3908 = vmatpush1.msra.mxu0 0.0
    %3909 = vmatprep.subr.mxu0 0.0
    %3910 = vmatpush1.msra.mxu0 0.0
    %3911 = vmatprep.subr.mxu0 0.0
    %3912 = vmatpush1.msra.mxu0 0.0
    %3913 = vmatprep.subr.mxu0 0.0
    %3914 = vmatpush1.msra.mxu0 0.0
    %3915 = vmatprep.subr.mxu0 0.0
    %3916 = vmatpush1.msra.mxu0 0.0
    %3917 = vmatprep.subr.mxu0 0.0
    %3918 = vmatpush1.msra.mxu0 0.0
    %3919 = vmatprep.subr.mxu0 0.0
    %3920 = vmatpush1.msra.mxu0 0.0
    %3921 = vmatprep.subr.mxu0 0.0
    %3922 = vmatpush1.msra.mxu0 0.0
    %3923 = vmatprep.subr.mxu0 0.0
    %3924 = vmatpush1.msra.mxu0 0.0
    %3925 = vmatprep.subr.mxu0 0.0
    %3926 = vmatpush1.msra.mxu0 0.0
    %3927 = vmatprep.subr.mxu0 0.0
    %3928 = vmatpush1.msra.mxu0 0.0
    %3929 = vmatprep.subr.mxu0 0.0
    %3930 = vmatpush1.msra.mxu0 0.0
    %3931 = vmatprep.subr.mxu0 0.0
    %3932 = vmatpush1.msra.mxu0 0.0
    %3933 = vmatprep.subr.mxu0 0.0
    %3934 = vmatpush1.msra.mxu0 0.0
    %3935 = vmatprep.subr.mxu0 0.0
    %3936 = vmatpush1.msra.mxu0 0.0
    %3937 = vmatprep.mubr.f32.mxu0 0.0
    %3938 = vmatmul.mubr.f32.gmra.mrb[0].mxu0 %v3871
    %v3939 = vpop.f32.mrb[0].mxu0
    %v3940 = vadd.f32 0.0, %v3939
    %v3941 = vpop.f32.mrb[0].mxu0
    %3942 = vdwg.mxu0
    %v3944 = vsel %vm3239, %v3407, 0
    %3946 = vmatprep.subr.mxu0 0.0
    %3947 = vmatpush1.msra.mxu0 %v1656
    %3948 = vmatprep.subr.mxu0 0.0
    %3949 = vmatpush1.msra.mxu0 0.0
    %3950 = vmatprep.subr.mxu0 0.0
    %3951 = vmatpush1.msra.mxu0 0.0
    %3952 = vmatprep.subr.mxu0 0.0
    %3953 = vmatpush1.msra.mxu0 0.0
    %3954 = vmatprep.subr.mxu0 0.0
    %3955 = vmatpush1.msra.mxu0 0.0
    %3956 = vmatprep.subr.mxu0 0.0
    %3957 = vmatpush1.msra.mxu0 0.0
    %3958 = vmatprep.subr.mxu0 0.0
    %3959 = vmatpush1.msra.mxu0 0.0
    %3960 = vmatprep.subr.mxu0 0.0
    %3961 = vmatpush1.msra.mxu0 0.0
    %3962 = vmatprep.subr.mxu0 0.0
    %3963 = vmatpush1.msra.mxu0 0.0
    %3964 = vmatprep.subr.mxu0 0.0
    %3965 = vmatpush1.msra.mxu0 0.0
    %3966 = vmatprep.subr.mxu0 0.0
    %3967 = vmatpush1.msra.mxu0 0.0
    %3968 = vmatprep.subr.mxu0 0.0
    %3969 = vmatpush1.msra.mxu0 0.0
    %3970 = vmatprep.subr.mxu0 0.0
    %3971 = vmatpush1.msra.mxu0 0.0
    %3972 = vmatprep.subr.mxu0 0.0
    %3973 = vmatpush1.msra.mxu0 0.0
    %3974 = vmatprep.subr.mxu0 0.0
    %3975 = vmatpush1.msra.mxu0 0.0
    %3976 = vmatprep.subr.mxu0 0.0
    %3977 = vmatpush1.msra.mxu0 0.0
    %3978 = vmatprep.subr.mxu0 0.0
    %3979 = vmatpush1.msra.mxu0 0.0
    %3980 = vmatprep.subr.mxu0 0.0
    %3981 = vmatpush1.msra.mxu0 0.0
    %3982 = vmatprep.subr.mxu0 0.0
    %3983 = vmatpush1.msra.mxu0 0.0
    %3984 = vmatprep.subr.mxu0 0.0
    %3985 = vmatpush1.msra.mxu0 0.0
    %3986 = vmatprep.subr.mxu0 0.0
    %3987 = vmatpush1.msra.mxu0 0.0
    %3988 = vmatprep.subr.mxu0 0.0
    %3989 = vmatpush1.msra.mxu0 0.0
    %3990 = vmatprep.subr.mxu0 0.0
    %3991 = vmatpush1.msra.mxu0 0.0
    %3992 = vmatprep.subr.mxu0 0.0
    %3993 = vmatpush1.msra.mxu0 0.0
    %3994 = vmatprep.subr.mxu0 0.0
    %3995 = vmatpush1.msra.mxu0 0.0
    %3996 = vmatprep.subr.mxu0 0.0
    %3997 = vmatpush1.msra.mxu0 0.0
    %3998 = vmatprep.subr.mxu0 0.0
    %3999 = vmatpush1.msra.mxu0 0.0
    %4000 = vmatprep.subr.mxu0 0.0
    %4001 = vmatpush1.msra.mxu0 0.0
    %4002 = vmatprep.subr.mxu0 0.0
    %4003 = vmatpush1.msra.mxu0 0.0
    %4004 = vmatprep.subr.mxu0 0.0
    %4005 = vmatpush1.msra.mxu0 0.0
    %4006 = vmatprep.subr.mxu0 0.0
    %4007 = vmatpush1.msra.mxu0 0.0
    %4008 = vmatprep.subr.mxu0 0.0
    %4009 = vmatpush1.msra.mxu0 0.0
    %4010 = vmatprep.mubr.f32.mxu0 0.0
    %4011 = vmatmul.mubr.f32.gmra.mrb[0].mxu0 %v3944
    %v4012 = vpop.f32.mrb[0].mxu0
    %v4013 = vadd.f32 0.0, %v4012
    %v4014 = vpop.f32.mrb[0].mxu0
    %4015 = vdwg.mxu0
    %v4017 = vsel %vm3239, %v3408, 0
    %4019 = vmatprep.subr.mxu0 0.0
    %4020 = vmatpush1.msra.mxu0 %v1726
    %4021 = vmatprep.subr.mxu0 0.0
    %4022 = vmatpush1.msra.mxu0 0.0
    %4023 = vmatprep.subr.mxu0 0.0
    %4024 = vmatpush1.msra.mxu0 0.0
    %4025 = vmatprep.subr.mxu0 0.0
    %4026 = vmatpush1.msra.mxu0 0.0
    %4027 = vmatprep.subr.mxu0 0.0
    %4028 = vmatpush1.msra.mxu0 0.0
    %4029 = vmatprep.subr.mxu0 0.0
    %4030 = vmatpush1.msra.mxu0 0.0
    %4031 = vmatprep.subr.mxu0 0.0
    %4032 = vmatpush1.msra.mxu0 0.0
    %4033 = vmatprep.subr.mxu0 0.0
    %4034 = vmatpush1.msra.mxu0 0.0
    %4035 = vmatprep.subr.mxu0 0.0
    %4036 = vmatpush1.msra.mxu0 0.0
    %4037 = vmatprep.subr.mxu0 0.0
    %4038 = vmatpush1.msra.mxu0 0.0
    %4039 = vmatprep.subr.mxu0 0.0
    %4040 = vmatpush1.msra.mxu0 0.0
    %4041 = vmatprep.subr.mxu0 0.0
    %4042 = vmatpush1.msra.mxu0 0.0
    %4043 = vmatprep.subr.mxu0 0.0
    %4044 = vmatpush1.msra.mxu0 0.0
    %4045 = vmatprep.subr.mxu0 0.0
    %4046 = vmatpush1.msra.mxu0 0.0
    %4047 = vmatprep.subr.mxu0 0.0
    %4048 = vmatpush1.msra.mxu0 0.0
    %4049 = vmatprep.subr.mxu0 0.0
    %4050 = vmatpush1.msra.mxu0 0.0
    %4051 = vmatprep.subr.mxu0 0.0
    %4052 = vmatpush1.msra.mxu0 0.0
    %4053 = vmatprep.subr.mxu0 0.0
    %4054 = vmatpush1.msra.mxu0 0.0
    %4055 = vmatprep.subr.mxu0 0.0
    %4056 = vmatpush1.msra.mxu0 0.0
    %4057 = vmatprep.subr.mxu0 0.0
    %4058 = vmatpush1.msra.mxu0 0.0
    %4059 = vmatprep.subr.mxu0 0.0
    %4060 = vmatpush1.msra.mxu0 0.0
    %4061 = vmatprep.subr.mxu0 0.0
    %4062 = vmatpush1.msra.mxu0 0.0
    %4063 = vmatprep.subr.mxu0 0.0
    %4064 = vmatpush1.msra.mxu0 0.0
    %4065 = vmatprep.subr.mxu0 0.0
    %4066 = vmatpush1.msra.mxu0 0.0
    %4067 = vmatprep.subr.mxu0 0.0
    %4068 = vmatpush1.msra.mxu0 0.0
    %4069 = vmatprep.subr.mxu0 0.0
    %4070 = vmatpush1.msra.mxu0 0.0
    %4071 = vmatprep.subr.mxu0 0.0
    %4072 = vmatpush1.msra.mxu0 0.0
    %4073 = vmatprep.subr.mxu0 0.0
    %4074 = vmatpush1.msra.mxu0 0.0
    %4075 = vmatprep.subr.mxu0 0.0
    %4076 = vmatpush1.msra.mxu0 0.0
    %4077 = vmatprep.subr.mxu0 0.0
    %4078 = vmatpush1.msra.mxu0 0.0
    %4079 = vmatprep.subr.mxu0 0.0
    %4080 = vmatpush1.msra.mxu0 0.0
    %4081 = vmatprep.subr.mxu0 0.0
    %4082 = vmatpush1.msra.mxu0 0.0
    %4083 = vmatprep.mubr.f32.mxu0 0.0
    %4084 = vmatmul.mubr.f32.gmra.mrb[0].mxu0 %v4017
    %v4085 = vpop.f32.mrb[0].mxu0
    %v4086 = vadd.f32 0.0, %v4085
    %v4087 = vpop.f32.mrb[0].mxu0
    %4088 = vdwg.mxu0
    %v4090 = vsel %vm3239, %v3409, 0
    %4092 = vmatprep.subr.mxu0 0.0
    %4093 = vmatpush1.msra.mxu0 %v1731
    %4094 = vmatprep.subr.mxu0 0.0
    %4095 = vmatpush1.msra.mxu0 0.0
    %4096 = vmatprep.subr.mxu0 0.0
    %4097 = vmatpush1.msra.mxu0 0.0
    %4098 = vmatprep.subr.mxu0 0.0
    %4099 = vmatpush1.msra.mxu0 0.0
    %4100 = vmatprep.subr.mxu0 0.0
    %4101 = vmatpush1.msra.mxu0 0.0
    %4102 = vmatprep.subr.mxu0 0.0
    %4103 = vmatpush1.msra.mxu0 0.0
    %4104 = vmatprep.subr.mxu0 0.0
    %4105 = vmatpush1.msra.mxu0 0.0
    %4106 = vmatprep.subr.mxu0 0.0
    %4107 = vmatpush1.msra.mxu0 0.0
    %4108 = vmatprep.subr.mxu0 0.0
    %4109 = vmatpush1.msra.mxu0 0.0
    %4110 = vmatprep.subr.mxu0 0.0
    %4111 = vmatpush1.msra.mxu0 0.0
    %4112 = vmatprep.subr.mxu0 0.0
    %4113 = vmatpush1.msra.mxu0 0.0
    %4114 = vmatprep.subr.mxu0 0.0
    %4115 = vmatpush1.msra.mxu0 0.0
    %4116 = vmatprep.subr.mxu0 0.0
    %4117 = vmatpush1.msra.mxu0 0.0
    %4118 = vmatprep.subr.mxu0 0.0
    %4119 = vmatpush1.msra.mxu0 0.0
    %4120 = vmatprep.subr.mxu0 0.0
    %4121 = vmatpush1.msra.mxu0 0.0
    %4122 = vmatprep.subr.mxu0 0.0
    %4123 = vmatpush1.msra.mxu0 0.0
    %4124 = vmatprep.subr.mxu0 0.0
    %4125 = vmatpush1.msra.mxu0 0.0
    %4126 = vmatprep.subr.mxu0 0.0
    %4127 = vmatpush1.msra.mxu0 0.0
    %4128 = vmatprep.subr.mxu0 0.0
    %4129 = vmatpush1.msra.mxu0 0.0
    %4130 = vmatprep.subr.mxu0 0.0
    %4131 = vmatpush1.msra.mxu0 0.0
    %4132 = vmatprep.subr.mxu0 0.0
    %4133 = vmatpush1.msra.mxu0 0.0
    %4134 = vmatprep.subr.mxu0 0.0
    %4135 = vmatpush1.msra.mxu0 0.0
    %4136 = vmatprep.subr.mxu0 0.0
    %4137 = vmatpush1.msra.mxu0 0.0
    %4138 = vmatprep.subr.mxu0 0.0
    %4139 = vmatpush1.msra.mxu0 0.0
    %4140 = vmatprep.subr.mxu0 0.0
    %4141 = vmatpush1.msra.mxu0 0.0
    %4142 = vmatprep.subr.mxu0 0.0
    %4143 = vmatpush1.msra.mxu0 0.0
    %4144 = vmatprep.subr.mxu0 0.0
    %4145 = vmatpush1.msra.mxu0 0.0
    %4146 = vmatprep.subr.mxu0 0.0
    %4147 = vmatpush1.msra.mxu0 0.0
    %4148 = vmatprep.subr.mxu0 0.0
    %4149 = vmatpush1.msra.mxu0 0.0
    %4150 = vmatprep.subr.mxu0 0.0
    %4151 = vmatpush1.msra.mxu0 0.0
    %4152 = vmatprep.subr.mxu0 0.0
    %4153 = vmatpush1.msra.mxu0 0.0
    %4154 = vmatprep.subr.mxu0 0.0
    %4155 = vmatpush1.msra.mxu0 0.0
    %4156 = vmatprep.mubr.f32.mxu0 0.0
    %4157 = vmatmul.mubr.f32.gmra.mrb[0].mxu0 %v4090
    %v4158 = vpop.f32.mrb[0].mxu0
    %v4159 = vadd.f32 0.0, %v4158
    %v4160 = vpop.f32.mrb[0].mxu0
    %4161 = vdwg.mxu0
    %v4163 = vsel %vm3239, %v3410, 0
    %4165 = vmatprep.subr.mxu0 0.0
    %4166 = vmatpush1.msra.mxu0 %v1801
    %4167 = vmatprep.subr.mxu0 0.0
    %4168 = vmatpush1.msra.mxu0 0.0
    %4169 = vmatprep.subr.mxu0 0.0
    %4170 = vmatpush1.msra.mxu0 0.0
    %4171 = vmatprep.subr.mxu0 0.0
    %4172 = vmatpush1.msra.mxu0 0.0
    %4173 = vmatprep.subr.mxu0 0.0
    %4174 = vmatpush1.msra.mxu0 0.0
    %4175 = vmatprep.subr.mxu0 0.0
    %4176 = vmatpush1.msra.mxu0 0.0
    %4177 = vmatprep.subr.mxu0 0.0
    %4178 = vmatpush1.msra.mxu0 0.0
    %4179 = vmatprep.subr.mxu0 0.0
    %4180 = vmatpush1.msra.mxu0 0.0
    %4181 = vmatprep.subr.mxu0 0.0
    %4182 = vmatpush1.msra.mxu0 0.0
    %4183 = vmatprep.subr.mxu0 0.0
    %4184 = vmatpush1.msra.mxu0 0.0
    %4185 = vmatprep.subr.mxu0 0.0
    %4186 = vmatpush1.msra.mxu0 0.0
    %4187 = vmatprep.subr.mxu0 0.0
    %4188 = vmatpush1.msra.mxu0 0.0
    %4189 = vmatprep.subr.mxu0 0.0
    %4190 = vmatpush1.msra.mxu0 0.0
    %4191 = vmatprep.subr.mxu0 0.0
    %4192 = vmatpush1.msra.mxu0 0.0
    %4193 = vmatprep.subr.mxu0 0.0
    %4194 = vmatpush1.msra.mxu0 0.0
    %4195 = vmatprep.subr.mxu0 0.0
    %4196 = vmatpush1.msra.mxu0 0.0
    %4197 = vmatprep.subr.mxu0 0.0
    %4198 = vmatpush1.msra.mxu0 0.0
    %4199 = vmatprep.subr.mxu0 0.0
    %4200 = vmatpush1.msra.mxu0 0.0
    %4201 = vmatprep.subr.mxu0 0.0
    %4202 = vmatpush1.msra.mxu0 0.0
    %4203 = vmatprep.subr.mxu0 0.0
    %4204 = vmatpush1.msra.mxu0 0.0
    %4205 = vmatprep.subr.mxu0 0.0
    %4206 = vmatpush1.msra.mxu0 0.0
    %4207 = vmatprep.subr.mxu0 0.0
    %4208 = vmatpush1.msra.mxu0 0.0
    %4209 = vmatprep.subr.mxu0 0.0
    %4210 = vmatpush1.msra.mxu0 0.0
    %4211 = vmatprep.subr.mxu0 0.0
    %4212 = vmatpush1.msra.mxu0 0.0
    %4213 = vmatprep.subr.mxu0 0.0
    %4214 = vmatpush1.msra.mxu0 0.0
    %4215 = vmatprep.subr.mxu0 0.0
    %4216 = vmatpush1.msra.mxu0 0.0
    %4217 = vmatprep.subr.mxu0 0.0
    %4218 = vmatpush1.msra.mxu0 0.0
    %4219 = vmatprep.subr.mxu0 0.0
    %4220 = vmatpush1.msra.mxu0 0.0
    %4221 = vmatprep.subr.mxu0 0.0
    %4222 = vmatpush1.msra.mxu0 0.0
    %4223 = vmatprep.subr.mxu0 0.0
    %4224 = vmatpush1.msra.mxu0 0.0
    %4225 = vmatprep.subr.mxu0 0.0
    %4226 = vmatpush1.msra.mxu0 0.0
    %4227 = vmatprep.subr.mxu0 0.0
    %4228 = vmatpush1.msra.mxu0 0.0
    %4229 = vmatprep.mubr.f32.mxu0 0.0
    %4230 = vmatmul.mubr.f32.gmra.mrb[0].mxu0 %v4163
    %v4231 = vpop.f32.mrb[0].mxu0
    %v4232 = vadd.f32 0.0, %v4231
    %v4233 = vpop.f32.mrb[0].mxu0
    %4234 = vdwg.mxu0
    %v4236 = vsel %vm3239, %v3411, 0
    %4238 = vmatprep.subr.mxu0 0.0
    %4239 = vmatpush1.msra.mxu0 %v1806
    %4240 = vmatprep.subr.mxu0 0.0
    %4241 = vmatpush1.msra.mxu0 0.0
    %4242 = vmatprep.subr.mxu0 0.0
    %4243 = vmatpush1.msra.mxu0 0.0
    %4244 = vmatprep.subr.mxu0 0.0
    %4245 = vmatpush1.msra.mxu0 0.0
    %4246 = vmatprep.subr.mxu0 0.0
    %4247 = vmatpush1.msra.mxu0 0.0
    %4248 = vmatprep.subr.mxu0 0.0
    %4249 = vmatpush1.msra.mxu0 0.0
    %4250 = vmatprep.subr.mxu0 0.0
    %4251 = vmatpush1.msra.mxu0 0.0
    %4252 = vmatprep.subr.mxu0 0.0
    %4253 = vmatpush1.msra.mxu0 0.0
    %4254 = vmatprep.subr.mxu0 0.0
    %4255 = vmatpush1.msra.mxu0 0.0
    %4256 = vmatprep.subr.mxu0 0.0
    %4257 = vmatpush1.msra.mxu0 0.0
    %4258 = vmatprep.subr.mxu0 0.0
    %4259 = vmatpush1.msra.mxu0 0.0
    %4260 = vmatprep.subr.mxu0 0.0
    %4261 = vmatpush1.msra.mxu0 0.0
    %4262 = vmatprep.subr.mxu0 0.0
    %4263 = vmatpush1.msra.mxu0 0.0
    %4264 = vmatprep.subr.mxu0 0.0
    %4265 = vmatpush1.msra.mxu0 0.0
    %4266 = vmatprep.subr.mxu0 0.0
    %4267 = vmatpush1.msra.mxu0 0.0
    %4268 = vmatprep.subr.mxu0 0.0
    %4269 = vmatpush1.msra.mxu0 0.0
    %4270 = vmatprep.subr.mxu0 0.0
    %4271 = vmatpush1.msra.mxu0 0.0
    %4272 = vmatprep.subr.mxu0 0.0
    %4273 = vmatpush1.msra.mxu0 0.0
    %4274 = vmatprep.subr.mxu0 0.0
    %4275 = vmatpush1.msra.mxu0 0.0
    %4276 = vmatprep.subr.mxu0 0.0
    %4277 = vmatpush1.msra.mxu0 0.0
    %4278 = vmatprep.subr.mxu0 0.0
    %4279 = vmatpush1.msra.mxu0 0.0
    %4280 = vmatprep.subr.mxu0 0.0
    %4281 = vmatpush1.msra.mxu0 0.0
    %4282 = vmatprep.subr.mxu0 0.0
    %4283 = vmatpush1.msra.mxu0 0.0
    %4284 = vmatprep.subr.mxu0 0.0
    %4285 = vmatpush1.msra.mxu0 0.0
    %4286 = vmatprep.subr.mxu0 0.0
    %4287 = vmatpush1.msra.mxu0 0.0
    %4288 = vmatprep.subr.mxu0 0.0
    %4289 = vmatpush1.msra.mxu0 0.0
    %4290 = vmatprep.subr.mxu0 0.0
    %4291 = vmatpush1.msra.mxu0 0.0
    %4292 = vmatprep.subr.mxu0 0.0
    %4293 = vmatpush1.msra.mxu0 0.0
    %4294 = vmatprep.subr.mxu0 0.0
    %4295 = vmatpush1.msra.mxu0 0.0
    %4296 = vmatprep.subr.mxu0 0.0
    %4297 = vmatpush1.msra.mxu0 0.0
    %4298 = vmatprep.subr.mxu0 0.0
    %4299 = vmatpush1.msra.mxu0 0.0
    %4300 = vmatprep.subr.mxu0 0.0
    %4301 = vmatpush1.msra.mxu0 0.0
    %4302 = vmatprep.mubr.f32.mxu0 0.0
    %4303 = vmatmul.mubr.f32.gmra.mrb[0].mxu0 %v4236
    %v4304 = vpop.f32.mrb[0].mxu0
    %v4305 = vadd.f32 0.0, %v4304
    %v4306 = vpop.f32.mrb[0].mxu0
    %4307 = vdwg.mxu0
    %v4309 = vsel %vm3239, %v3412, 0
    %4311 = vmatprep.subr.mxu0 0.0
    %4312 = vmatpush1.msra.mxu0 %v1876
    %4313 = vmatprep.subr.mxu0 0.0
    %4314 = vmatpush1.msra.mxu0 0.0
    %4315 = vmatprep.subr.mxu0 0.0
    %4316 = vmatpush1.msra.mxu0 0.0
    %4317 = vmatprep.subr.mxu0 0.0
    %4318 = vmatpush1.msra.mxu0 0.0
    %4319 = vmatprep.subr.mxu0 0.0
    %4320 = vmatpush1.msra.mxu0 0.0
    %4321 = vmatprep.subr.mxu0 0.0
    %4322 = vmatpush1.msra.mxu0 0.0
    %4323 = vmatprep.subr.mxu0 0.0
    %4324 = vmatpush1.msra.mxu0 0.0
    %4325 = vmatprep.subr.mxu0 0.0
    %4326 = vmatpush1.msra.mxu0 0.0
    %4327 = vmatprep.subr.mxu0 0.0
    %4328 = vmatpush1.msra.mxu0 0.0
    %4329 = vmatprep.subr.mxu0 0.0
    %4330 = vmatpush1.msra.mxu0 0.0
    %4331 = vmatprep.subr.mxu0 0.0
    %4332 = vmatpush1.msra.mxu0 0.0
    %4333 = vmatprep.subr.mxu0 0.0
    %4334 = vmatpush1.msra.mxu0 0.0
    %4335 = vmatprep.subr.mxu0 0.0
    %4336 = vmatpush1.msra.mxu0 0.0
    %4337 = vmatprep.subr.mxu0 0.0
    %4338 = vmatpush1.msra.mxu0 0.0
    %4339 = vmatprep.subr.mxu0 0.0
    %4340 = vmatpush1.msra.mxu0 0.0
    %4341 = vmatprep.subr.mxu0 0.0
    %4342 = vmatpush1.msra.mxu0 0.0
    %4343 = vmatprep.subr.mxu0 0.0
    %4344 = vmatpush1.msra.mxu0 0.0
    %4345 = vmatprep.subr.mxu0 0.0
    %4346 = vmatpush1.msra.mxu0 0.0
    %4347 = vmatprep.subr.mxu0 0.0
    %4348 = vmatpush1.msra.mxu0 0.0
    %4349 = vmatprep.subr.mxu0 0.0
    %4350 = vmatpush1.msra.mxu0 0.0
    %4351 = vmatprep.subr.mxu0 0.0
    %4352 = vmatpush1.msra.mxu0 0.0
    %4353 = vmatprep.subr.mxu0 0.0
    %4354 = vmatpush1.msra.mxu0 0.0
    %4355 = vmatprep.subr.mxu0 0.0
    %4356 = vmatpush1.msra.mxu0 0.0
    %4357 = vmatprep.subr.mxu0 0.0
    %4358 = vmatpush1.msra.mxu0 0.0
    %4359 = vmatprep.subr.mxu0 0.0
    %4360 = vmatpush1.msra.mxu0 0.0
    %4361 = vmatprep.subr.mxu0 0.0
    %4362 = vmatpush1.msra.mxu0 0.0
    %4363 = vmatprep.subr.mxu0 0.0
    %4364 = vmatpush1.msra.mxu0 0.0
    %4365 = vmatprep.subr.mxu0 0.0
    %4366 = vmatpush1.msra.mxu0 0.0
    %4367 = vmatprep.subr.mxu0 0.0
    %4368 = vmatpush1.msra.mxu0 0.0
    %4369 = vmatprep.subr.mxu0 0.0
    %4370 = vmatpush1.msra.mxu0 0.0
    %4371 = vmatprep.subr.mxu0 0.0
    %4372 = vmatpush1.msra.mxu0 0.0
    %4373 = vmatprep.subr.mxu0 0.0
    %4374 = vmatpush1.msra.mxu0 0.0
    %4375 = vmatprep.mubr.f32.mxu0 0.0
    %4376 = vmatmul.mubr.f32.gmra.mrb[0].mxu0 %v4309
    %v4377 = vpop.f32.mrb[0].mxu0
    %v4378 = vadd.f32 0.0, %v4377
    %v4379 = vpop.f32.mrb[0].mxu0
    %4380 = vdwg.mxu0
    %v4382 = vsel %vm3239, %v3413, 0
    %4384 = vmatprep.subr.mxu0 0.0
    %4385 = vmatpush1.msra.mxu0 %v1881
    %4386 = vmatprep.subr.mxu0 0.0
    %4387 = vmatpush1.msra.mxu0 0.0
    %4388 = vmatprep.subr.mxu0 0.0
    %4389 = vmatpush1.msra.mxu0 0.0
    %4390 = vmatprep.subr.mxu0 0.0
    %4391 = vmatpush1.msra.mxu0 0.0
    %4392 = vmatprep.subr.mxu0 0.0
    %4393 = vmatpush1.msra.mxu0 0.0
    %4394 = vmatprep.subr.mxu0 0.0
    %4395 = vmatpush1.msra.mxu0 0.0
    %4396 = vmatprep.subr.mxu0 0.0
    %4397 = vmatpush1.msra.mxu0 0.0
    %4398 = vmatprep.subr.mxu0 0.0
    %4399 = vmatpush1.msra.mxu0 0.0
    %4400 = vmatprep.subr.mxu0 0.0
    %4401 = vmatpush1.msra.mxu0 0.0
    %4402 = vmatprep.subr.mxu0 0.0
    %4403 = vmatpush1.msra.mxu0 0.0
    %4404 = vmatprep.subr.mxu0 0.0
    %4405 = vmatpush1.msra.mxu0 0.0
    %4406 = vmatprep.subr.mxu0 0.0
    %4407 = vmatpush1.msra.mxu0 0.0
    %4408 = vmatprep.subr.mxu0 0.0
    %4409 = vmatpush1.msra.mxu0 0.0
    %4410 = vmatprep.subr.mxu0 0.0
    %4411 = vmatpush1.msra.mxu0 0.0
    %4412 = vmatprep.subr.mxu0 0.0
    %4413 = vmatpush1.msra.mxu0 0.0
    %4414 = vmatprep.subr.mxu0 0.0
    %4415 = vmatpush1.msra.mxu0 0.0
    %4416 = vmatprep.subr.mxu0 0.0
    %4417 = vmatpush1.msra.mxu0 0.0
    %4418 = vmatprep.subr.mxu0 0.0
    %4419 = vmatpush1.msra.mxu0 0.0
    %4420 = vmatprep.subr.mxu0 0.0
    %4421 = vmatpush1.msra.mxu0 0.0
    %4422 = vmatprep.subr.mxu0 0.0
    %4423 = vmatpush1.msra.mxu0 0.0
    %4424 = vmatprep.subr.mxu0 0.0
    %4425 = vmatpush1.msra.mxu0 0.0
    %4426 = vmatprep.subr.mxu0 0.0
    %4427 = vmatpush1.msra.mxu0 0.0
    %4428 = vmatprep.subr.mxu0 0.0
    %4429 = vmatpush1.msra.mxu0 0.0
    %4430 = vmatprep.subr.mxu0 0.0
    %4431 = vmatpush1.msra.mxu0 0.0
    %4432 = vmatprep.subr.mxu0 0.0
    %4433 = vmatpush1.msra.mxu0 0.0
    %4434 = vmatprep.subr.mxu0 0.0
    %4435 = vmatpush1.msra.mxu0 0.0
    %4436 = vmatprep.subr.mxu0 0.0
    %4437 = vmatpush1.msra.mxu0 0.0
    %4438 = vmatprep.subr.mxu0 0.0
    %4439 = vmatpush1.msra.mxu0 0.0
    %4440 = vmatprep.subr.mxu0 0.0
    %4441 = vmatpush1.msra.mxu0 0.0
    %4442 = vmatprep.subr.mxu0 0.0
    %4443 = vmatpush1.msra.mxu0 0.0
    %4444 = vmatprep.subr.mxu0 0.0
    %4445 = vmatpush1.msra.mxu0 0.0
    %4446 = vmatprep.subr.mxu0 0.0
    %4447 = vmatpush1.msra.mxu0 0.0
    %4448 = vmatprep.mubr.f32.mxu0 0.0
    %4449 = vmatmul.mubr.f32.gmra.mrb[0].mxu0 %v4382
    %v4450 = vpop.f32.mrb[0].mxu0
    %v4451 = vadd.f32 0.0, %v4450
    %v4452 = vpop.f32.mrb[0].mxu0
    %4453 = vdwg.mxu0
    %v4455 = vsel %vm3239, %v3414, 0
    %4457 = vmatprep.subr.mxu0 0.0
    %4458 = vmatpush1.msra.mxu0 %v1951
    %4459 = vmatprep.subr.mxu0 0.0
    %4460 = vmatpush1.msra.mxu0 0.0
    %4461 = vmatprep.subr.mxu0 0.0
    %4462 = vmatpush1.msra.mxu0 0.0
    %4463 = vmatprep.subr.mxu0 0.0
    %4464 = vmatpush1.msra.mxu0 0.0
    %4465 = vmatprep.subr.mxu0 0.0
    %4466 = vmatpush1.msra.mxu0 0.0
    %4467 = vmatprep.subr.mxu0 0.0
    %4468 = vmatpush1.msra.mxu0 0.0
    %4469 = vmatprep.subr.mxu0 0.0
    %4470 = vmatpush1.msra.mxu0 0.0
    %4471 = vmatprep.subr.mxu0 0.0
    %4472 = vmatpush1.msra.mxu0 0.0
    %4473 = vmatprep.subr.mxu0 0.0
    %4474 = vmatpush1.msra.mxu0 0.0
    %4475 = vmatprep.subr.mxu0 0.0
    %4476 = vmatpush1.msra.mxu0 0.0
    %4477 = vmatprep.subr.mxu0 0.0
    %4478 = vmatpush1.msra.mxu0 0.0
    %4479 = vmatprep.subr.mxu0 0.0
    %4480 = vmatpush1.msra.mxu0 0.0
    %4481 = vmatprep.subr.mxu0 0.0
    %4482 = vmatpush1.msra.mxu0 0.0
    %4483 = vmatprep.subr.mxu0 0.0
    %4484 = vmatpush1.msra.mxu0 0.0
    %4485 = vmatprep.subr.mxu0 0.0
    %4486 = vmatpush1.msra.mxu0 0.0
    %4487 = vmatprep.subr.mxu0 0.0
    %4488 = vmatpush1.msra.mxu0 0.0
    %4489 = vmatprep.subr.mxu0 0.0
    %4490 = vmatpush1.msra.mxu0 0.0
    %4491 = vmatprep.subr.mxu0 0.0
    %4492 = vmatpush1.msra.mxu0 0.0
    %4493 = vmatprep.subr.mxu0 0.0
    %4494 = vmatpush1.msra.mxu0 0.0
    %4495 = vmatprep.subr.mxu0 0.0
    %4496 = vmatpush1.msra.mxu0 0.0
    %4497 = vmatprep.subr.mxu0 0.0
    %4498 = vmatpush1.msra.mxu0 0.0
    %4499 = vmatprep.subr.mxu0 0.0
    %4500 = vmatpush1.msra.mxu0 0.0
    %4501 = vmatprep.subr.mxu0 0.0
    %4502 = vmatpush1.msra.mxu0 0.0
    %4503 = vmatprep.subr.mxu0 0.0
    %4504 = vmatpush1.msra.mxu0 0.0
    %4505 = vmatprep.subr.mxu0 0.0
    %4506 = vmatpush1.msra.mxu0 0.0
    %4507 = vmatprep.subr.mxu0 0.0
    %4508 = vmatpush1.msra.mxu0 0.0
    %4509 = vmatprep.subr.mxu0 0.0
    %4510 = vmatpush1.msra.mxu0 0.0
    %4511 = vmatprep.subr.mxu0 0.0
    %4512 = vmatpush1.msra.mxu0 0.0
    %4513 = vmatprep.subr.mxu0 0.0
    %4514 = vmatpush1.msra.mxu0 0.0
    %4515 = vmatprep.subr.mxu0 0.0
    %4516 = vmatpush1.msra.mxu0 0.0
    %4517 = vmatprep.subr.mxu0 0.0
    %4518 = vmatpush1.msra.mxu0 0.0
    %4519 = vmatprep.subr.mxu0 0.0
    %4520 = vmatpush1.msra.mxu0 0.0
    %4521 = vmatprep.mubr.f32.mxu0 0.0
    %4522 = vmatmul.mubr.f32.gmra.mrb[0].mxu0 %v4455
    %v4523 = vpop.f32.mrb[0].mxu0
    %v4524 = vadd.f32 0.0, %v4523
    %v4525 = vpop.f32.mrb[0].mxu0
    %4526 = vdwg.mxu0
    %v4528 = vsel %vm3239, %v3415, 0
    %4530 = vmatprep.subr.mxu0 0.0
    %4531 = vmatpush1.msra.mxu0 %v1956
    %4532 = vmatprep.subr.mxu0 0.0
    %4533 = vmatpush1.msra.mxu0 0.0
    %4534 = vmatprep.subr.mxu0 0.0
    %4535 = vmatpush1.msra.mxu0 0.0
    %4536 = vmatprep.subr.mxu0 0.0
    %4537 = vmatpush1.msra.mxu0 0.0
    %4538 = vmatprep.subr.mxu0 0.0
    %4539 = vmatpush1.msra.mxu0 0.0
    %4540 = vmatprep.subr.mxu0 0.0
    %4541 = vmatpush1.msra.mxu0 0.0
    %4542 = vmatprep.subr.mxu0 0.0
    %4543 = vmatpush1.msra.mxu0 0.0
    %4544 = vmatprep.subr.mxu0 0.0
    %4545 = vmatpush1.msra.mxu0 0.0
    %4546 = vmatprep.subr.mxu0 0.0
    %4547 = vmatpush1.msra.mxu0 0.0
    %4548 = vmatprep.subr.mxu0 0.0
    %4549 = vmatpush1.msra.mxu0 0.0
    %4550 = vmatprep.subr.mxu0 0.0
    %4551 = vmatpush1.msra.mxu0 0.0
    %4552 = vmatprep.subr.mxu0 0.0
    %4553 = vmatpush1.msra.mxu0 0.0
    %4554 = vmatprep.subr.mxu0 0.0
    %4555 = vmatpush1.msra.mxu0 0.0
    %4556 = vmatprep.subr.mxu0 0.0
    %4557 = vmatpush1.msra.mxu0 0.0
    %4558 = vmatprep.subr.mxu0 0.0
    %4559 = vmatpush1.msra.mxu0 0.0
    %4560 = vmatprep.subr.mxu0 0.0
    %4561 = vmatpush1.msra.mxu0 0.0
    %4562 = vmatprep.subr.mxu0 0.0
    %4563 = vmatpush1.msra.mxu0 0.0
    %4564 = vmatprep.subr.mxu0 0.0
    %4565 = vmatpush1.msra.mxu0 0.0
    %4566 = vmatprep.subr.mxu0 0.0
    %4567 = vmatpush1.msra.mxu0 0.0
    %4568 = vmatprep.subr.mxu0 0.0
    %4569 = vmatpush1.msra.mxu0 0.0
    %4570 = vmatprep.subr.mxu0 0.0
    %4571 = vmatpush1.msra.mxu0 0.0
    %4572 = vmatprep.subr.mxu0 0.0
    %4573 = vmatpush1.msra.mxu0 0.0
    %4574 = vmatprep.subr.mxu0 0.0
    %4575 = vmatpush1.msra.mxu0 0.0
    %4576 = vmatprep.subr.mxu0 0.0
    %4577 = vmatpush1.msra.mxu0 0.0
    %4578 = vmatprep.subr.mxu0 0.0
    %4579 = vmatpush1.msra.mxu0 0.0
    %4580 = vmatprep.subr.mxu0 0.0
    %4581 = vmatpush1.msra.mxu0 0.0
    %4582 = vmatprep.subr.mxu0 0.0
    %4583 = vmatpush1.msra.mxu0 0.0
    %4584 = vmatprep.subr.mxu0 0.0
    %4585 = vmatpush1.msra.mxu0 0.0
    %4586 = vmatprep.subr.mxu0 0.0
    %4587 = vmatpush1.msra.mxu0 0.0
    %4588 = vmatprep.subr.mxu0 0.0
    %4589 = vmatpush1.msra.mxu0 0.0
    %4590 = vmatprep.subr.mxu0 0.0
    %4591 = vmatpush1.msra.mxu0 0.0
    %4592 = vmatprep.subr.mxu0 0.0
    %4593 = vmatpush1.msra.mxu0 0.0
    %4594 = vmatprep.mubr.f32.mxu0 0.0
    %4595 = vmatmul.mubr.f32.gmra.mrb[0].mxu0 %v4528
    %v4596 = vpop.f32.mrb[0].mxu0
    %v4597 = vadd.f32 0.0, %v4596
    %v4598 = vpop.f32.mrb[0].mxu0
    %4599 = vdwg.mxu0
    %v4600 = vld [vmem:[%s7] sm:$0xff]
    %v4601 = vld [vmem:[%s7 + $0x8] sm:$0xff]
    %v4602 = vld [vmem:[%s7 + $0x10] sm:$0xff]
    %v4603 = vld [vmem:[%s7 + $0x18] sm:$0xff]
    %v4604 = vld [vmem:[%s7 + $0x20] sm:$0xff]
    %v4605 = vld [vmem:[%s7 + $0x28] sm:$0xff]
    %v4606 = vld [vmem:[%s7 + $0x30] sm:$0xff]
    %v4607 = vld [vmem:[%s7 + $0x38] sm:$0xff]
    %v4608 = vld [vmem:[%s7 + $0x40] sm:$0xff]
    %v4609 = vld [vmem:[%s7 + $0x48] sm:$0xff]
    %v4610 = vld [vmem:[%s7 + $0x50] sm:$0xff]
    %v4611 = vld [vmem:[%s7 + $0x58] sm:$0xff]
    %v4612 = vld [vmem:[%s7 + $0x60] sm:$0xff]
    %v4613 = vld [vmem:[%s7 + $0x68] sm:$0xff]
    %v4614 = vld [vmem:[%s7 + $0x70] sm:$0xff]
    %v4615 = vld [vmem:[%s7 + $0x78] sm:$0xff]
    %v4616 = vld [vmem:[%s7 + $0x80] sm:$0xff]
    %v4617 = vld [vmem:[%s7 + $0x88] sm:$0xff]
    %v4618 = vld [vmem:[%s7 + $0x90] sm:$0xff]
    %v4619 = vld [vmem:[%s7 + $0x98] sm:$0xff]
    %v4620 = vld [vmem:[%s7 + $0xa0] sm:$0xff]
    %v4621 = vld [vmem:[%s7 + $0xa8] sm:$0xff]
    %v4622 = vld [vmem:[%s7 + $0xb0] sm:$0xff]
    %v4623 = vld [vmem:[%s7 + $0xb8] sm:$0xff]
    %v4624 = vld [vmem:[%s7 + $0xc0] sm:$0xff]
    %v4625 = vld [vmem:[%s7 + $0xc8] sm:$0xff]
    %v4626 = vld [vmem:[%s7 + $0xd0] sm:$0xff]
    %v4627 = vld [vmem:[%s7 + $0xd8] sm:$0xff]
    %v4628 = vld [vmem:[%s7 + $0xe0] sm:$0xff]
    %v4629 = vld [vmem:[%s7 + $0xe8] sm:$0xff]
    %v4630 = vld [vmem:[%s7 + $0xf0] sm:$0xff]
    %v4631 = vld [vmem:[%s7 + $0xf8] sm:$0xff]
    %v4633 = vsel %vm76, %v3502, 0
    %v4636 = vsel %vm76, %v3575, 0
    %4638 = vmatprep.subr.mxu0 0.0
    %4639 = vmatpush1.msra.mxu0 %v4600
    %4640 = vmatprep.subr.mxu0 0.0
    %4641 = vmatpush1.msra.mxu0 %v4601
    %4642 = vmatprep.subr.mxu0 0.0
    %4643 = vmatpush1.msra.mxu0 %v4602
    %4644 = vmatprep.subr.mxu0 0.0
    %4645 = vmatpush1.msra.mxu0 %v4603
    %4646 = vmatprep.subr.mxu0 0.0
    %4647 = vmatpush1.msra.mxu0 0.0
    %4648 = vmatprep.subr.mxu0 0.0
    %4649 = vmatpush1.msra.mxu0 0.0
    %4650 = vmatprep.subr.mxu0 0.0
    %4651 = vmatpush1.msra.mxu0 0.0
    %4652 = vmatprep.subr.mxu0 0.0
    %4653 = vmatpush1.msra.mxu0 0.0
    %4654 = vmatprep.subr.mxu0 0.0
    %4655 = vmatpush1.msra.mxu0 0.0
    %4656 = vmatprep.subr.mxu0 0.0
    %4657 = vmatpush1.msra.mxu0 0.0
    %4658 = vmatprep.subr.mxu0 0.0
    %4659 = vmatpush1.msra.mxu0 0.0
    %4660 = vmatprep.subr.mxu0 0.0
    %4661 = vmatpush1.msra.mxu0 0.0
    %4662 = vmatprep.subr.mxu0 0.0
    %4663 = vmatpush1.msra.mxu0 0.0
    %4664 = vmatprep.subr.mxu0 0.0
    %4665 = vmatpush1.msra.mxu0 0.0
    %4666 = vmatprep.subr.mxu0 0.0
    %4667 = vmatpush1.msra.mxu0 0.0
    %4668 = vmatprep.subr.mxu0 0.0
    %4669 = vmatpush1.msra.mxu0 0.0
    %4670 = vmatprep.subr.mxu0 0.0
    %4671 = vmatpush1.msra.mxu0 0.0
    %4672 = vmatprep.subr.mxu0 0.0
    %4673 = vmatpush1.msra.mxu0 0.0
    %4674 = vmatprep.subr.mxu0 0.0
    %4675 = vmatpush1.msra.mxu0 0.0
    %4676 = vmatprep.subr.mxu0 0.0
    %4677 = vmatpush1.msra.mxu0 0.0
    %4678 = vmatprep.subr.mxu0 0.0
    %4679 = vmatpush1.msra.mxu0 0.0
    %4680 = vmatprep.subr.mxu0 0.0
    %4681 = vmatpush1.msra.mxu0 0.0
    %4682 = vmatprep.subr.mxu0 0.0
    %4683 = vmatpush1.msra.mxu0 0.0
    %4684 = vmatprep.subr.mxu0 0.0
    %4685 = vmatpush1.msra.mxu0 0.0
    %4686 = vmatprep.subr.mxu0 0.0
    %4687 = vmatpush1.msra.mxu0 0.0
    %4688 = vmatprep.subr.mxu0 0.0
    %4689 = vmatpush1.msra.mxu0 0.0
    %4690 = vmatprep.subr.mxu0 0.0
    %4691 = vmatpush1.msra.mxu0 0.0
    %4692 = vmatprep.subr.mxu0 0.0
    %4693 = vmatpush1.msra.mxu0 0.0
    %4694 = vmatprep.subr.mxu0 0.0
    %4695 = vmatpush1.msra.mxu0 0.0
    %4696 = vmatprep.subr.mxu0 0.0
    %4697 = vmatpush1.msra.mxu0 0.0
    %4698 = vmatprep.subr.mxu0 0.0
    %4699 = vmatpush1.msra.mxu0 0.0
    %4700 = vmatprep.subr.mxu0 0.0
    %4701 = vmatpush1.msra.mxu0 0.0
    %4702 = vmatprep.mubr.f32.mxu0 0.0
    %4703 = vmatmul.mubr.f32.gmra.mrb[0].mxu0 %v4633
    %v4704 = vpop.f32.mrb[0].mxu0
    %v4705 = vadd.f32 0.0, %v4704
    %v4706 = vpop.f32.mrb[0].mxu0
    %4707 = vmatprep.mubr.f32.mxu0 0.0
    %4708 = vmatmul.mubr.f32.gmra.mrb[0].mxu0 %v4636
    %v4709 = vpop.f32.mrb[0].mxu0
    %v4710 = vadd.f32 0.0, %v4709
    %v4711 = vpop.f32.mrb[0].mxu0
    %4712 = vdwg.mxu0
    %v4714 = vsel %vm76, %v3648, 0
    %v4717 = vsel %vm76, %v3721, 0
    %4719 = vmatprep.subr.mxu0 0.0
    %4720 = vmatpush1.msra.mxu0 %v4604
    %4721 = vmatprep.subr.mxu0 0.0
    %4722 = vmatpush1.msra.mxu0 %v4605
    %4723 = vmatprep.subr.mxu0 0.0
    %4724 = vmatpush1.msra.mxu0 %v4606
    %4725 = vmatprep.subr.mxu0 0.0
    %4726 = vmatpush1.msra.mxu0 %v4607
    %4727 = vmatprep.subr.mxu0 0.0
    %4728 = vmatpush1.msra.mxu0 0.0
    %4729 = vmatprep.subr.mxu0 0.0
    %4730 = vmatpush1.msra.mxu0 0.0
    %4731 = vmatprep.subr.mxu0 0.0
    %4732 = vmatpush1.msra.mxu0 0.0
    %4733 = vmatprep.subr.mxu0 0.0
    %4734 = vmatpush1.msra.mxu0 0.0
    %4735 = vmatprep.subr.mxu0 0.0
    %4736 = vmatpush1.msra.mxu0 0.0
    %4737 = vmatprep.subr.mxu0 0.0
    %4738 = vmatpush1.msra.mxu0 0.0
    %4739 = vmatprep.subr.mxu0 0.0
    %4740 = vmatpush1.msra.mxu0 0.0
    %4741 = vmatprep.subr.mxu0 0.0
    %4742 = vmatpush1.msra.mxu0 0.0
    %4743 = vmatprep.subr.mxu0 0.0
    %4744 = vmatpush1.msra.mxu0 0.0
    %4745 = vmatprep.subr.mxu0 0.0
    %4746 = vmatpush1.msra.mxu0 0.0
    %4747 = vmatprep.subr.mxu0 0.0
    %4748 = vmatpush1.msra.mxu0 0.0
    %4749 = vmatprep.subr.mxu0 0.0
    %4750 = vmatpush1.msra.mxu0 0.0
    %4751 = vmatprep.subr.mxu0 0.0
    %4752 = vmatpush1.msra.mxu0 0.0
    %4753 = vmatprep.subr.mxu0 0.0
    %4754 = vmatpush1.msra.mxu0 0.0
    %4755 = vmatprep.subr.mxu0 0.0
    %4756 = vmatpush1.msra.mxu0 0.0
    %4757 = vmatprep.subr.mxu0 0.0
    %4758 = vmatpush1.msra.mxu0 0.0
    %4759 = vmatprep.subr.mxu0 0.0
    %4760 = vmatpush1.msra.mxu0 0.0
    %4761 = vmatprep.subr.mxu0 0.0
    %4762 = vmatpush1.msra.mxu0 0.0
    %4763 = vmatprep.subr.mxu0 0.0
    %4764 = vmatpush1.msra.mxu0 0.0
    %4765 = vmatprep.subr.mxu0 0.0
    %4766 = vmatpush1.msra.mxu0 0.0
    %4767 = vmatprep.subr.mxu0 0.0
    %4768 = vmatpush1.msra.mxu0 0.0
    %4769 = vmatprep.subr.mxu0 0.0
    %4770 = vmatpush1.msra.mxu0 0.0
    %4771 = vmatprep.subr.mxu0 0.0
    %4772 = vmatpush1.msra.mxu0 0.0
    %4773 = vmatprep.subr.mxu0 0.0
    %4774 = vmatpush1.msra.mxu0 0.0
    %4775 = vmatprep.subr.mxu0 0.0
    %4776 = vmatpush1.msra.mxu0 0.0
    %4777 = vmatprep.subr.mxu0 0.0
    %4778 = vmatpush1.msra.mxu0 0.0
    %4779 = vmatprep.subr.mxu0 0.0
    %4780 = vmatpush1.msra.mxu0 0.0
    %4781 = vmatprep.subr.mxu0 0.0
    %4782 = vmatpush1.msra.mxu0 0.0
    %4783 = vmatprep.mubr.f32.mxu0 0.0
    %4784 = vmatmul.mubr.f32.gmra.mrb[0].mxu0 %v4714
    %v4785 = vpop.f32.mrb[0].mxu0
    %v4786 = vadd.f32 0.0, %v4785
    %v4787 = vpop.f32.mrb[0].mxu0
    %4788 = vmatprep.mubr.f32.mxu0 0.0
    %4789 = vmatmul.mubr.f32.gmra.mrb[0].mxu0 %v4717
    %v4790 = vpop.f32.mrb[0].mxu0
    %v4791 = vadd.f32 0.0, %v4790
    %v4792 = vpop.f32.mrb[0].mxu0
    %4793 = vdwg.mxu0
    %v4795 = vsel %vm76, %v3794, 0
    %v4798 = vsel %vm76, %v3867, 0
    %4800 = vmatprep.subr.mxu0 0.0
    %4801 = vmatpush1.msra.mxu0 %v4608
    %4802 = vmatprep.subr.mxu0 0.0
    %4803 = vmatpush1.msra.mxu0 %v4609
    %4804 = vmatprep.subr.mxu0 0.0
    %4805 = vmatpush1.msra.mxu0 %v4610
    %4806 = vmatprep.subr.mxu0 0.0
    %4807 = vmatpush1.msra.mxu0 %v4611
    %4808 = vmatprep.subr.mxu0 0.0
    %4809 = vmatpush1.msra.mxu0 0.0
    %4810 = vmatprep.subr.mxu0 0.0
    %4811 = vmatpush1.msra.mxu0 0.0
    %4812 = vmatprep.subr.mxu0 0.0
    %4813 = vmatpush1.msra.mxu0 0.0
    %4814 = vmatprep.subr.mxu0 0.0
    %4815 = vmatpush1.msra.mxu0 0.0
    %4816 = vmatprep.subr.mxu0 0.0
    %4817 = vmatpush1.msra.mxu0 0.0
    %4818 = vmatprep.subr.mxu0 0.0
    %4819 = vmatpush1.msra.mxu0 0.0
    %4820 = vmatprep.subr.mxu0 0.0
    %4821 = vmatpush1.msra.mxu0 0.0
    %4822 = vmatprep.subr.mxu0 0.0
    %4823 = vmatpush1.msra.mxu0 0.0
    %4824 = vmatprep.subr.mxu0 0.0
    %4825 = vmatpush1.msra.mxu0 0.0
    %4826 = vmatprep.subr.mxu0 0.0
    %4827 = vmatpush1.msra.mxu0 0.0
    %4828 = vmatprep.subr.mxu0 0.0
    %4829 = vmatpush1.msra.mxu0 0.0
    %4830 = vmatprep.subr.mxu0 0.0
    %4831 = vmatpush1.msra.mxu0 0.0
    %4832 = vmatprep.subr.mxu0 0.0
    %4833 = vmatpush1.msra.mxu0 0.0
    %4834 = vmatprep.subr.mxu0 0.0
    %4835 = vmatpush1.msra.mxu0 0.0
    %4836 = vmatprep.subr.mxu0 0.0
    %4837 = vmatpush1.msra.mxu0 0.0
    %4838 = vmatprep.subr.mxu0 0.0
    %4839 = vmatpush1.msra.mxu0 0.0
    %4840 = vmatprep.subr.mxu0 0.0
    %4841 = vmatpush1.msra.mxu0 0.0
    %4842 = vmatprep.subr.mxu0 0.0
    %4843 = vmatpush1.msra.mxu0 0.0
    %4844 = vmatprep.subr.mxu0 0.0
    %4845 = vmatpush1.msra.mxu0 0.0
    %4846 = vmatprep.subr.mxu0 0.0
    %4847 = vmatpush1.msra.mxu0 0.0
    %4848 = vmatprep.subr.mxu0 0.0
    %4849 = vmatpush1.msra.mxu0 0.0
    %4850 = vmatprep.subr.mxu0 0.0
    %4851 = vmatpush1.msra.mxu0 0.0
    %4852 = vmatprep.subr.mxu0 0.0
    %4853 = vmatpush1.msra.mxu0 0.0
    %4854 = vmatprep.subr.mxu0 0.0
    %4855 = vmatpush1.msra.mxu0 0.0
    %4856 = vmatprep.subr.mxu0 0.0
    %4857 = vmatpush1.msra.mxu0 0.0
    %4858 = vmatprep.subr.mxu0 0.0
    %4859 = vmatpush1.msra.mxu0 0.0
    %4860 = vmatprep.subr.mxu0 0.0
    %4861 = vmatpush1.msra.mxu0 0.0
    %4862 = vmatprep.subr.mxu0 0.0
    %4863 = vmatpush1.msra.mxu0 0.0
    %4864 = vmatprep.mubr.f32.mxu0 0.0
    %4865 = vmatmul.mubr.f32.gmra.mrb[0].mxu0 %v4795
    %v4866 = vpop.f32.mrb[0].mxu0
    %v4867 = vadd.f32 0.0, %v4866
    %v4868 = vpop.f32.mrb[0].mxu0
    %4869 = vmatprep.mubr.f32.mxu0 0.0
    %4870 = vmatmul.mubr.f32.gmra.mrb[0].mxu0 %v4798
    %v4871 = vpop.f32.mrb[0].mxu0
    %v4872 = vadd.f32 0.0, %v4871
    %v4873 = vpop.f32.mrb[0].mxu0
    %4874 = vdwg.mxu0
    %v4876 = vsel %vm76, %v3940, 0
    %v4879 = vsel %vm76, %v4013, 0
    %4881 = vmatprep.subr.mxu0 0.0
    %4882 = vmatpush1.msra.mxu0 %v4612
    %4883 = vmatprep.subr.mxu0 0.0
    %4884 = vmatpush1.msra.mxu0 %v4613
    %4885 = vmatprep.subr.mxu0 0.0
    %4886 = vmatpush1.msra.mxu0 %v4614
    %4887 = vmatprep.subr.mxu0 0.0
    %4888 = vmatpush1.msra.mxu0 %v4615
    %4889 = vmatprep.subr.mxu0 0.0
    %4890 = vmatpush1.msra.mxu0 0.0
    %4891 = vmatprep.subr.mxu0 0.0
    %4892 = vmatpush1.msra.mxu0 0.0
    %4893 = vmatprep.subr.mxu0 0.0
    %4894 = vmatpush1.msra.mxu0 0.0
    %4895 = vmatprep.subr.mxu0 0.0
    %4896 = vmatpush1.msra.mxu0 0.0
    %4897 = vmatprep.subr.mxu0 0.0
    %4898 = vmatpush1.msra.mxu0 0.0
    %4899 = vmatprep.subr.mxu0 0.0
    %4900 = vmatpush1.msra.mxu0 0.0
    %4901 = vmatprep.subr.mxu0 0.0
    %4902 = vmatpush1.msra.mxu0 0.0
    %4903 = vmatprep.subr.mxu0 0.0
    %4904 = vmatpush1.msra.mxu0 0.0
    %4905 = vmatprep.subr.mxu0 0.0
    %4906 = vmatpush1.msra.mxu0 0.0
    %4907 = vmatprep.subr.mxu0 0.0
    %4908 = vmatpush1.msra.mxu0 0.0
    %4909 = vmatprep.subr.mxu0 0.0
    %4910 = vmatpush1.msra.mxu0 0.0
    %4911 = vmatprep.subr.mxu0 0.0
    %4912 = vmatpush1.msra.mxu0 0.0
    %4913 = vmatprep.subr.mxu0 0.0
    %4914 = vmatpush1.msra.mxu0 0.0
    %4915 = vmatprep.subr.mxu0 0.0
    %4916 = vmatpush1.msra.mxu0 0.0
    %4917 = vmatprep.subr.mxu0 0.0
    %4918 = vmatpush1.msra.mxu0 0.0
    %4919 = vmatprep.subr.mxu0 0.0
    %4920 = vmatpush1.msra.mxu0 0.0
    %4921 = vmatprep.subr.mxu0 0.0
    %4922 = vmatpush1.msra.mxu0 0.0
    %4923 = vmatprep.subr.mxu0 0.0
    %4924 = vmatpush1.msra.mxu0 0.0
    %4925 = vmatprep.subr.mxu0 0.0
    %4926 = vmatpush1.msra.mxu0 0.0
    %4927 = vmatprep.subr.mxu0 0.0
    %4928 = vmatpush1.msra.mxu0 0.0
    %4929 = vmatprep.subr.mxu0 0.0
    %4930 = vmatpush1.msra.mxu0 0.0
    %4931 = vmatprep.subr.mxu0 0.0
    %4932 = vmatpush1.msra.mxu0 0.0
    %4933 = vmatprep.subr.mxu0 0.0
    %4934 = vmatpush1.msra.mxu0 0.0
    %4935 = vmatprep.subr.mxu0 0.0
    %4936 = vmatpush1.msra.mxu0 0.0
    %4937 = vmatprep.subr.mxu0 0.0
    %4938 = vmatpush1.msra.mxu0 0.0
    %4939 = vmatprep.subr.mxu0 0.0
    %4940 = vmatpush1.msra.mxu0 0.0
    %4941 = vmatprep.subr.mxu0 0.0
    %4942 = vmatpush1.msra.mxu0 0.0
    %4943 = vmatprep.subr.mxu0 0.0
    %4944 = vmatpush1.msra.mxu0 0.0
    %4945 = vmatprep.mubr.f32.mxu0 0.0
    %4946 = vmatmul.mubr.f32.gmra.mrb[0].mxu0 %v4876
    %v4947 = vpop.f32.mrb[0].mxu0
    %v4948 = vadd.f32 0.0, %v4947
    %v4949 = vpop.f32.mrb[0].mxu0
    %4950 = vmatprep.mubr.f32.mxu0 0.0
    %4951 = vmatmul.mubr.f32.gmra.mrb[0].mxu0 %v4879
    %v4952 = vpop.f32.mrb[0].mxu0
    %v4953 = vadd.f32 0.0, %v4952
    %v4954 = vpop.f32.mrb[0].mxu0
    %4955 = vdwg.mxu0
    %v4957 = vsel %vm76, %v4086, 0
    %v4960 = vsel %vm76, %v4159, 0
    %4962 = vmatprep.subr.mxu0 0.0
    %4963 = vmatpush1.msra.mxu0 %v4616
    %4964 = vmatprep.subr.mxu0 0.0
    %4965 = vmatpush1.msra.mxu0 %v4617
    %4966 = vmatprep.subr.mxu0 0.0
    %4967 = vmatpush1.msra.mxu0 %v4618
    %4968 = vmatprep.subr.mxu0 0.0
    %4969 = vmatpush1.msra.mxu0 %v4619
    %4970 = vmatprep.subr.mxu0 0.0
    %4971 = vmatpush1.msra.mxu0 0.0
    %4972 = vmatprep.subr.mxu0 0.0
    %4973 = vmatpush1.msra.mxu0 0.0
    %4974 = vmatprep.subr.mxu0 0.0
    %4975 = vmatpush1.msra.mxu0 0.0
    %4976 = vmatprep.subr.mxu0 0.0
    %4977 = vmatpush1.msra.mxu0 0.0
    %4978 = vmatprep.subr.mxu0 0.0
    %4979 = vmatpush1.msra.mxu0 0.0
    %4980 = vmatprep.subr.mxu0 0.0
    %4981 = vmatpush1.msra.mxu0 0.0
    %4982 = vmatprep.subr.mxu0 0.0
    %4983 = vmatpush1.msra.mxu0 0.0
    %4984 = vmatprep.subr.mxu0 0.0
    %4985 = vmatpush1.msra.mxu0 0.0
    %4986 = vmatprep.subr.mxu0 0.0
    %4987 = vmatpush1.msra.mxu0 0.0
    %4988 = vmatprep.subr.mxu0 0.0
    %4989 = vmatpush1.msra.mxu0 0.0
    %4990 = vmatprep.subr.mxu0 0.0
    %4991 = vmatpush1.msra.mxu0 0.0
    %4992 = vmatprep.subr.mxu0 0.0
    %4993 = vmatpush1.msra.mxu0 0.0
    %4994 = vmatprep.subr.mxu0 0.0
    %4995 = vmatpush1.msra.mxu0 0.0
    %4996 = vmatprep.subr.mxu0 0.0
    %4997 = vmatpush1.msra.mxu0 0.0
    %4998 = vmatprep.subr.mxu0 0.0
    %4999 = vmatpush1.msra.mxu0 0.0
    %5000 = vmatprep.subr.mxu0 0.0
    %5001 = vmatpush1.msra.mxu0 0.0
    %5002 = vmatprep.subr.mxu0 0.0
    %5003 = vmatpush1.msra.mxu0 0.0
    %5004 = vmatprep.subr.mxu0 0.0
    %5005 = vmatpush1.msra.mxu0 0.0
    %5006 = vmatprep.subr.mxu0 0.0
    %5007 = vmatpush1.msra.mxu0 0.0
    %5008 = vmatprep.subr.mxu0 0.0
    %5009 = vmatpush1.msra.mxu0 0.0
    %5010 = vmatprep.subr.mxu0 0.0
    %5011 = vmatpush1.msra.mxu0 0.0
    %5012 = vmatprep.subr.mxu0 0.0
    %5013 = vmatpush1.msra.mxu0 0.0
    %5014 = vmatprep.subr.mxu0 0.0
    %5015 = vmatpush1.msra.mxu0 0.0
    %5016 = vmatprep.subr.mxu0 0.0
    %5017 = vmatpush1.msra.mxu0 0.0
    %5018 = vmatprep.subr.mxu0 0.0
    %5019 = vmatpush1.msra.mxu0 0.0
    %5020 = vmatprep.subr.mxu0 0.0
    %5021 = vmatpush1.msra.mxu0 0.0
    %5022 = vmatprep.subr.mxu0 0.0
    %5023 = vmatpush1.msra.mxu0 0.0
    %5024 = vmatprep.subr.mxu0 0.0
    %5025 = vmatpush1.msra.mxu0 0.0
    %5026 = vmatprep.mubr.f32.mxu0 0.0
    %5027 = vmatmul.mubr.f32.gmra.mrb[0].mxu0 %v4957
    %v5028 = vpop.f32.mrb[0].mxu0
    %v5029 = vadd.f32 0.0, %v5028
    %v5030 = vpop.f32.mrb[0].mxu0
    %5031 = vmatprep.mubr.f32.mxu0 0.0
    %5032 = vmatmul.mubr.f32.gmra.mrb[0].mxu0 %v4960
    %v5033 = vpop.f32.mrb[0].mxu0
    %v5034 = vadd.f32 0.0, %v5033
    %v5035 = vpop.f32.mrb[0].mxu0
    %5036 = vdwg.mxu0
    %v5038 = vsel %vm76, %v4232, 0
    %v5041 = vsel %vm76, %v4305, 0
    %5043 = vmatprep.subr.mxu0 0.0
    %5044 = vmatpush1.msra.mxu0 %v4620
    %5045 = vmatprep.subr.mxu0 0.0
    %5046 = vmatpush1.msra.mxu0 %v4621
    %5047 = vmatprep.subr.mxu0 0.0
    %5048 = vmatpush1.msra.mxu0 %v4622
    %5049 = vmatprep.subr.mxu0 0.0
    %5050 = vmatpush1.msra.mxu0 %v4623
    %5051 = vmatprep.subr.mxu0 0.0
    %5052 = vmatpush1.msra.mxu0 0.0
    %5053 = vmatprep.subr.mxu0 0.0
    %5054 = vmatpush1.msra.mxu0 0.0
    %5055 = vmatprep.subr.mxu0 0.0
    %5056 = vmatpush1.msra.mxu0 0.0
    %5057 = vmatprep.subr.mxu0 0.0
    %5058 = vmatpush1.msra.mxu0 0.0
    %5059 = vmatprep.subr.mxu0 0.0
    %5060 = vmatpush1.msra.mxu0 0.0
    %5061 = vmatprep.subr.mxu0 0.0
    %5062 = vmatpush1.msra.mxu0 0.0
    %5063 = vmatprep.subr.mxu0 0.0
    %5064 = vmatpush1.msra.mxu0 0.0
    %5065 = vmatprep.subr.mxu0 0.0
    %5066 = vmatpush1.msra.mxu0 0.0
    %5067 = vmatprep.subr.mxu0 0.0
    %5068 = vmatpush1.msra.mxu0 0.0
    %5069 = vmatprep.subr.mxu0 0.0
    %5070 = vmatpush1.msra.mxu0 0.0
    %5071 = vmatprep.subr.mxu0 0.0
    %5072 = vmatpush1.msra.mxu0 0.0
    %5073 = vmatprep.subr.mxu0 0.0
    %5074 = vmatpush1.msra.mxu0 0.0
    %5075 = vmatprep.subr.mxu0 0.0
    %5076 = vmatpush1.msra.mxu0 0.0
    %5077 = vmatprep.subr.mxu0 0.0
    %5078 = vmatpush1.msra.mxu0 0.0
    %5079 = vmatprep.subr.mxu0 0.0
    %5080 = vmatpush1.msra.mxu0 0.0
    %5081 = vmatprep.subr.mxu0 0.0
    %5082 = vmatpush1.msra.mxu0 0.0
    %5083 = vmatprep.subr.mxu0 0.0
    %5084 = vmatpush1.msra.mxu0 0.0
    %5085 = vmatprep.subr.mxu0 0.0
    %5086 = vmatpush1.msra.mxu0 0.0
    %5087 = vmatprep.subr.mxu0 0.0
    %5088 = vmatpush1.msra.mxu0 0.0
    %5089 = vmatprep.subr.mxu0 0.0
    %5090 = vmatpush1.msra.mxu0 0.0
    %5091 = vmatprep.subr.mxu0 0.0
    %5092 = vmatpush1.msra.mxu0 0.0
    %5093 = vmatprep.subr.mxu0 0.0
    %5094 = vmatpush1.msra.mxu0 0.0
    %5095 = vmatprep.subr.mxu0 0.0
    %5096 = vmatpush1.msra.mxu0 0.0
    %5097 = vmatprep.subr.mxu0 0.0
    %5098 = vmatpush1.msra.mxu0 0.0
    %5099 = vmatprep.subr.mxu0 0.0
    %5100 = vmatpush1.msra.mxu0 0.0
    %5101 = vmatprep.subr.mxu0 0.0
    %5102 = vmatpush1.msra.mxu0 0.0
    %5103 = vmatprep.subr.mxu0 0.0
    %5104 = vmatpush1.msra.mxu0 0.0
    %5105 = vmatprep.subr.mxu0 0.0
    %5106 = vmatpush1.msra.mxu0 0.0
    %5107 = vmatprep.mubr.f32.mxu0 0.0
    %5108 = vmatmul.mubr.f32.gmra.mrb[0].mxu0 %v5038
    %v5109 = vpop.f32.mrb[0].mxu0
    %v5110 = vadd.f32 0.0, %v5109
    %v5111 = vpop.f32.mrb[0].mxu0
    %5112 = vmatprep.mubr.f32.mxu0 0.0
    %5113 = vmatmul.mubr.f32.gmra.mrb[0].mxu0 %v5041
    %v5114 = vpop.f32.mrb[0].mxu0
    %v5115 = vadd.f32 0.0, %v5114
    %v5116 = vpop.f32.mrb[0].mxu0
    %5117 = vdwg.mxu0
    %v5119 = vsel %vm76, %v4378, 0
    %v5122 = vsel %vm76, %v4451, 0
    %5124 = vmatprep.subr.mxu0 0.0
    %5125 = vmatpush1.msra.mxu0 %v4624
    %5126 = vmatprep.subr.mxu0 0.0
    %5127 = vmatpush1.msra.mxu0 %v4625
    %5128 = vmatprep.subr.mxu0 0.0
    %5129 = vmatpush1.msra.mxu0 %v4626
    %5130 = vmatprep.subr.mxu0 0.0
    %5131 = vmatpush1.msra.mxu0 %v4627
    %5132 = vmatprep.subr.mxu0 0.0
    %5133 = vmatpush1.msra.mxu0 0.0
    %5134 = vmatprep.subr.mxu0 0.0
    %5135 = vmatpush1.msra.mxu0 0.0
    %5136 = vmatprep.subr.mxu0 0.0
    %5137 = vmatpush1.msra.mxu0 0.0
    %5138 = vmatprep.subr.mxu0 0.0
    %5139 = vmatpush1.msra.mxu0 0.0
    %5140 = vmatprep.subr.mxu0 0.0
    %5141 = vmatpush1.msra.mxu0 0.0
    %5142 = vmatprep.subr.mxu0 0.0
    %5143 = vmatpush1.msra.mxu0 0.0
    %5144 = vmatprep.subr.mxu0 0.0
    %5145 = vmatpush1.msra.mxu0 0.0
    %5146 = vmatprep.subr.mxu0 0.0
    %5147 = vmatpush1.msra.mxu0 0.0
    %5148 = vmatprep.subr.mxu0 0.0
    %5149 = vmatpush1.msra.mxu0 0.0
    %5150 = vmatprep.subr.mxu0 0.0
    %5151 = vmatpush1.msra.mxu0 0.0
    %5152 = vmatprep.subr.mxu0 0.0
    %5153 = vmatpush1.msra.mxu0 0.0
    %5154 = vmatprep.subr.mxu0 0.0
    %5155 = vmatpush1.msra.mxu0 0.0
    %5156 = vmatprep.subr.mxu0 0.0
    %5157 = vmatpush1.msra.mxu0 0.0
    %5158 = vmatprep.subr.mxu0 0.0
    %5159 = vmatpush1.msra.mxu0 0.0
    %5160 = vmatprep.subr.mxu0 0.0
    %5161 = vmatpush1.msra.mxu0 0.0
    %5162 = vmatprep.subr.mxu0 0.0
    %5163 = vmatpush1.msra.mxu0 0.0
    %5164 = vmatprep.subr.mxu0 0.0
    %5165 = vmatpush1.msra.mxu0 0.0
    %5166 = vmatprep.subr.mxu0 0.0
    %5167 = vmatpush1.msra.mxu0 0.0
    %5168 = vmatprep.subr.mxu0 0.0
    %5169 = vmatpush1.msra.mxu0 0.0
    %5170 = vmatprep.subr.mxu0 0.0
    %5171 = vmatpush1.msra.mxu0 0.0
    %5172 = vmatprep.subr.mxu0 0.0
    %5173 = vmatpush1.msra.mxu0 0.0
    %5174 = vmatprep.subr.mxu0 0.0
    %5175 = vmatpush1.msra.mxu0 0.0
    %5176 = vmatprep.subr.mxu0 0.0
    %5177 = vmatpush1.msra.mxu0 0.0
    %5178 = vmatprep.subr.mxu0 0.0
    %5179 = vmatpush1.msra.mxu0 0.0
    %5180 = vmatprep.subr.mxu0 0.0
    %5181 = vmatpush1.msra.mxu0 0.0
    %5182 = vmatprep.subr.mxu0 0.0
    %5183 = vmatpush1.msra.mxu0 0.0
    %5184 = vmatprep.subr.mxu0 0.0
    %5185 = vmatpush1.msra.mxu0 0.0
    %5186 = vmatprep.subr.mxu0 0.0
    %5187 = vmatpush1.msra.mxu0 0.0
    %5188 = vmatprep.mubr.f32.mxu0 0.0
    %5189 = vmatmul.mubr.f32.gmra.mrb[0].mxu0 %v5119
    %v5190 = vpop.f32.mrb[0].mxu0
    %v5191 = vadd.f32 0.0, %v5190
    %v5192 = vpop.f32.mrb[0].mxu0
    %5193 = vmatprep.mubr.f32.mxu0 0.0
    %5194 = vmatmul.mubr.f32.gmra.mrb[0].mxu0 %v5122
    %v5195 = vpop.f32.mrb[0].mxu0
    %v5196 = vadd.f32 0.0, %v5195
    %v5197 = vpop.f32.mrb[0].mxu0
    %5198 = vdwg.mxu0
    %v5200 = vsel %vm76, %v4524, 0
    %v5203 = vsel %vm76, %v4597, 0
    %5205 = vmatprep.subr.mxu0 0.0
    %5206 = vmatpush1.msra.mxu0 %v4628
    %5207 = vmatprep.subr.mxu0 0.0
    %5208 = vmatpush1.msra.mxu0 %v4629
    %5209 = vmatprep.subr.mxu0 0.0
    %5210 = vmatpush1.msra.mxu0 %v4630
    %5211 = vmatprep.subr.mxu0 0.0
    %5212 = vmatpush1.msra.mxu0 %v4631
    %5213 = vmatprep.subr.mxu0 0.0
    %5214 = vmatpush1.msra.mxu0 0.0
    %5215 = vmatprep.subr.mxu0 0.0
    %5216 = vmatpush1.msra.mxu0 0.0
    %5217 = vmatprep.subr.mxu0 0.0
    %5218 = vmatpush1.msra.mxu0 0.0
    %5219 = vmatprep.subr.mxu0 0.0
    %5220 = vmatpush1.msra.mxu0 0.0
    %5221 = vmatprep.subr.mxu0 0.0
    %5222 = vmatpush1.msra.mxu0 0.0
    %5223 = vmatprep.subr.mxu0 0.0
    %5224 = vmatpush1.msra.mxu0 0.0
    %5225 = vmatprep.subr.mxu0 0.0
    %5226 = vmatpush1.msra.mxu0 0.0
    %5227 = vmatprep.subr.mxu0 0.0
    %5228 = vmatpush1.msra.mxu0 0.0
    %5229 = vmatprep.subr.mxu0 0.0
    %5230 = vmatpush1.msra.mxu0 0.0
    %5231 = vmatprep.subr.mxu0 0.0
    %5232 = vmatpush1.msra.mxu0 0.0
    %5233 = vmatprep.subr.mxu0 0.0
    %5234 = vmatpush1.msra.mxu0 0.0
    %5235 = vmatprep.subr.mxu0 0.0
    %5236 = vmatpush1.msra.mxu0 0.0
    %5237 = vmatprep.subr.mxu0 0.0
    %5238 = vmatpush1.msra.mxu0 0.0
    %5239 = vmatprep.subr.mxu0 0.0
    %5240 = vmatpush1.msra.mxu0 0.0
    %5241 = vmatprep.subr.mxu0 0.0
    %5242 = vmatpush1.msra.mxu0 0.0
    %5243 = vmatprep.subr.mxu0 0.0
    %5244 = vmatpush1.msra.mxu0 0.0
    %5245 = vmatprep.subr.mxu0 0.0
    %5246 = vmatpush1.msra.mxu0 0.0
    %5247 = vmatprep.subr.mxu0 0.0
    %5248 = vmatpush1.msra.mxu0 0.0
    %5249 = vmatprep.subr.mxu0 0.0
    %5250 = vmatpush1.msra.mxu0 0.0
    %5251 = vmatprep.subr.mxu0 0.0
    %5252 = vmatpush1.msra.mxu0 0.0
    %5253 = vmatprep.subr.mxu0 0.0
    %5254 = vmatpush1.msra.mxu0 0.0
    %5255 = vmatprep.subr.mxu0 0.0
    %5256 = vmatpush1.msra.mxu0 0.0
    %5257 = vmatprep.subr.mxu0 0.0
    %5258 = vmatpush1.msra.mxu0 0.0
    %5259 = vmatprep.subr.mxu0 0.0
    %5260 = vmatpush1.msra.mxu0 0.0
    %5261 = vmatprep.subr.mxu0 0.0
    %5262 = vmatpush1.msra.mxu0 0.0
    %5263 = vmatprep.subr.mxu0 0.0
    %5264 = vmatpush1.msra.mxu0 0.0
    %5265 = vmatprep.subr.mxu0 0.0
    %5266 = vmatpush1.msra.mxu0 0.0
    %5267 = vmatprep.subr.mxu0 0.0
    %5268 = vmatpush1.msra.mxu0 0.0
    %5269 = vmatprep.mubr.f32.mxu0 0.0
    %5270 = vmatmul.mubr.f32.gmra.mrb[0].mxu0 %v5200
    %v5271 = vpop.f32.mrb[0].mxu0
    %v5272 = vadd.f32 0.0, %v5271
    %v5273 = vpop.f32.mrb[0].mxu0
    %5274 = vmatprep.mubr.f32.mxu0 0.0
    %5275 = vmatmul.mubr.f32.gmra.mrb[0].mxu0 %v5203
    %v5276 = vpop.f32.mrb[0].mxu0
    %v5277 = vadd.f32 0.0, %v5276
    %v5278 = vpop.f32.mrb[0].mxu0
    %5279 = vdwg.mxu0
    %v5280 = vsel %vm76, %v4705, 0.0
    %v5281 = vsel %vm76, %v4786, 0.0
    %v5282 = vadd.f32 %v5280, %v5281
    %v5283 = vsel %vm76, %v4867, 0.0
    %v5284 = vadd.f32 %v5282, %v5283
    %v5285 = vsel %vm76, %v4948, 0.0
    %v5286 = vadd.f32 %v5284, %v5285
    %v5287 = vsel %vm76, %v5029, 0.0
    %v5288 = vadd.f32 %v5286, %v5287
    %v5289 = vsel %vm76, %v5110, 0.0
    %v5290 = vadd.f32 %v5288, %v5289
    %v5291 = vsel %vm76, %v5191, 0.0
    %v5292 = vadd.f32 %v5290, %v5291
    %v5293 = vsel %vm76, %v5272, 0.0
    %v5294 = vadd.f32 %v5292, %v5293
    %v5295 = vsel %vm76, %v4710, 0.0
    %v5296 = vsel %vm76, %v4791, 0.0
    %v5297 = vadd.f32 %v5295, %v5296
    %v5298 = vsel %vm76, %v4872, 0.0
    %v5299 = vadd.f32 %v5297, %v5298
    %v5300 = vsel %vm76, %v4953, 0.0
    %v5301 = vadd.f32 %v5299, %v5300
    %v5302 = vsel %vm76, %v5034, 0.0
    %v5303 = vadd.f32 %v5301, %v5302
    %v5304 = vsel %vm76, %v5115, 0.0
    %v5305 = vadd.f32 %v5303, %v5304
    %v5306 = vsel %vm76, %v5196, 0.0
    %v5307 = vadd.f32 %v5305, %v5306
    %v5308 = vsel %vm76, %v5277, 0.0
    %v5309 = vadd.f32 %v5307, %v5308
    %v5310 = vadd.f32 %v5294, %v38
    %v5311 = vadd.f32 %v5309, %v39
    %v5312 = vsel %vm76, %v5310, 0.0
    %5313 = vadd.xlane.f32.xlu0 %v5312
    %v5314 = vpop.xlane.xlu0 %5313
    %v5315 = vsel %vm76, %v5311, 0.0
    %5316 = vadd.xlane.f32.xlu0 %v5315
    %v5317 = vpop.xlane.xlu0 %5316
    %v5318 = vrcp.pop 32.0
    %v5319 = vmul.f32 %v5314, %v5318
    %v5320 = vmul.f32 %v5317, %v5318
    %v5321 = vsub.f32 %v5310, %v5319
    %v5322 = vsub.f32 %v5311, %v5320
    %v5323 = vmul.f32 %v5321, %v5321
    %v5324 = vmul.f32 %v5322, %v5322
    %v5325 = vsel %vm76, %v5323, 0.0
    %5326 = vadd.xlane.f32.xlu0 %v5325
    %v5327 = vpop.xlane.xlu0 %5326
    %v5328 = vsel %vm76, %v5324, 0.0
    %5329 = vadd.xlane.f32.xlu0 %v5328
    %v5330 = vpop.xlane.xlu0 %5329
    %v5331 = vmul.f32 %v5327, %v5318
    %v5332 = vmul.f32 %v5330, %v5318
    %v5333 = vadd.f32 %v5331, 1e-05
    %v5334 = vadd.f32 %v5332, 1e-05
    %v5335 = vrsqrt.pop %v5333
    %v5336 = vrsqrt.pop %v5334
    %v5337 = vmul.f32 %v5321, %v5335
    %v5338 = vmul.f32 %v5322, %v5336
    %v5339 = vld [vmem:[%s8] sm:$0x1]
    %v5341 = vlaneseq
    %v5342 = vshrl.u32 %v5341, 7
    %v5343 = vsub.s32 0, %v5342
    %v5344 = vrot.slane %v5339, %v5343
    %v5346 = vmul.f32 %v5337, %v5344
    %v5347 = vmul.f32 %v5338, %v5344
    %v5348 = vld [vmem:[%s9] sm:$0x1]
    %v5350 = vlaneseq
    %v5351 = vshrl.u32 %v5350, 7
    %v5352 = vsub.s32 0, %v5351
    %v5353 = vrot.slane %v5348, %v5352
    %v5355 = vadd.f32 %v5346, %v5353
    %v5356 = vadd.f32 %v5347, %v5353
    %5357 = vst.msk [vmem:[#allocation2] sm:$0xff] %vm76, %v5355
    %5358 = vst.msk [vmem:[#allocation2 + $0x8] sm:$0xff] %vm76, %v5356
    // Predicated region
    $region42: #{multi_head_attention.1} parent=1 // pred_check
      _
    $region43: #{multi_head_attention.1} parent=1 // pred_check_branch
      %5360 = sbr.rel (0) target = $region45
    $region44: #{multi_head_attention.1} parent=1 // pred_region
      %s5362 = ssub.s32 256, 256
      %5363 = vsyncadd [#allocation3], %s5362
      %s5364 = sshll.u32 [#allocation2], 4
      %s5365 = int_to_ptr.vmem [resolvable:$true] %s5364
      %5370 = dma.vmem_to_hbm [thread:$0]  %s5365, 256, %s10, [#allocation3], 128, 128, 8
    $region45: #{multi_head_attention.1} parent=1 // pred_fallthru
      _
    // Predicated region
    $region46: #{multi_head_attention.1} parent=1 // pred_check
      _
    $region47: #{multi_head_attention.1} parent=1 // pred_check_branch
      %5372 = sbr.rel (0) target = $region49
    $region48: #{multi_head_attention.1} parent=1 // pred_region
      _
    $region49: #{multi_head_attention.1} parent=1 // pred_fallthru
      _
    // Predicated region
    $region50: #{multi_head_attention.1} parent=1 // pred_check
      _
    $region51: #{multi_head_attention.1} parent=1 // pred_check_branch
      %5374 = sbr.rel (0) target = $region53
    $region52: #{multi_head_attention.1} parent=1 // pred_region
      %5375 = dma.done [#allocation3], 256
    $region53: #{multi_head_attention.1} parent=1 // pred_fallthru
      _
    // Predicated region
    $region54: #{multi_head_attention.1} parent=1 // pred_check
      _
    $region55: #{multi_head_attention.1} parent=1 // pred_check_branch
      %5377 = sbr.rel (0) target = $region57
    $region56: #{multi_head_attention.1} parent=1 // pred_region
      _
    $region57: #{multi_head_attention.1} parent=1 // pred_fallthru
      _
    %5378 = vsyncpa [#allocation3], 1

</llo_original>
